<compile_context>
chip_gen: v7x
topology: tpu7x:2x2x1
jax: 0.10.0
libtpu: 0.0.40
codegen_flags: <defaults>
</compile_context>

<pallas_src>
import jax
import jax.numpy as jnp
from jax.experimental import pallas as pl
from jax.experimental.pallas import tpu as pltpu


def _block_se_kernel(p1_ref,               # (M, 9*Cin)      conv1 im2col patches
                     w1c_ref,              # (9*Cin, 2*Cout) [conv1 | 1x1 shortcut]
                     s1c_ref, b1c_ref,     # (1, 2*Cout)     folded BN1 | BNsc
                     w2_ref,               # (9*Cout, Cout)  conv2 im2col weight
                     s2_ref, b2_ref,       # (1, Cout)       folded BN2
                     fc1wT_ref,            # (hid, Cout)     SE fc1 (transposed)
                     fc1b_ref,             # (1, hid)
                     fc2w_ref,             # (hid, Cout)
                     fc2b_ref,             # (1, Cout)
                     out_ref,              # (Bt, H, W, Cout)
                     h1pad_ref,            # scratch (Bt, H+2, W+2, Cout)
                     p2_ref):              # scratch (M, 9*Cout) conv2 im2col
    Bt, Hp2, Wp2, Cout = h1pad_ref.shape
    H, W = Hp2 - 2, Wp2 - 2
    M = Bt * H * W
    hid = fc1wT_ref.shape[0]

    # ---- conv1 (3x3) + fused 1x1 shortcut: single im2col matmul ------------
    y = jnp.dot(p1_ref[...], w1c_ref[...], preferred_element_type=jnp.float32)
    y = y * s1c_ref[...] + b1c_ref[...]               # folded BN1 | folded BNsc
    h1 = jnp.maximum(y[:, :Cout], 0.0)                # (M, Cout)
    res = y[:, Cout:]                                 # (M, Cout) residual branch

    # ---- stage h1 into its zero-padded spatial buffer -----------------------
    # Only the 1-pixel halo needs zeroing; the interior is fully overwritten.
    zrow = jnp.zeros((Bt, 1, Wp2, Cout), jnp.float32)
    zcol = jnp.zeros((Bt, Hp2, 1, Cout), jnp.float32)
    h1pad_ref[:, 0:1, :, :] = zrow
    h1pad_ref[:, Hp2 - 1:Hp2, :, :] = zrow
    h1pad_ref[:, :, 0:1, :] = zcol
    h1pad_ref[:, :, Wp2 - 1:Wp2, :] = zcol
    h1pad_ref[:, 1:1 + H, 1:1 + W, :] = h1.reshape(Bt, H, W, Cout)

    # ---- build conv2 im2col (lane-aligned slots) and run ONE matmul ---------
    for kh in range(3):
        rows = h1pad_ref[:, kh:kh + H, :, :]          # (Bt, H, W+2, Cout)
        for kw in range(3):
            tap = kh * 3 + kw
            p2_ref[:, tap * Cout:(tap + 1) * Cout] = (
                rows[:, :, kw:kw + W, :].reshape(M, Cout))
    h2 = jnp.dot(p2_ref[...], w2_ref[...], preferred_element_type=jnp.float32)
    h2 = h2 * s2_ref[...] + b2_ref[...]               # folded BN2, (M, Cout)

    # ---- Squeeze-and-Excitation (VPU/XLU only, no tiny MXU matmuls) ---------
    h2b = h2.reshape(Bt, H * W, Cout)
    pooled = jnp.mean(h2b, axis=1)                    # (Bt, Cout) per-image GAP
    gate = jnp.zeros((Bt, Cout), jnp.float32) + fc2b_ref[...]
    for j in range(hid):                              # hid = Cout // ratio, small
        zj = jnp.sum(pooled * fc1wT_ref[j:j + 1, :], axis=-1, keepdims=True)
        zj = jnp.maximum(zj + fc1b_ref[:, j:j + 1], 0.0)      # (Bt, 1)
        gate = gate + zj * fc2w_ref[j:j + 1, :]
    gate = jax.nn.sigmoid(gate)                       # (Bt, Cout)

    # ---- channel scale, residual add, final ReLU ----------------------------
    out = jnp.maximum(h2b * gate[:, None, :] + res.reshape(Bt, H * W, Cout), 0.0)
    out_ref[...] = out.reshape(Bt, H, W, Cout)


def _fold_bn(gamma, beta, mean, var, eps=1e-5):
    scale = gamma / jnp.sqrt(var + eps)
    bias = beta - mean * scale
    return scale[None, :], bias[None, :]


def basic_block_se(x_nchw, p, *, batch_tile=None):
    """Forward pass of BasicBlockSE. Input/output are NCHW float32."""
    x = jnp.transpose(x_nchw, (0, 2, 3, 1)).astype(jnp.float32)      # NHWC
    B, H, W, Cin = x.shape
    Cout = p["w1"].shape[-1]
    hid = p["fc1w"].shape[-1]

    # Fold batch images into one grid step so the matmul M dim is ~128.
    if batch_tile is None:
        batch_tile = max(1, min(B, max(1, 128 // (H * W))))
        while B % batch_tile:
            batch_tile -= 1
    Bt = batch_tile
    G = B // Bt
    M = Bt * H * W

    # ---- conv1 im2col patches, built on the XLA side ------------------------
    xpad = jnp.pad(x, ((0, 0), (1, 1), (1, 1), (0, 0)))
    taps = [xpad[:, kh:kh + H, kw:kw + W, :]
            for kh in range(3) for kw in range(3)]
    patches1 = jnp.concatenate(taps, axis=-1).reshape(B * H * W, 9 * Cin)

    # ---- fold BN into scale/bias; fuse shortcut into conv1's weight ---------
    s1, b1 = _fold_bn(p["g1"], p["b1"], p["m1"], p["v1"])
    s2, b2 = _fold_bn(p["g2"], p["b2"], p["m2"], p["v2"])
    ssc, bsc = _fold_bn(p["gsc"], p["bsc"], p["msc"], p["vsc"])

    w1_flat = p["w1"].reshape(9 * Cin, Cout)
    wsc_col = jnp.zeros((9 * Cin, Cout), jnp.float32)
    wsc_col = wsc_col.at[4 * Cin:5 * Cin, :].set(p["wsc"].reshape(Cin, Cout))
    w1c = jnp.concatenate([w1_flat, wsc_col], axis=-1)               # (9*Cin, 2*Cout)
    s1c = jnp.concatenate([s1, ssc], axis=-1)                        # (1, 2*Cout)
    b1c = jnp.concatenate([b1, bsc], axis=-1)

    w2_flat = p["w2"].reshape(9 * Cout, Cout)
    fc1wT = p["fc1w"].T                                              # (hid, Cout)
    fc1b = p["fc1b"][None, :]                                        # (1, hid)
    fc2w = p["fc2w"]                                                 # (hid, Cout)
    fc2b = p["fc2b"][None, :]                                        # (1, Cout)

    def rep(shape):
        nd = len(shape)
        return pl.BlockSpec(shape, lambda g, nd=nd: (0,) * nd)

    out_nhwc = pl.pallas_call(
        _block_se_kernel,
        out_shape=jax.ShapeDtypeStruct((B, H, W, Cout), jnp.float32),
        grid_spec=pltpu.PrefetchScalarGridSpec(
            num_scalar_prefetch=0,
            grid=(G,),
            in_specs=[
                pl.BlockSpec((M, 9 * Cin), lambda g: (g, 0)),
                rep(w1c.shape),
                rep(s1c.shape), rep(b1c.shape),
                rep(w2_flat.shape),
                rep(s2.shape), rep(b2.shape),
                rep(fc1wT.shape), rep(fc1b.shape),
                rep(fc2w.shape), rep(fc2b.shape),
            ],
            out_specs=pl.BlockSpec((Bt, H, W, Cout), lambda g: (g, 0, 0, 0)),
            scratch_shapes=[
                pltpu.VMEM((Bt, H + 2, W + 2, Cout), jnp.float32),   # padded h1
                pltpu.VMEM((M, 9 * Cout), jnp.float32),              # conv2 im2col
            ]),
        compiler_params=pltpu.CompilerParams(
            dimension_semantics=("parallel",)),
    )(patches1, w1c, s1c, b1c, w2_flat, s2, b2,
      fc1wT, fc1b, fc2w, fc2b)

    return jnp.transpose(out_nhwc, (0, 3, 1, 2))                     # back to NCHW


def reference_forward(x_nchw, p):
    """Pure-JAX (XLA) reference, eval-mode BN, for correctness checking."""
    eps = 1e-5
    hi = jax.lax.Precision.HIGHEST
    x = jnp.transpose(x_nchw, (0, 2, 3, 1)).astype(jnp.float32)

    def bn(h, g, b, m, v):
        return (h - m) / jnp.sqrt(v + eps) * g + b

    def conv(h, w):
        return jax.lax.conv_general_dilated(
            h, w, (1, 1), "SAME",
            dimension_numbers=("NHWC", "HWIO", "NHWC"), precision=hi)

    h = conv(x, p["w1"])
    h = jax.nn.relu(bn(h, p["g1"], p["b1"], p["m1"], p["v1"]))
    h = conv(h, p["w2"])
    h = bn(h, p["g2"], p["b2"], p["m2"], p["v2"])
    pooled = h.mean(axis=(1, 2))
    z = jax.nn.relu(jnp.matmul(pooled, p["fc1w"], precision=hi) + p["fc1b"])
    gate = jax.nn.sigmoid(jnp.matmul(z, p["fc2w"], precision=hi) + p["fc2b"])
    h = h * gate[:, None, None, :]
    r = conv(x, p["wsc"])
    r = bn(r, p["gsc"], p["bsc"], p["msc"], p["vsc"])
    out = jax.nn.relu(h + r)
    return jnp.transpose(out, (0, 3, 1, 2))


def init_params(key, in_planes, out_planes, ratio):
    hid = out_planes // ratio
    ks = jax.random.split(key, 16)
    f32 = jnp.float32

    def bn_params(k, c):
        k1, k2, k3, k4 = jax.random.split(k, 4)
        return (jax.random.uniform(k1, (c,), f32, 0.5, 1.5),   # gamma
                jax.random.normal(k2, (c,), f32) * 0.1,        # beta
                jax.random.normal(k3, (c,), f32) * 0.1,        # running_mean
                jax.random.uniform(k4, (c,), f32, 0.5, 1.5))   # running_var

    g1, b1, m1, v1 = bn_params(ks[0], out_planes)
    g2, b2, m2, v2 = bn_params(ks[1], out_planes)
    gsc, bsc, msc, vsc = bn_params(ks[2], out_planes)
    return dict(
        w1=jax.random.normal(ks[3], (3, 3, in_planes, out_planes), f32) * 0.1,
        w2=jax.random.normal(ks[4], (3, 3, out_planes, out_planes), f32) * 0.1,
        wsc=jax.random.normal(ks[5], (1, 1, in_planes, out_planes), f32) * 0.1,
        g1=g1, b1=b1, m1=m1, v1=v1,
        g2=g2, b2=b2, m2=m2, v2=v2,
        gsc=gsc, bsc=bsc, msc=msc, vsc=vsc,
        fc1w=jax.random.normal(ks[6], (out_planes, hid), f32) * 0.2,
        fc1b=jax.random.normal(ks[7], (hid,), f32) * 0.1,
        fc2w=jax.random.normal(ks[8], (hid, out_planes), f32) * 0.2,
        fc2b=jax.random.normal(ks[9], (out_planes,), f32) * 0.1,
    )


if __name__ == "__main__":
    # Small but MXU/lane-friendly ResNet-like sizes: Cin=64, Cout=128 (ratio 16
    # -> SE hidden 8), 8x8 spatial, batch 4 folded 2-per-grid-step (M = 128).
    B, Cin, Cout, H, W, RATIO = 4, 64, 128, 8, 8, 16

    key = jax.random.PRNGKey(0)
    kx, kp = jax.random.split(key)
    x = jax.random.normal(kx, (B, Cin, H, W), jnp.float32)           # NCHW input
    params = init_params(kp, Cin, Cout, RATIO)

    out = jax.block_until_ready(basic_block_se(x, params))
    ref = jax.block_until_ready(reference_forward(x, params))

    assert out.shape == (B, Cout, H, W), out.shape
    max_err = float(jnp.max(jnp.abs(out - ref)))
    assert jnp.allclose(out, ref, rtol=1e-3, atol=1e-3), max_err
    print("KERNEL_OK")
</pallas_src>

<mosaic_0001>
module attributes {stable_mosaic.version = 11 : i64} {
  func.func @_block_se_kernel(%arg0: i32, %arg1: memref<128x576xf32, #tpu.memory_space<vmem>>, %arg2: memref<576x256xf32, #tpu.memory_space<vmem>>, %arg3: memref<1x256xf32, #tpu.memory_space<vmem>>, %arg4: memref<1x256xf32, #tpu.memory_space<vmem>>, %arg5: memref<1152x128xf32, #tpu.memory_space<vmem>>, %arg6: memref<1x128xf32, #tpu.memory_space<vmem>>, %arg7: memref<1x128xf32, #tpu.memory_space<vmem>>, %arg8: memref<8x128xf32, #tpu.memory_space<vmem>>, %arg9: memref<1x8xf32, #tpu.memory_space<vmem>>, %arg10: memref<8x128xf32, #tpu.memory_space<vmem>>, %arg11: memref<1x128xf32, #tpu.memory_space<vmem>>, %arg12: memref<2x8x8x128xf32, #tpu.memory_space<vmem>>, %arg13: memref<2x10x10x128xf32, #tpu.memory_space<vmem>>, %arg14: memref<128x1152xf32, #tpu.memory_space<vmem>>) attributes {dimension_semantics = [#tpu.dimension_semantics<parallel>], iteration_bounds = array<i64: 2>, scalar_prefetch = 0 : i64, scratch_operands = 2 : i64, tpu.core_type = #tpu.core_type<tc>, window_params = [{transform_indices = @transform_0, window_bounds = array<i64: 128, 576>}, {pipeline_mode = #tpu.pipeline_mode<synchronous>, transform_indices = @transform_1, window_bounds = array<i64: 576, 256>}, {pipeline_mode = #tpu.pipeline_mode<synchronous>, transform_indices = @transform_2, window_bounds = array<i64: 1, 256>}, {pipeline_mode = #tpu.pipeline_mode<synchronous>, transform_indices = @transform_3, window_bounds = array<i64: 1, 256>}, {pipeline_mode = #tpu.pipeline_mode<synchronous>, transform_indices = @transform_4, window_bounds = array<i64: 1152, 128>}, {pipeline_mode = #tpu.pipeline_mode<synchronous>, transform_indices = @transform_5, window_bounds = array<i64: 1, 128>}, {pipeline_mode = #tpu.pipeline_mode<synchronous>, transform_indices = @transform_6, window_bounds = array<i64: 1, 128>}, {pipeline_mode = #tpu.pipeline_mode<synchronous>, transform_indices = @transform_7, window_bounds = array<i64: 8, 128>}, {pipeline_mode = #tpu.pipeline_mode<synchronous>, transform_indices = @transform_8, window_bounds = array<i64: 1, 8>}, {pipeline_mode = #tpu.pipeline_mode<synchronous>, transform_indices = @transform_9, window_bounds = array<i64: 8, 128>}, {pipeline_mode = #tpu.pipeline_mode<synchronous>, transform_indices = @transform_10, window_bounds = array<i64: 1, 128>}, {transform_indices = @transform_11, window_bounds = array<i64: 2, 8, 8, 128>}]} {
    %c0 = arith.constant 0 : index
    %c0_0 = arith.constant 0 : index
    %0 = vector.load %arg1[%c0, %c0_0] : memref<128x576xf32, #tpu.memory_space<vmem>>, vector<128x576xf32>
    %c0_1 = arith.constant 0 : index
    %c0_2 = arith.constant 0 : index
    %1 = vector.load %arg2[%c0_1, %c0_2] : memref<576x256xf32, #tpu.memory_space<vmem>>, vector<576x256xf32>
    %cst = arith.constant dense<0.000000e+00> : vector<128x256xf32>
    %2 = tpu.matmul %0, %1, %cst {dimension_numbers = #tpu.dot_dimension_numbers<[1], [0], [0], [1], [0, 0, 1, 1], [], []>} : vector<128x576xf32>, vector<576x256xf32>, vector<128x256xf32> -> vector<128x256xf32>
    %c0_3 = arith.constant 0 : index
    %c0_4 = arith.constant 0 : index
    %3 = vector.load %arg3[%c0_3, %c0_4] : memref<1x256xf32, #tpu.memory_space<vmem>>, vector<1x256xf32>
    %4 = vector.broadcast %3 : vector<1x256xf32> to vector<128x256xf32>
    %5 = arith.mulf %2, %4 : vector<128x256xf32>
    %c0_5 = arith.constant 0 : index
    %c0_6 = arith.constant 0 : index
    %6 = vector.load %arg4[%c0_5, %c0_6] : memref<1x256xf32, #tpu.memory_space<vmem>>, vector<1x256xf32>
    %7 = vector.broadcast %6 : vector<1x256xf32> to vector<128x256xf32>
    %8 = arith.addf %5, %7 : vector<128x256xf32>
    %9 = vector.extract_strided_slice %8 {offsets = [0, 0], sizes = [128, 128], strides = [1, 1]} : vector<128x256xf32> to vector<128x128xf32>
    %cst_7 = arith.constant 0.000000e+00 : f32
    %10 = vector.broadcast %cst_7 : f32 to vector<128x128xf32>
    %11 = arith.maximumf %9, %10 : vector<128x128xf32>
    %12 = vector.extract_strided_slice %8 {offsets = [0, 128], sizes = [128, 128], strides = [1, 1]} : vector<128x256xf32> to vector<128x128xf32>
    %cst_8 = arith.constant 0.000000e+00 : f32
    %13 = vector.broadcast %cst_8 : f32 to vector<2x1x10x128xf32>
    %cst_9 = arith.constant 0.000000e+00 : f32
    %14 = vector.broadcast %cst_9 : f32 to vector<2x10x1x128xf32>
    %c0_10 = arith.constant 0 : index
    %c0_11 = arith.constant 0 : index
    %c0_12 = arith.constant 0 : index
    %c0_13 = arith.constant 0 : index
    %15 = vector.load %arg13[%c0_10, %c0_11, %c0_12, %c0_13] : memref<2x10x10x128xf32, #tpu.memory_space<vmem>>, vector<2x1x10x128xf32>
    tpu.vector_store %arg13[%c0_10, %c0_11, %c0_12, %c0_13], %13 {strides = array<i32>} : memref<2x10x10x128xf32, #tpu.memory_space<vmem>>, vector<2x1x10x128xf32>,
    %c0_14 = arith.constant 0 : index
    %c9 = arith.constant 9 : index
    %c0_15 = arith.constant 0 : index
    %c0_16 = arith.constant 0 : index
    %16 = vector.load %arg13[%c0_14, %c9, %c0_15, %c0_16] : memref<2x10x10x128xf32, #tpu.memory_space<vmem>>, vector<2x1x10x128xf32>
    tpu.vector_store %arg13[%c0_14, %c9, %c0_15, %c0_16], %13 {strides = array<i32>} : memref<2x10x10x128xf32, #tpu.memory_space<vmem>>, vector<2x1x10x128xf32>,
    %c0_17 = arith.constant 0 : index
    %c0_18 = arith.constant 0 : index
    %c0_19 = arith.constant 0 : index
    %c0_20 = arith.constant 0 : index
    %17 = vector.load %arg13[%c0_17, %c0_18, %c0_19, %c0_20] : memref<2x10x10x128xf32, #tpu.memory_space<vmem>>, vector<2x10x1x128xf32>
    tpu.vector_store %arg13[%c0_17, %c0_18, %c0_19, %c0_20], %14 {strides = array<i32>} : memref<2x10x10x128xf32, #tpu.memory_space<vmem>>, vector<2x10x1x128xf32>,
    %c0_21 = arith.constant 0 : index
    %c0_22 = arith.constant 0 : index
    %c9_23 = arith.constant 9 : index
    %c0_24 = arith.constant 0 : index
    %18 = vector.load %arg13[%c0_21, %c0_22, %c9_23, %c0_24] : memref<2x10x10x128xf32, #tpu.memory_space<vmem>>, vector<2x10x1x128xf32>
    tpu.vector_store %arg13[%c0_21, %c0_22, %c9_23, %c0_24], %14 {strides = array<i32>} : memref<2x10x10x128xf32, #tpu.memory_space<vmem>>, vector<2x10x1x128xf32>,
    %19 = vector.shape_cast %11 : vector<128x128xf32> to vector<2x8x8x128xf32>
    %c0_25 = arith.constant 0 : index
    %c1 = arith.constant 1 : index
    %c1_26 = arith.constant 1 : index
    %c0_27 = arith.constant 0 : index
    %20 = vector.load %arg13[%c0_25, %c1, %c1_26, %c0_27] : memref<2x10x10x128xf32, #tpu.memory_space<vmem>>, vector<2x8x8x128xf32>
    tpu.vector_store %arg13[%c0_25, %c1, %c1_26, %c0_27], %19 {strides = array<i32>} : memref<2x10x10x128xf32, #tpu.memory_space<vmem>>, vector<2x8x8x128xf32>,
    %c0_28 = arith.constant 0 : index
    %c0_29 = arith.constant 0 : index
    %c0_30 = arith.constant 0 : index
    %c0_31 = arith.constant 0 : index
    %21 = vector.load %arg13[%c0_28, %c0_29, %c0_30, %c0_31] : memref<2x10x10x128xf32, #tpu.memory_space<vmem>>, vector<2x8x10x128xf32>
    %22 = vector.extract_strided_slice %21 {offsets = [0, 0, 0, 0], sizes = [2, 8, 8, 128], strides = [1, 1, 1, 1]} : vector<2x8x10x128xf32> to vector<2x8x8x128xf32>
    %23 = vector.shape_cast %22 : vector<2x8x8x128xf32> to vector<128x128xf32>
    %c0_32 = arith.constant 0 : index
    %c0_33 = arith.constant 0 : index
    %24 = vector.load %arg14[%c0_32, %c0_33] : memref<128x1152xf32, #tpu.memory_space<vmem>>, vector<128x128xf32>
    tpu.vector_store %arg14[%c0_32, %c0_33], %23 {strides = array<i32>} : memref<128x1152xf32, #tpu.memory_space<vmem>>, vector<128x128xf32>,
    %25 = vector.extract_strided_slice %21 {offsets = [0, 0, 1, 0], sizes = [2, 8, 8, 128], strides = [1, 1, 1, 1]} : vector<2x8x10x128xf32> to vector<2x8x8x128xf32>
    %26 = vector.shape_cast %25 : vector<2x8x8x128xf32> to vector<128x128xf32>
    %c0_34 = arith.constant 0 : index
    %c128 = arith.constant 128 : index
    %27 = vector.load %arg14[%c0_34, %c128] : memref<128x1152xf32, #tpu.memory_space<vmem>>, vector<128x128xf32>
    tpu.vector_store %arg14[%c0_34, %c128], %26 {strides = array<i32>} : memref<128x1152xf32, #tpu.memory_space<vmem>>, vector<128x128xf32>,
    %28 = vector.extract_strided_slice %21 {offsets = [0, 0, 2, 0], sizes = [2, 8, 8, 128], strides = [1, 1, 1, 1]} : vector<2x8x10x128xf32> to vector<2x8x8x128xf32>
    %29 = vector.shape_cast %28 : vector<2x8x8x128xf32> to vector<128x128xf32>
    %c0_35 = arith.constant 0 : index
    %c256 = arith.constant 256 : index
    %30 = vector.load %arg14[%c0_35, %c256] : memref<128x1152xf32, #tpu.memory_space<vmem>>, vector<128x128xf32>
    tpu.vector_store %arg14[%c0_35, %c256], %29 {strides = array<i32>} : memref<128x1152xf32, #tpu.memory_space<vmem>>, vector<128x128xf32>,
    %c0_36 = arith.constant 0 : index
    %c1_37 = arith.constant 1 : index
    %c0_38 = arith.constant 0 : index
    %c0_39 = arith.constant 0 : index
    %31 = vector.load %arg13[%c0_36, %c1_37, %c0_38, %c0_39] : memref<2x10x10x128xf32, #tpu.memory_space<vmem>>, vector<2x8x10x128xf32>
    %32 = vector.extract_strided_slice %31 {offsets = [0, 0, 0, 0], sizes = [2, 8, 8, 128], strides = [1, 1, 1, 1]} : vector<2x8x10x128xf32> to vector<2x8x8x128xf32>
    %33 = vector.shape_cast %32 : vector<2x8x8x128xf32> to vector<128x128xf32>
    %c0_40 = arith.constant 0 : index
    %c384 = arith.constant 384 : index
    %34 = vector.load %arg14[%c0_40, %c384] : memref<128x1152xf32, #tpu.memory_space<vmem>>, vector<128x128xf32>
    tpu.vector_store %arg14[%c0_40, %c384], %33 {strides = array<i32>} : memref<128x1152xf32, #tpu.memory_space<vmem>>, vector<128x128xf32>,
    %35 = vector.extract_strided_slice %31 {offsets = [0, 0, 1, 0], sizes = [2, 8, 8, 128], strides = [1, 1, 1, 1]} : vector<2x8x10x128xf32> to vector<2x8x8x128xf32>
    %36 = vector.shape_cast %35 : vector<2x8x8x128xf32> to vector<128x128xf32>
    %c0_41 = arith.constant 0 : index
    %c512 = arith.constant 512 : index
    %37 = vector.load %arg14[%c0_41, %c512] : memref<128x1152xf32, #tpu.memory_space<vmem>>, vector<128x128xf32>
    tpu.vector_store %arg14[%c0_41, %c512], %36 {strides = array<i32>} : memref<128x1152xf32, #tpu.memory_space<vmem>>, vector<128x128xf32>,
    %38 = vector.extract_strided_slice %31 {offsets = [0, 0, 2, 0], sizes = [2, 8, 8, 128], strides = [1, 1, 1, 1]} : vector<2x8x10x128xf32> to vector<2x8x8x128xf32>
    %39 = vector.shape_cast %38 : vector<2x8x8x128xf32> to vector<128x128xf32>
    %c0_42 = arith.constant 0 : index
    %c640 = arith.constant 640 : index
    %40 = vector.load %arg14[%c0_42, %c640] : memref<128x1152xf32, #tpu.memory_space<vmem>>, vector<128x128xf32>
    tpu.vector_store %arg14[%c0_42, %c640], %39 {strides = array<i32>} : memref<128x1152xf32, #tpu.memory_space<vmem>>, vector<128x128xf32>,
    %c0_43 = arith.constant 0 : index
    %c2 = arith.constant 2 : index
    %c0_44 = arith.constant 0 : index
    %c0_45 = arith.constant 0 : index
    %41 = vector.load %arg13[%c0_43, %c2, %c0_44, %c0_45] : memref<2x10x10x128xf32, #tpu.memory_space<vmem>>, vector<2x8x10x128xf32>
    %42 = vector.extract_strided_slice %41 {offsets = [0, 0, 0, 0], sizes = [2, 8, 8, 128], strides = [1, 1, 1, 1]} : vector<2x8x10x128xf32> to vector<2x8x8x128xf32>
    %43 = vector.shape_cast %42 : vector<2x8x8x128xf32> to vector<128x128xf32>
    %c0_46 = arith.constant 0 : index
    %c768 = arith.constant 768 : index
    %44 = vector.load %arg14[%c0_46, %c768] : memref<128x1152xf32, #tpu.memory_space<vmem>>, vector<128x128xf32>
    tpu.vector_store %arg14[%c0_46, %c768], %43 {strides = array<i32>} : memref<128x1152xf32, #tpu.memory_space<vmem>>, vector<128x128xf32>,
    %45 = vector.extract_strided_slice %41 {offsets = [0, 0, 1, 0], sizes = [2, 8, 8, 128], strides = [1, 1, 1, 1]} : vector<2x8x10x128xf32> to vector<2x8x8x128xf32>
    %46 = vector.shape_cast %45 : vector<2x8x8x128xf32> to vector<128x128xf32>
    %c0_47 = arith.constant 0 : index
    %c896 = arith.constant 896 : index
    %47 = vector.load %arg14[%c0_47, %c896] : memref<128x1152xf32, #tpu.memory_space<vmem>>, vector<128x128xf32>
    tpu.vector_store %arg14[%c0_47, %c896], %46 {strides = array<i32>} : memref<128x1152xf32, #tpu.memory_space<vmem>>, vector<128x128xf32>,
    %48 = vector.extract_strided_slice %41 {offsets = [0, 0, 2, 0], sizes = [2, 8, 8, 128], strides = [1, 1, 1, 1]} : vector<2x8x10x128xf32> to vector<2x8x8x128xf32>
    %49 = vector.shape_cast %48 : vector<2x8x8x128xf32> to vector<128x128xf32>
    %c0_48 = arith.constant 0 : index
    %c1024 = arith.constant 1024 : index
    %50 = vector.load %arg14[%c0_48, %c1024] : memref<128x1152xf32, #tpu.memory_space<vmem>>, vector<128x128xf32>
    tpu.vector_store %arg14[%c0_48, %c1024], %49 {strides = array<i32>} : memref<128x1152xf32, #tpu.memory_space<vmem>>, vector<128x128xf32>,
    %c0_49 = arith.constant 0 : index
    %c0_50 = arith.constant 0 : index
    %51 = vector.load %arg14[%c0_49, %c0_50] : memref<128x1152xf32, #tpu.memory_space<vmem>>, vector<128x1152xf32>
    %c0_51 = arith.constant 0 : index
    %c0_52 = arith.constant 0 : index
    %52 = vector.load %arg5[%c0_51, %c0_52] : memref<1152x128xf32, #tpu.memory_space<vmem>>, vector<1152x128xf32>
    %cst_53 = arith.constant dense<0.000000e+00> : vector<128x128xf32>
    %53 = tpu.matmul %51, %52, %cst_53 {dimension_numbers = #tpu.dot_dimension_numbers<[1], [0], [0], [1], [0, 0, 1, 1], [], []>} : vector<128x1152xf32>, vector<1152x128xf32>, vector<128x128xf32> -> vector<128x128xf32>
    %c0_54 = arith.constant 0 : index
    %c0_55 = arith.constant 0 : index
    %54 = vector.load %arg6[%c0_54, %c0_55] : memref<1x128xf32, #tpu.memory_space<vmem>>, vector<1x128xf32>
    %55 = vector.broadcast %54 : vector<1x128xf32> to vector<128x128xf32>
    %56 = arith.mulf %53, %55 : vector<128x128xf32>
    %c0_56 = arith.constant 0 : index
    %c0_57 = arith.constant 0 : index
    %57 = vector.load %arg7[%c0_56, %c0_57] : memref<1x128xf32, #tpu.memory_space<vmem>>, vector<1x128xf32>
    %58 = vector.broadcast %57 : vector<1x128xf32> to vector<128x128xf32>
    %59 = arith.addf %56, %58 : vector<128x128xf32>
    %60 = vector.shape_cast %59 : vector<128x128xf32> to vector<2x64x128xf32>
    %cst_58 = arith.constant dense<0.000000e+00> : vector<2x128xf32>
    %61 = vector.multi_reduction <add>, %60, %cst_58 [1] : vector<2x64x128xf32> to vector<2x128xf32>
    %cst_59 = arith.constant 6.400000e+01 : f32
    %62 = vector.broadcast %cst_59 : f32 to vector<2x128xf32>
    %63 = arith.divf %61, %62 : vector<2x128xf32>
    %cst_60 = arith.constant 0.000000e+00 : f32
    %64 = vector.broadcast %cst_60 : f32 to vector<2x128xf32>
    %c0_61 = arith.constant 0 : index
    %c0_62 = arith.constant 0 : index
    %65 = vector.load %arg11[%c0_61, %c0_62] : memref<1x128xf32, #tpu.memory_space<vmem>>, vector<1x128xf32>
    %66 = vector.broadcast %65 : vector<1x128xf32> to vector<2x128xf32>
    %67 = arith.addf %64, %66 : vector<2x128xf32>
    %c0_63 = arith.constant 0 : index
    %c0_64 = arith.constant 0 : index
    %68 = vector.load %arg8[%c0_63, %c0_64] : memref<8x128xf32, #tpu.memory_space<vmem>>, vector<1x128xf32>
    %69 = vector.broadcast %68 : vector<1x128xf32> to vector<2x128xf32>
    %70 = arith.mulf %63, %69 : vector<2x128xf32>
    %cst_65 = arith.constant dense<0.000000e+00> : vector<2xf32>
    %71 = vector.multi_reduction <add>, %70, %cst_65 [1] : vector<2x128xf32> to vector<2xf32>
    %72 = vector.shape_cast %71 : vector<2xf32> to vector<2x1xf32>
    %c0_66 = arith.constant 0 : index
    %c0_67 = arith.constant 0 : index
    %73 = vector.load %arg9[%c0_66, %c0_67] : memref<1x8xf32, #tpu.memory_space<vmem>>, vector<1x1xf32>
    %74 = vector.broadcast %73 : vector<1x1xf32> to vector<2x1xf32>
    %75 = arith.addf %72, %74 : vector<2x1xf32>
    %cst_68 = arith.constant 0.000000e+00 : f32
    %76 = vector.broadcast %cst_68 : f32 to vector<2x1xf32>
    %77 = arith.maximumf %75, %76 : vector<2x1xf32>
    %c0_69 = arith.constant 0 : index
    %c0_70 = arith.constant 0 : index
    %78 = vector.load %arg10[%c0_69, %c0_70] : memref<8x128xf32, #tpu.memory_space<vmem>>, vector<1x128xf32>
    %79 = vector.broadcast %77 : vector<2x1xf32> to vector<2x128xf32>
    %80 = vector.broadcast %78 : vector<1x128xf32> to vector<2x128xf32>
    %81 = arith.mulf %79, %80 : vector<2x128xf32>
    %82 = arith.addf %67, %81 : vector<2x128xf32>
    %c1_71 = arith.constant 1 : index
    %c0_72 = arith.constant 0 : index
    %83 = vector.load %arg8[%c1_71, %c0_72] : memref<8x128xf32, #tpu.memory_space<vmem>>, vector<1x128xf32>
    %84 = vector.broadcast %83 : vector<1x128xf32> to vector<2x128xf32>
    %85 = arith.mulf %63, %84 : vector<2x128xf32>
    %cst_73 = arith.constant dense<0.000000e+00> : vector<2xf32>
    %86 = vector.multi_reduction <add>, %85, %cst_73 [1] : vector<2x128xf32> to vector<2xf32>
    %87 = vector.shape_cast %86 : vector<2xf32> to vector<2x1xf32>
    %c0_74 = arith.constant 0 : index
    %c1_75 = arith.constant 1 : index
    %88 = vector.load %arg9[%c0_74, %c1_75] : memref<1x8xf32, #tpu.memory_space<vmem>>, vector<1x1xf32>
    %89 = vector.broadcast %88 : vector<1x1xf32> to vector<2x1xf32>
    %90 = arith.addf %87, %89 : vector<2x1xf32>
    %cst_76 = arith.constant 0.000000e+00 : f32
    %91 = vector.broadcast %cst_76 : f32 to vector<2x1xf32>
    %92 = arith.maximumf %90, %91 : vector<2x1xf32>
    %c1_77 = arith.constant 1 : index
    %c0_78 = arith.constant 0 : index
    %93 = vector.load %arg10[%c1_77, %c0_78] : memref<8x128xf32, #tpu.memory_space<vmem>>, vector<1x128xf32>
    %94 = vector.broadcast %92 : vector<2x1xf32> to vector<2x128xf32>
    %95 = vector.broadcast %93 : vector<1x128xf32> to vector<2x128xf32>
    %96 = arith.mulf %94, %95 : vector<2x128xf32>
    %97 = arith.addf %82, %96 : vector<2x128xf32>
    %c2_79 = arith.constant 2 : index
    %c0_80 = arith.constant 0 : index
    %98 = vector.load %arg8[%c2_79, %c0_80] : memref<8x128xf32, #tpu.memory_space<vmem>>, vector<1x128xf32>
    %99 = vector.broadcast %98 : vector<1x128xf32> to vector<2x128xf32>
    %100 = arith.mulf %63, %99 : vector<2x128xf32>
    %cst_81 = arith.constant dense<0.000000e+00> : vector<2xf32>
    %101 = vector.multi_reduction <add>, %100, %cst_81 [1] : vector<2x128xf32> to vector<2xf32>
    %102 = vector.shape_cast %101 : vector<2xf32> to vector<2x1xf32>
    %c0_82 = arith.constant 0 : index
    %c2_83 = arith.constant 2 : index
    %103 = vector.load %arg9[%c0_82, %c2_83] : memref<1x8xf32, #tpu.memory_space<vmem>>, vector<1x1xf32>
    %104 = vector.broadcast %103 : vector<1x1xf32> to vector<2x1xf32>
    %105 = arith.addf %102, %104 : vector<2x1xf32>
    %cst_84 = arith.constant 0.000000e+00 : f32
    %106 = vector.broadcast %cst_84 : f32 to vector<2x1xf32>
    %107 = arith.maximumf %105, %106 : vector<2x1xf32>
    %c2_85 = arith.constant 2 : index
    %c0_86 = arith.constant 0 : index
    %108 = vector.load %arg10[%c2_85, %c0_86] : memref<8x128xf32, #tpu.memory_space<vmem>>, vector<1x128xf32>
    %109 = vector.broadcast %107 : vector<2x1xf32> to vector<2x128xf32>
    %110 = vector.broadcast %108 : vector<1x128xf32> to vector<2x128xf32>
    %111 = arith.mulf %109, %110 : vector<2x128xf32>
    %112 = arith.addf %97, %111 : vector<2x128xf32>
    %c3 = arith.constant 3 : index
    %c0_87 = arith.constant 0 : index
    %113 = vector.load %arg8[%c3, %c0_87] : memref<8x128xf32, #tpu.memory_space<vmem>>, vector<1x128xf32>
    %114 = vector.broadcast %113 : vector<1x128xf32> to vector<2x128xf32>
    %115 = arith.mulf %63, %114 : vector<2x128xf32>
    %cst_88 = arith.constant dense<0.000000e+00> : vector<2xf32>
    %116 = vector.multi_reduction <add>, %115, %cst_88 [1] : vector<2x128xf32> to vector<2xf32>
    %117 = vector.shape_cast %116 : vector<2xf32> to vector<2x1xf32>
    %c0_89 = arith.constant 0 : index
    %c3_90 = arith.constant 3 : index
    %118 = vector.load %arg9[%c0_89, %c3_90] : memref<1x8xf32, #tpu.memory_space<vmem>>, vector<1x1xf32>
    %119 = vector.broadcast %118 : vector<1x1xf32> to vector<2x1xf32>
    %120 = arith.addf %117, %119 : vector<2x1xf32>
    %cst_91 = arith.constant 0.000000e+00 : f32
    %121 = vector.broadcast %cst_91 : f32 to vector<2x1xf32>
    %122 = arith.maximumf %120, %121 : vector<2x1xf32>
    %c3_92 = arith.constant 3 : index
    %c0_93 = arith.constant 0 : index
    %123 = vector.load %arg10[%c3_92, %c0_93] : memref<8x128xf32, #tpu.memory_space<vmem>>, vector<1x128xf32>
    %124 = vector.broadcast %122 : vector<2x1xf32> to vector<2x128xf32>
    %125 = vector.broadcast %123 : vector<1x128xf32> to vector<2x128xf32>
    %126 = arith.mulf %124, %125 : vector<2x128xf32>
    %127 = arith.addf %112, %126 : vector<2x128xf32>
    %c4 = arith.constant 4 : index
    %c0_94 = arith.constant 0 : index
    %128 = vector.load %arg8[%c4, %c0_94] : memref<8x128xf32, #tpu.memory_space<vmem>>, vector<1x128xf32>
    %129 = vector.broadcast %128 : vector<1x128xf32> to vector<2x128xf32>
    %130 = arith.mulf %63, %129 : vector<2x128xf32>
    %cst_95 = arith.constant dense<0.000000e+00> : vector<2xf32>
    %131 = vector.multi_reduction <add>, %130, %cst_95 [1] : vector<2x128xf32> to vector<2xf32>
    %132 = vector.shape_cast %131 : vector<2xf32> to vector<2x1xf32>
    %c0_96 = arith.constant 0 : index
    %c4_97 = arith.constant 4 : index
    %133 = vector.load %arg9[%c0_96, %c4_97] : memref<1x8xf32, #tpu.memory_space<vmem>>, vector<1x1xf32>
    %134 = vector.broadcast %133 : vector<1x1xf32> to vector<2x1xf32>
    %135 = arith.addf %132, %134 : vector<2x1xf32>
    %cst_98 = arith.constant 0.000000e+00 : f32
    %136 = vector.broadcast %cst_98 : f32 to vector<2x1xf32>
    %137 = arith.maximumf %135, %136 : vector<2x1xf32>
    %c4_99 = arith.constant 4 : index
    %c0_100 = arith.constant 0 : index
    %138 = vector.load %arg10[%c4_99, %c0_100] : memref<8x128xf32, #tpu.memory_space<vmem>>, vector<1x128xf32>
    %139 = vector.broadcast %137 : vector<2x1xf32> to vector<2x128xf32>
    %140 = vector.broadcast %138 : vector<1x128xf32> to vector<2x128xf32>
    %141 = arith.mulf %139, %140 : vector<2x128xf32>
    %142 = arith.addf %127, %141 : vector<2x128xf32>
    %c5 = arith.constant 5 : index
    %c0_101 = arith.constant 0 : index
    %143 = vector.load %arg8[%c5, %c0_101] : memref<8x128xf32, #tpu.memory_space<vmem>>, vector<1x128xf32>
    %144 = vector.broadcast %143 : vector<1x128xf32> to vector<2x128xf32>
    %145 = arith.mulf %63, %144 : vector<2x128xf32>
    %cst_102 = arith.constant dense<0.000000e+00> : vector<2xf32>
    %146 = vector.multi_reduction <add>, %145, %cst_102 [1] : vector<2x128xf32> to vector<2xf32>
    %147 = vector.shape_cast %146 : vector<2xf32> to vector<2x1xf32>
    %c0_103 = arith.constant 0 : index
    %c5_104 = arith.constant 5 : index
    %148 = vector.load %arg9[%c0_103, %c5_104] : memref<1x8xf32, #tpu.memory_space<vmem>>, vector<1x1xf32>
    %149 = vector.broadcast %148 : vector<1x1xf32> to vector<2x1xf32>
    %150 = arith.addf %147, %149 : vector<2x1xf32>
    %cst_105 = arith.constant 0.000000e+00 : f32
    %151 = vector.broadcast %cst_105 : f32 to vector<2x1xf32>
    %152 = arith.maximumf %150, %151 : vector<2x1xf32>
    %c5_106 = arith.constant 5 : index
    %c0_107 = arith.constant 0 : index
    %153 = vector.load %arg10[%c5_106, %c0_107] : memref<8x128xf32, #tpu.memory_space<vmem>>, vector<1x128xf32>
    %154 = vector.broadcast %152 : vector<2x1xf32> to vector<2x128xf32>
    %155 = vector.broadcast %153 : vector<1x128xf32> to vector<2x128xf32>
    %156 = arith.mulf %154, %155 : vector<2x128xf32>
    %157 = arith.addf %142, %156 : vector<2x128xf32>
    %c6 = arith.constant 6 : index
    %c0_108 = arith.constant 0 : index
    %158 = vector.load %arg8[%c6, %c0_108] : memref<8x128xf32, #tpu.memory_space<vmem>>, vector<1x128xf32>
    %159 = vector.broadcast %158 : vector<1x128xf32> to vector<2x128xf32>
    %160 = arith.mulf %63, %159 : vector<2x128xf32>
    %cst_109 = arith.constant dense<0.000000e+00> : vector<2xf32>
    %161 = vector.multi_reduction <add>, %160, %cst_109 [1] : vector<2x128xf32> to vector<2xf32>
    %162 = vector.shape_cast %161 : vector<2xf32> to vector<2x1xf32>
    %c0_110 = arith.constant 0 : index
    %c6_111 = arith.constant 6 : index
    %163 = vector.load %arg9[%c0_110, %c6_111] : memref<1x8xf32, #tpu.memory_space<vmem>>, vector<1x1xf32>
    %164 = vector.broadcast %163 : vector<1x1xf32> to vector<2x1xf32>
    %165 = arith.addf %162, %164 : vector<2x1xf32>
    %cst_112 = arith.constant 0.000000e+00 : f32
    %166 = vector.broadcast %cst_112 : f32 to vector<2x1xf32>
    %167 = arith.maximumf %165, %166 : vector<2x1xf32>
    %c6_113 = arith.constant 6 : index
    %c0_114 = arith.constant 0 : index
    %168 = vector.load %arg10[%c6_113, %c0_114] : memref<8x128xf32, #tpu.memory_space<vmem>>, vector<1x128xf32>
    %169 = vector.broadcast %167 : vector<2x1xf32> to vector<2x128xf32>
    %170 = vector.broadcast %168 : vector<1x128xf32> to vector<2x128xf32>
    %171 = arith.mulf %169, %170 : vector<2x128xf32>
    %172 = arith.addf %157, %171 : vector<2x128xf32>
    %c7 = arith.constant 7 : index
    %c0_115 = arith.constant 0 : index
    %173 = vector.load %arg8[%c7, %c0_115] : memref<8x128xf32, #tpu.memory_space<vmem>>, vector<1x128xf32>
    %174 = vector.broadcast %173 : vector<1x128xf32> to vector<2x128xf32>
    %175 = arith.mulf %63, %174 : vector<2x128xf32>
    %cst_116 = arith.constant dense<0.000000e+00> : vector<2xf32>
    %176 = vector.multi_reduction <add>, %175, %cst_116 [1] : vector<2x128xf32> to vector<2xf32>
    %177 = vector.shape_cast %176 : vector<2xf32> to vector<2x1xf32>
    %c0_117 = arith.constant 0 : index
    %c7_118 = arith.constant 7 : index
    %178 = vector.load %arg9[%c0_117, %c7_118] : memref<1x8xf32, #tpu.memory_space<vmem>>, vector<1x1xf32>
    %179 = vector.broadcast %178 : vector<1x1xf32> to vector<2x1xf32>
    %180 = arith.addf %177, %179 : vector<2x1xf32>
    %cst_119 = arith.constant 0.000000e+00 : f32
    %181 = vector.broadcast %cst_119 : f32 to vector<2x1xf32>
    %182 = arith.maximumf %180, %181 : vector<2x1xf32>
    %c7_120 = arith.constant 7 : index
    %c0_121 = arith.constant 0 : index
    %183 = vector.load %arg10[%c7_120, %c0_121] : memref<8x128xf32, #tpu.memory_space<vmem>>, vector<1x128xf32>
    %184 = vector.broadcast %182 : vector<2x1xf32> to vector<2x128xf32>
    %185 = vector.broadcast %183 : vector<1x128xf32> to vector<2x128xf32>
    %186 = arith.mulf %184, %185 : vector<2x128xf32>
    %187 = arith.addf %172, %186 : vector<2x128xf32>
    %188 = arith.negf %187 : vector<2x128xf32>
    %189 = math.exp %188 : vector<2x128xf32>
    %cst_122 = arith.constant 1.000000e+00 : f32
    %190 = vector.broadcast %cst_122 : f32 to vector<2x128xf32>
    %191 = arith.addf %190, %189 : vector<2x128xf32>
    %192 = arith.divf %190, %191 : vector<2x128xf32>
    %193 = vector.shape_cast %192 : vector<2x128xf32> to vector<2x1x128xf32>
    %194 = vector.broadcast %193 : vector<2x1x128xf32> to vector<2x64x128xf32>
    %195 = arith.mulf %60, %194 : vector<2x64x128xf32>
    %196 = vector.shape_cast %12 : vector<128x128xf32> to vector<2x64x128xf32>
    %197 = arith.addf %195, %196 : vector<2x64x128xf32>
    %cst_123 = arith.constant 0.000000e+00 : f32
    %198 = vector.broadcast %cst_123 : f32 to vector<2x64x128xf32>
    %199 = arith.maximumf %197, %198 : vector<2x64x128xf32>
    %200 = vector.shape_cast %199 : vector<2x64x128xf32> to vector<2x8x8x128xf32>
    %c0_124 = arith.constant 0 : index
    %c0_125 = arith.constant 0 : index
    %c0_126 = arith.constant 0 : index
    %c0_127 = arith.constant 0 : index
    %201 = vector.load %arg12[%c0_124, %c0_125, %c0_126, %c0_127] : memref<2x8x8x128xf32, #tpu.memory_space<vmem>>, vector<2x8x8x128xf32>
    tpu.vector_store %arg12[%c0_124, %c0_125, %c0_126, %c0_127], %200 {strides = array<i32>} : memref<2x8x8x128xf32, #tpu.memory_space<vmem>>, vector<2x8x8x128xf32>,
    return
  }
  func.func @transform_0(%arg0: i32) -> (i32, i32) {
    %c0_i32 = arith.constant 0 : i32
    %c0_i32_0 = arith.constant 0 : i32
    return %arg0, %c0_i32 : i32, i32
  }
  func.func @transform_1(%arg0: i32) -> (i32, i32) {
    %c0_i32 = arith.constant 0 : i32
    %c0_i32_0 = arith.constant 0 : i32
    %c0_i32_1 = arith.constant 0 : i32
    return %c0_i32, %c0_i32_0 : i32, i32
  }
  func.func @transform_2(%arg0: i32) -> (i32, i32) {
    %c0_i32 = arith.constant 0 : i32
    %c0_i32_0 = arith.constant 0 : i32
    %c0_i32_1 = arith.constant 0 : i32
    return %c0_i32, %c0_i32_0 : i32, i32
  }
  func.func @transform_3(%arg0: i32) -> (i32, i32) {
    %c0_i32 = arith.constant 0 : i32
    %c0_i32_0 = arith.constant 0 : i32
    %c0_i32_1 = arith.constant 0 : i32
    return %c0_i32, %c0_i32_0 : i32, i32
  }
  func.func @transform_4(%arg0: i32) -> (i32, i32) {
    %c0_i32 = arith.constant 0 : i32
    %c0_i32_0 = arith.constant 0 : i32
    %c0_i32_1 = arith.constant 0 : i32
    return %c0_i32, %c0_i32_0 : i32, i32
  }
  func.func @transform_5(%arg0: i32) -> (i32, i32) {
    %c0_i32 = arith.constant 0 : i32
    %c0_i32_0 = arith.constant 0 : i32
    %c0_i32_1 = arith.constant 0 : i32
    return %c0_i32, %c0_i32_0 : i32, i32
  }
  func.func @transform_6(%arg0: i32) -> (i32, i32) {
    %c0_i32 = arith.constant 0 : i32
    %c0_i32_0 = arith.constant 0 : i32
    %c0_i32_1 = arith.constant 0 : i32
    return %c0_i32, %c0_i32_0 : i32, i32
  }
  func.func @transform_7(%arg0: i32) -> (i32, i32) {
    %c0_i32 = arith.constant 0 : i32
    %c0_i32_0 = arith.constant 0 : i32
    %c0_i32_1 = arith.constant 0 : i32
    return %c0_i32, %c0_i32_0 : i32, i32
  }
  func.func @transform_8(%arg0: i32) -> (i32, i32) {
    %c0_i32 = arith.constant 0 : i32
    %c0_i32_0 = arith.constant 0 : i32
    %c0_i32_1 = arith.constant 0 : i32
    return %c0_i32, %c0_i32_0 : i32, i32
  }
  func.func @transform_9(%arg0: i32) -> (i32, i32) {
    %c0_i32 = arith.constant 0 : i32
    %c0_i32_0 = arith.constant 0 : i32
    %c0_i32_1 = arith.constant 0 : i32
    return %c0_i32, %c0_i32_0 : i32, i32
  }
  func.func @transform_10(%arg0: i32) -> (i32, i32) {
    %c0_i32 = arith.constant 0 : i32
    %c0_i32_0 = arith.constant 0 : i32
    %c0_i32_1 = arith.constant 0 : i32
    return %c0_i32, %c0_i32_0 : i32, i32
  }
  func.func @transform_11(%arg0: i32) -> (i32, i32, i32, i32) {
    %c0_i32 = arith.constant 0 : i32
    %c0_i32_0 = arith.constant 0 : i32
    %c0_i32_1 = arith.constant 0 : i32
    %c0_i32_2 = arith.constant 0 : i32
    return %arg0, %c0_i32, %c0_i32_0, %c0_i32_1 : i32, i32, i32, i32
  }
}

</mosaic_0001>

<llo_original>
// kernel: tpu_custom_call.1
$region0: #{tpu_custom_call.1}
  #allocation0 [shape = 'u32[]', space=smem, size = 0x4, offset = 0x4, fixed_abs, tag = 'smem constant byte address 0x4 - core index']
  #allocation1 [shape = 'u32[144,128]{1,0:T(1,128)}', space=vmem, size = 0x12000, scoped, tag = 'internal scratch']
  #allocation2 [shape = 'f32[2,10,10,128]{3,2,1,0:T(8,128)}', space=vmem, size = 0x28000, scoped, tag = 'scratch operand']
  #allocation3 [shape = 'f32[128,1152]{1,0:T(8,128)}', space=vmem, size = 0x90000, scoped, tag = 'scratch operand']
  %s0 = inlined_call_operand.vmem [shape: f32[256,576], index: 0, kind: input, shape index: {}]
  %s1 = inlined_call_operand.vmem [shape: f32[576,256], index: 1, kind: input, shape index: {}]
  %s2 = inlined_call_operand.vmem [shape: f32[1,256], index: 2, kind: input, shape index: {}]
  %s3 = inlined_call_operand.vmem [shape: f32[1,256], index: 3, kind: input, shape index: {}]
  %s4 = inlined_call_operand.vmem [shape: f32[1152,128], index: 4, kind: input, shape index: {}]
  %s5 = inlined_call_operand.vmem [shape: f32[1,128], index: 5, kind: input, shape index: {}]
  %s6 = inlined_call_operand.vmem [shape: f32[1,128], index: 6, kind: input, shape index: {}]
  %s7 = inlined_call_operand.vmem [shape: f32[8,128], index: 7, kind: input, shape index: {}]
  %s8 = inlined_call_operand.vmem [shape: f32[1,8], index: 8, kind: input, shape index: {}]
  %s9 = inlined_call_operand.vmem [shape: f32[8,128], index: 9, kind: input, shape index: {}]
  %s10 = inlined_call_operand.vmem [shape: f32[1,128], index: 10, kind: input, shape index: {}]
  %s11 = inlined_call_operand.hbm [shape: f32[4,8,8,128], index: 11, kind: output, shape index: {}]
  %s12 = sld [smem:[#allocation0]]
  $region77: #{tpu_custom_call.1} parent=0
    _
  %s14 = ssub.s32 1, %s12
  %s15 = scalar_select 0, %s14, %s12
  $region1: #{tpu_custom_call.1} parent=0
    #allocation4 [shape = 'u8[131072]{0}', space=vmem, size = 0x20000, scoped, tag = 'output window, operand 0']
    #allocation5 [shape = 's32[2]{0}', space=sflag, size = 0x8, scoped, tag = 'scoped memory for tpu_custom_call.1']
    %16 = vsyncpa [#allocation5], 0
    %s17 = scalar_lea.sflag [#allocation5], 1
    %18 = vsyncpa %s17, 0
    loop: start=0, step=1, limit=4
    $region2: #{tpu_custom_call.1} parent=1 // loop_pre_header
      _
    $region3: #{tpu_custom_call.1} parent=1 // loop_header
      %s20 = sphi 0, %s24
      %p21 = scmp.ge.s32.totalorder %s20, 4
      %s30 = sphi 0, %s32
      %s33 = sphi 0, %s30
      %s34 = sphi 0, %s33
      %s50 = sphi 0, %s34
      %s54 = sphi 0, %s54
      %s56 = sphi 0, %s54
      %s57 = sphi 0, %s56
      %s71 = sphi 0, %s57
      %s75 = sphi 0, %s75
      %s77 = sphi 0, %s75
      %s78 = sphi 0, %s77
      %s92 = sphi 0, %s78
      %s96 = sphi 0, %s96
      %s98 = sphi 0, %s96
      %s99 = sphi 0, %s98
      %s113 = sphi 0, %s99
      %s117 = sphi 0, %s117
      %s119 = sphi 0, %s117
      %s120 = sphi 0, %s119
      %s134 = sphi 0, %s120
      %s138 = sphi 0, %s138
      %s140 = sphi 0, %s138
      %s141 = sphi 0, %s140
      %s155 = sphi 0, %s141
      %s159 = sphi 0, %s159
      %s161 = sphi 0, %s159
      %s162 = sphi 0, %s161
      %s176 = sphi 0, %s162
      %s180 = sphi 0, %s180
      %s182 = sphi 0, %s180
      %s183 = sphi 0, %s182
      %s197 = sphi 0, %s183
      %s201 = sphi 0, %s201
      %s203 = sphi 0, %s201
      %s204 = sphi 0, %s203
      %s218 = sphi 0, %s204
      %s222 = sphi 0, %s222
      %s224 = sphi 0, %s222
      %s225 = sphi 0, %s224
      %s239 = sphi 0, %s225
      %s243 = sphi 0, %s243
      %s245 = sphi 0, %s243
      %s246 = sphi 0, %s245
      %s260 = sphi 0, %s246
      %s266 = sphi 0, %s268
      %s269 = sphi 0, %s266
      %s270 = sphi 0, %s269
      %s286 = sphi 0, %s270
    $region4: #{tpu_custom_call.1} parent=1 // loop_header_branch
      %23 = sbr.rel (%p21) target = $region8
    $region5: #{tpu_custom_call.1} parent=1 // loop_body
      %s25 = ssub.s32 %s20, 1
      %s26 = ssub.s32 %s20, 2
      %s27 = sadd.s32 %s20, 1
      %s28 = ssub.s32 %s20, %s27
      %p29 = scmp.eq.s32.totalorder %s28, 0
      %s31 = sadd.s32 %s30, 1
      %s32 = scalar_select %p29, %s30, %s31
      %p35 = pneg %p29
      %p36 = scmp.eq.s32.totalorder %s20, 1
      %p37 = por %p35, %p36
      %p38 = scmp.ne.s32.totalorder %s30, %s33
      %p39 = scmp.eq.s32.totalorder %s20, 0
      %p40 = por %p38, %p39
      %p41 = scmp.ne.s32.totalorder %s30, %s33
      %p42 = scmp.eq.s32.totalorder %s25, 1
      %p43 = por %p41, %p42
      %p44 = scmp.ne.s32.totalorder %s33, %s34
      %p45 = scmp.eq.s32.totalorder %s25, 0
      %p46 = por %p44, %p45
      %p47 = scmp.ne.s32.totalorder %s33, %s34
      %p48 = scmp.eq.s32.totalorder %s26, 1
      %p49 = por %p47, %p48
      %p51 = scmp.ne.s32.totalorder %s34, %s50
      %p52 = scmp.eq.s32.totalorder %s26, 0
      %p53 = por %p51, %p52
      %s55 = sadd.s32 %s54, 1
      %p58 = scmp.eq.s32.totalorder %s20, 1
      %p59 = scmp.ne.s32.totalorder %s54, %s56
      %p60 = scmp.eq.s32.totalorder %s20, 0
      %p61 = por %p59, %p60
      %p62 = scmp.ne.s32.totalorder %s54, %s56
      %p63 = scmp.eq.s32.totalorder %s25, 1
      %p64 = por %p62, %p63
      %p65 = scmp.ne.s32.totalorder %s56, %s57
      %p66 = scmp.eq.s32.totalorder %s25, 0
      %p67 = por %p65, %p66
      %p68 = scmp.ne.s32.totalorder %s56, %s57
      %p69 = scmp.eq.s32.totalorder %s26, 1
      %p70 = por %p68, %p69
      %p72 = scmp.ne.s32.totalorder %s57, %s71
      %p73 = scmp.eq.s32.totalorder %s26, 0
      %p74 = por %p72, %p73
      %s76 = sadd.s32 %s75, 1
      %p79 = scmp.eq.s32.totalorder %s20, 1
      %p80 = scmp.ne.s32.totalorder %s75, %s77
      %p81 = scmp.eq.s32.totalorder %s20, 0
      %p82 = por %p80, %p81
      %p83 = scmp.ne.s32.totalorder %s75, %s77
      %p84 = scmp.eq.s32.totalorder %s25, 1
      %p85 = por %p83, %p84
      %p86 = scmp.ne.s32.totalorder %s77, %s78
      %p87 = scmp.eq.s32.totalorder %s25, 0
      %p88 = por %p86, %p87
      %p89 = scmp.ne.s32.totalorder %s77, %s78
      %p90 = scmp.eq.s32.totalorder %s26, 1
      %p91 = por %p89, %p90
      %p93 = scmp.ne.s32.totalorder %s78, %s92
      %p94 = scmp.eq.s32.totalorder %s26, 0
      %p95 = por %p93, %p94
      %s97 = sadd.s32 %s96, 1
      %p100 = scmp.eq.s32.totalorder %s20, 1
      %p101 = scmp.ne.s32.totalorder %s96, %s98
      %p102 = scmp.eq.s32.totalorder %s20, 0
      %p103 = por %p101, %p102
      %p104 = scmp.ne.s32.totalorder %s96, %s98
      %p105 = scmp.eq.s32.totalorder %s25, 1
      %p106 = por %p104, %p105
      %p107 = scmp.ne.s32.totalorder %s98, %s99
      %p108 = scmp.eq.s32.totalorder %s25, 0
      %p109 = por %p107, %p108
      %p110 = scmp.ne.s32.totalorder %s98, %s99
      %p111 = scmp.eq.s32.totalorder %s26, 1
      %p112 = por %p110, %p111
      %p114 = scmp.ne.s32.totalorder %s99, %s113
      %p115 = scmp.eq.s32.totalorder %s26, 0
      %p116 = por %p114, %p115
      %s118 = sadd.s32 %s117, 1
      %p121 = scmp.eq.s32.totalorder %s20, 1
      %p122 = scmp.ne.s32.totalorder %s117, %s119
      %p123 = scmp.eq.s32.totalorder %s20, 0
      %p124 = por %p122, %p123
      %p125 = scmp.ne.s32.totalorder %s117, %s119
      %p126 = scmp.eq.s32.totalorder %s25, 1
      %p127 = por %p125, %p126
      %p128 = scmp.ne.s32.totalorder %s119, %s120
      %p129 = scmp.eq.s32.totalorder %s25, 0
      %p130 = por %p128, %p129
      %p131 = scmp.ne.s32.totalorder %s119, %s120
      %p132 = scmp.eq.s32.totalorder %s26, 1
      %p133 = por %p131, %p132
      %p135 = scmp.ne.s32.totalorder %s120, %s134
      %p136 = scmp.eq.s32.totalorder %s26, 0
      %p137 = por %p135, %p136
      %s139 = sadd.s32 %s138, 1
      %p142 = scmp.eq.s32.totalorder %s20, 1
      %p143 = scmp.ne.s32.totalorder %s138, %s140
      %p144 = scmp.eq.s32.totalorder %s20, 0
      %p145 = por %p143, %p144
      %p146 = scmp.ne.s32.totalorder %s138, %s140
      %p147 = scmp.eq.s32.totalorder %s25, 1
      %p148 = por %p146, %p147
      %p149 = scmp.ne.s32.totalorder %s140, %s141
      %p150 = scmp.eq.s32.totalorder %s25, 0
      %p151 = por %p149, %p150
      %p152 = scmp.ne.s32.totalorder %s140, %s141
      %p153 = scmp.eq.s32.totalorder %s26, 1
      %p154 = por %p152, %p153
      %p156 = scmp.ne.s32.totalorder %s141, %s155
      %p157 = scmp.eq.s32.totalorder %s26, 0
      %p158 = por %p156, %p157
      %s160 = sadd.s32 %s159, 1
      %p163 = scmp.eq.s32.totalorder %s20, 1
      %p164 = scmp.ne.s32.totalorder %s159, %s161
      %p165 = scmp.eq.s32.totalorder %s20, 0
      %p166 = por %p164, %p165
      %p167 = scmp.ne.s32.totalorder %s159, %s161
      %p168 = scmp.eq.s32.totalorder %s25, 1
      %p169 = por %p167, %p168
      %p170 = scmp.ne.s32.totalorder %s161, %s162
      %p171 = scmp.eq.s32.totalorder %s25, 0
      %p172 = por %p170, %p171
      %p173 = scmp.ne.s32.totalorder %s161, %s162
      %p174 = scmp.eq.s32.totalorder %s26, 1
      %p175 = por %p173, %p174
      %p177 = scmp.ne.s32.totalorder %s162, %s176
      %p178 = scmp.eq.s32.totalorder %s26, 0
      %p179 = por %p177, %p178
      %s181 = sadd.s32 %s180, 1
      %p184 = scmp.eq.s32.totalorder %s20, 1
      %p185 = scmp.ne.s32.totalorder %s180, %s182
      %p186 = scmp.eq.s32.totalorder %s20, 0
      %p187 = por %p185, %p186
      %p188 = scmp.ne.s32.totalorder %s180, %s182
      %p189 = scmp.eq.s32.totalorder %s25, 1
      %p190 = por %p188, %p189
      %p191 = scmp.ne.s32.totalorder %s182, %s183
      %p192 = scmp.eq.s32.totalorder %s25, 0
      %p193 = por %p191, %p192
      %p194 = scmp.ne.s32.totalorder %s182, %s183
      %p195 = scmp.eq.s32.totalorder %s26, 1
      %p196 = por %p194, %p195
      %p198 = scmp.ne.s32.totalorder %s183, %s197
      %p199 = scmp.eq.s32.totalorder %s26, 0
      %p200 = por %p198, %p199
      %s202 = sadd.s32 %s201, 1
      %p205 = scmp.eq.s32.totalorder %s20, 1
      %p206 = scmp.ne.s32.totalorder %s201, %s203
      %p207 = scmp.eq.s32.totalorder %s20, 0
      %p208 = por %p206, %p207
      %p209 = scmp.ne.s32.totalorder %s201, %s203
      %p210 = scmp.eq.s32.totalorder %s25, 1
      %p211 = por %p209, %p210
      %p212 = scmp.ne.s32.totalorder %s203, %s204
      %p213 = scmp.eq.s32.totalorder %s25, 0
      %p214 = por %p212, %p213
      %p215 = scmp.ne.s32.totalorder %s203, %s204
      %p216 = scmp.eq.s32.totalorder %s26, 1
      %p217 = por %p215, %p216
      %p219 = scmp.ne.s32.totalorder %s204, %s218
      %p220 = scmp.eq.s32.totalorder %s26, 0
      %p221 = por %p219, %p220
      %s223 = sadd.s32 %s222, 1
      %p226 = scmp.eq.s32.totalorder %s20, 1
      %p227 = scmp.ne.s32.totalorder %s222, %s224
      %p228 = scmp.eq.s32.totalorder %s20, 0
      %p229 = por %p227, %p228
      %p230 = scmp.ne.s32.totalorder %s222, %s224
      %p231 = scmp.eq.s32.totalorder %s25, 1
      %p232 = por %p230, %p231
      %p233 = scmp.ne.s32.totalorder %s224, %s225
      %p234 = scmp.eq.s32.totalorder %s25, 0
      %p235 = por %p233, %p234
      %p236 = scmp.ne.s32.totalorder %s224, %s225
      %p237 = scmp.eq.s32.totalorder %s26, 1
      %p238 = por %p236, %p237
      %p240 = scmp.ne.s32.totalorder %s225, %s239
      %p241 = scmp.eq.s32.totalorder %s26, 0
      %p242 = por %p240, %p241
      %s244 = sadd.s32 %s243, 1
      %p247 = scmp.eq.s32.totalorder %s20, 1
      %p248 = scmp.ne.s32.totalorder %s243, %s245
      %p249 = scmp.eq.s32.totalorder %s20, 0
      %p250 = por %p248, %p249
      %p251 = scmp.ne.s32.totalorder %s243, %s245
      %p252 = scmp.eq.s32.totalorder %s25, 1
      %p253 = por %p251, %p252
      %p254 = scmp.ne.s32.totalorder %s245, %s246
      %p255 = scmp.eq.s32.totalorder %s25, 0
      %p256 = por %p254, %p255
      %p257 = scmp.ne.s32.totalorder %s245, %s246
      %p258 = scmp.eq.s32.totalorder %s26, 1
      %p259 = por %p257, %p258
      %p261 = scmp.ne.s32.totalorder %s246, %s260
      %p262 = scmp.eq.s32.totalorder %s26, 0
      %p263 = por %p261, %p262
      %s264 = ssub.s32 %s20, %s27
      %p265 = scmp.eq.s32.totalorder %s264, 0
      %s267 = sadd.s32 %s266, 1
      %s268 = scalar_select %p265, %s266, %s267
      %p271 = pneg %p265
      %p272 = scmp.eq.s32.totalorder %s20, 1
      %p273 = por %p271, %p272
      %p274 = scmp.ne.s32.totalorder %s266, %s269
      %p275 = scmp.eq.s32.totalorder %s20, 0
      %p276 = por %p274, %p275
      %p277 = scmp.ne.s32.totalorder %s266, %s269
      %p278 = scmp.eq.s32.totalorder %s25, 1
      %p279 = por %p277, %p278
      %p280 = scmp.ne.s32.totalorder %s269, %s270
      %p281 = scmp.eq.s32.totalorder %s25, 0
      %p282 = por %p280, %p281
      %p283 = scmp.ne.s32.totalorder %s269, %s270
      %p284 = scmp.eq.s32.totalorder %s26, 1
      %p285 = por %p283, %p284
      %p287 = scmp.ne.s32.totalorder %s270, %s286
      %p288 = scmp.eq.s32.totalorder %s26, 0
      %p289 = por %p287, %p288
      %p290 = scmp.le.s32.totalorder 1, %s20
      %p291 = scmp.lt.s32.totalorder %s20, 3
      %p292 = pnand %p290, %p291
      %p293 = pneg %p292
      // Predicated region
      $region9: #{tpu_custom_call.1} parent=5 // pred_check
        _
      $region10: #{tpu_custom_call.1} parent=5 // pred_check_branch
        %295 = sbr.rel (%p292) target = $region12
      $region11: #{tpu_custom_call.1} parent=5 // pred_region
        %s296 = ssub.s32 %s20, 1
        // Predicated region
        $region13: #{tpu_custom_call.1} parent=11 // pred_check
          %p297 = pneg %p67
        $region14: #{tpu_custom_call.1} parent=11 // pred_check_branch
          %299 = sbr.rel (%p297) target = $region16
        $region15: #{tpu_custom_call.1} parent=11 // pred_region
          _
        $region16: #{tpu_custom_call.1} parent=11 // pred_fallthru
          _
        // Predicated region
        $region17: #{tpu_custom_call.1} parent=11 // pred_check
          %p300 = pneg %p88
        $region18: #{tpu_custom_call.1} parent=11 // pred_check_branch
          %302 = sbr.rel (%p300) target = $region20
        $region19: #{tpu_custom_call.1} parent=11 // pred_region
          _
        $region20: #{tpu_custom_call.1} parent=11 // pred_fallthru
          _
        // Predicated region
        $region21: #{tpu_custom_call.1} parent=11 // pred_check
          %p303 = pneg %p109
        $region22: #{tpu_custom_call.1} parent=11 // pred_check_branch
          %305 = sbr.rel (%p303) target = $region24
        $region23: #{tpu_custom_call.1} parent=11 // pred_region
          _
        $region24: #{tpu_custom_call.1} parent=11 // pred_fallthru
          _
        // Predicated region
        $region25: #{tpu_custom_call.1} parent=11 // pred_check
          %p306 = pneg %p130
        $region26: #{tpu_custom_call.1} parent=11 // pred_check_branch
          %308 = sbr.rel (%p306) target = $region28
        $region27: #{tpu_custom_call.1} parent=11 // pred_region
          _
        $region28: #{tpu_custom_call.1} parent=11 // pred_fallthru
          _
        // Predicated region
        $region29: #{tpu_custom_call.1} parent=11 // pred_check
          %p309 = pneg %p151
        $region30: #{tpu_custom_call.1} parent=11 // pred_check_branch
          %311 = sbr.rel (%p309) target = $region32
        $region31: #{tpu_custom_call.1} parent=11 // pred_region
          _
        $region32: #{tpu_custom_call.1} parent=11 // pred_fallthru
          _
        // Predicated region
        $region33: #{tpu_custom_call.1} parent=11 // pred_check
          %p312 = pneg %p172
        $region34: #{tpu_custom_call.1} parent=11 // pred_check_branch
          %314 = sbr.rel (%p312) target = $region36
        $region35: #{tpu_custom_call.1} parent=11 // pred_region
          _
        $region36: #{tpu_custom_call.1} parent=11 // pred_fallthru
          _
        // Predicated region
        $region37: #{tpu_custom_call.1} parent=11 // pred_check
          %p315 = pneg %p193
        $region38: #{tpu_custom_call.1} parent=11 // pred_check_branch
          %317 = sbr.rel (%p315) target = $region40
        $region39: #{tpu_custom_call.1} parent=11 // pred_region
          _
        $region40: #{tpu_custom_call.1} parent=11 // pred_fallthru
          _
        // Predicated region
        $region41: #{tpu_custom_call.1} parent=11 // pred_check
          %p318 = pneg %p214
        $region42: #{tpu_custom_call.1} parent=11 // pred_check_branch
          %320 = sbr.rel (%p318) target = $region44
        $region43: #{tpu_custom_call.1} parent=11 // pred_region
          _
        $region44: #{tpu_custom_call.1} parent=11 // pred_fallthru
          _
        // Predicated region
        $region45: #{tpu_custom_call.1} parent=11 // pred_check
          %p321 = pneg %p235
        $region46: #{tpu_custom_call.1} parent=11 // pred_check_branch
          %323 = sbr.rel (%p321) target = $region48
        $region47: #{tpu_custom_call.1} parent=11 // pred_region
          _
        $region48: #{tpu_custom_call.1} parent=11 // pred_fallthru
          _
        // Predicated region
        $region49: #{tpu_custom_call.1} parent=11 // pred_check
          %p324 = pneg %p256
        $region50: #{tpu_custom_call.1} parent=11 // pred_check_branch
          %326 = sbr.rel (%p324) target = $region52
        $region51: #{tpu_custom_call.1} parent=11 // pred_region
          _
        $region52: #{tpu_custom_call.1} parent=11 // pred_fallthru
          _
      $region12: #{tpu_custom_call.1} parent=5 // pred_fallthru
        _
      %p327 = scmp.lt.s32.totalorder %s20, 2
      // Predicated region
      $region53: #{tpu_custom_call.1} parent=5 // pred_check
        %p328 = pneg %p327
      $region54: #{tpu_custom_call.1} parent=5 // pred_check_branch
        %330 = sbr.rel (%p328) target = $region56
      $region55: #{tpu_custom_call.1} parent=5 // pred_region
        // Predicated region
        $region57: #{tpu_custom_call.1} parent=55 // pred_check
          %p331 = pneg %p40
        $region58: #{tpu_custom_call.1} parent=55 // pred_check_branch
          %333 = sbr.rel (%p331) target = $region60
        $region59: #{tpu_custom_call.1} parent=55 // pred_region
          %s334 = smul.u32 16, %s20
          %p335 = scmp.lt.s32.totalorder %s334, 31
          %s336 = scalar_select %p335, %s334, 31
          %s337 = smul.addr %s336, 5
          %s338 = smul.addr %s337, 8
          %s339 = scalar_lea.vmem %s0, %s338
          %s340 = smul.u32 16, %s20
        $region60: #{tpu_custom_call.1} parent=55 // pred_fallthru
          _
      $region56: #{tpu_custom_call.1} parent=5 // pred_fallthru
        _
      %p341 = scmp.le.s32.totalorder 1, %s20
      %p342 = scmp.lt.s32.totalorder %s20, 3
      %p343 = pnand %p341, %p342
      %p344 = pneg %p343
      // Predicated region
      $region61: #{tpu_custom_call.1} parent=5 // pred_check
        _
      $region62: #{tpu_custom_call.1} parent=5 // pred_check_branch
        %346 = sbr.rel (%p343) target = $region64
      $region63: #{tpu_custom_call.1} parent=5 // pred_region
        %s347 = ssub.s32 %s20, 1
        %s348 = smul.u32 16, %s25
        %p349 = scmp.lt.s32.totalorder %s348, 31
        %s350 = scalar_select %p349, %s348, 31
        %s351 = smul.addr %s350, 5
        %s352 = smul.addr %s351, 8
        %s353 = scalar_lea.vmem %s0, %s352
        %p354 = pneg %p46
        %p355 = pneg %p43
        %p356 = pneg %p67
        %p357 = pneg %p64
        %p358 = pneg %p88
        %p359 = pneg %p85
        %p360 = pneg %p109
        %p361 = pneg %p106
        %p362 = pneg %p130
        %p363 = pneg %p127
        %p364 = pneg %p151
        %p365 = pneg %p148
        %p366 = pneg %p172
        %p367 = pneg %p169
        %p368 = pneg %p193
        %p369 = pneg %p190
        %p370 = pneg %p214
        %p371 = pneg %p211
        %p372 = pneg %p235
        %p373 = pneg %p232
        %p374 = pneg %p256
        %p375 = pneg %p253
        %p376 = pneg %p282
        %p377 = pneg %p279
        %s378 = sand.u32 %s269, 1
        %s379 = scalar_lea.sflag [#allocation5], %s378
        %s380 = sand.u32 %s269, 1
        %s381 = smul.addr %s380, 128
        %s382 = scalar_lea.vmem [#allocation4], %s381
        %s383 = smul.u32 16, %s25
        %p384 = scmp.lt.s32.totalorder %s383, 31
        %s385 = scalar_select %p384, %s383, 31
        %s386 = smul.addr %s385, 5
        %s387 = smul.addr %s386, 8
        %s388 = scalar_lea.vmem %s0, %s387
        %s389 = smul.u32 16, %s25
        %s390 = smul.u32 2, %s25
        %v391 = vld [vmem:[%s388] sm:$0xff]
        %v392 = vld [vmem:[%s388 + $0x8] sm:$0xff]
        %v393 = vld [vmem:[%s388 + $0x10] sm:$0xff]
        %v394 = vld [vmem:[%s388 + $0x18] sm:$0xff]
        %v395 = vld [vmem:[%s388 + $0x20] sm:$0xff]
        %v396 = vld [vmem:[%s388 + $0x28] sm:$0xff]
        %v397 = vld [vmem:[%s388 + $0x30] sm:$0xff]
        %v398 = vld [vmem:[%s388 + $0x38] sm:$0xff]
        %v399 = vld [vmem:[%s388 + $0x40] sm:$0xff]
        %v400 = vld [vmem:[%s388 + $0x48] sm:$0xff]
        %v401 = vld [vmem:[%s388 + $0x50] sm:$0xff]
        %v402 = vld [vmem:[%s388 + $0x58] sm:$0xff]
        %v403 = vld [vmem:[%s388 + $0x60] sm:$0xff]
        %v404 = vld [vmem:[%s388 + $0x68] sm:$0xff]
        %v405 = vld [vmem:[%s388 + $0x70] sm:$0xff]
        %v406 = vld [vmem:[%s388 + $0x78] sm:$0xff]
        %v407 = vld [vmem:[%s388 + $0x80] sm:$0xff]
        %v408 = vld [vmem:[%s388 + $0x88] sm:$0xff]
        %v409 = vld [vmem:[%s388 + $0x90] sm:$0xff]
        %v410 = vld [vmem:[%s388 + $0x98] sm:$0xff]
        %v411 = vld [vmem:[%s388 + $0xa0] sm:$0xff]
        %v412 = vld [vmem:[%s388 + $0xa8] sm:$0xff]
        %v413 = vld [vmem:[%s388 + $0xb0] sm:$0xff]
        %v414 = vld [vmem:[%s388 + $0xb8] sm:$0xff]
        %v415 = vld [vmem:[%s388 + $0xc0] sm:$0xff]
        %v416 = vld [vmem:[%s388 + $0xc8] sm:$0xff]
        %v417 = vld [vmem:[%s388 + $0xd0] sm:$0xff]
        %v418 = vld [vmem:[%s388 + $0xd8] sm:$0xff]
        %v419 = vld [vmem:[%s388 + $0xe0] sm:$0xff]
        %v420 = vld [vmem:[%s388 + $0xe8] sm:$0xff]
        %v421 = vld [vmem:[%s388 + $0xf0] sm:$0xff]
        %v422 = vld [vmem:[%s388 + $0xf8] sm:$0xff]
        %v423 = vld [vmem:[%s388 + $0x100] sm:$0xff]
        %v424 = vld [vmem:[%s388 + $0x108] sm:$0xff]
        %v425 = vld [vmem:[%s388 + $0x110] sm:$0xff]
        %v426 = vld [vmem:[%s388 + $0x118] sm:$0xff]
        %v427 = vld [vmem:[%s388 + $0x120] sm:$0xff]
        %v428 = vld [vmem:[%s388 + $0x128] sm:$0xff]
        %v429 = vld [vmem:[%s388 + $0x130] sm:$0xff]
        %v430 = vld [vmem:[%s388 + $0x138] sm:$0xff]
        %v431 = vld [vmem:[%s388 + $0x140] sm:$0xff]
        %v432 = vld [vmem:[%s388 + $0x148] sm:$0xff]
        %v433 = vld [vmem:[%s388 + $0x150] sm:$0xff]
        %v434 = vld [vmem:[%s388 + $0x158] sm:$0xff]
        %v435 = vld [vmem:[%s388 + $0x160] sm:$0xff]
        %v436 = vld [vmem:[%s388 + $0x168] sm:$0xff]
        %v437 = vld [vmem:[%s388 + $0x170] sm:$0xff]
        %v438 = vld [vmem:[%s388 + $0x178] sm:$0xff]
        %v439 = vld [vmem:[%s388 + $0x180] sm:$0xff]
        %v440 = vld [vmem:[%s388 + $0x188] sm:$0xff]
        %v441 = vld [vmem:[%s388 + $0x190] sm:$0xff]
        %v442 = vld [vmem:[%s388 + $0x198] sm:$0xff]
        %v443 = vld [vmem:[%s388 + $0x1a0] sm:$0xff]
        %v444 = vld [vmem:[%s388 + $0x1a8] sm:$0xff]
        %v445 = vld [vmem:[%s388 + $0x1b0] sm:$0xff]
        %v446 = vld [vmem:[%s388 + $0x1b8] sm:$0xff]
        %v447 = vld [vmem:[%s388 + $0x1c0] sm:$0xff]
        %v448 = vld [vmem:[%s388 + $0x1c8] sm:$0xff]
        %v449 = vld [vmem:[%s388 + $0x1d0] sm:$0xff]
        %v450 = vld [vmem:[%s388 + $0x1d8] sm:$0xff]
        %v451 = vld [vmem:[%s388 + $0x1e0] sm:$0xff]
        %v452 = vld [vmem:[%s388 + $0x1e8] sm:$0xff]
        %v453 = vld [vmem:[%s388 + $0x1f0] sm:$0xff]
        %v454 = vld [vmem:[%s388 + $0x1f8] sm:$0xff]
        %v455 = vld [vmem:[%s388 + $0x200] sm:$0xff]
        %v456 = vld [vmem:[%s388 + $0x208] sm:$0xff]
        %v457 = vld [vmem:[%s388 + $0x210] sm:$0xff]
        %v458 = vld [vmem:[%s388 + $0x218] sm:$0xff]
        %v459 = vld [vmem:[%s388 + $0x220] sm:$0xff]
        %v460 = vld [vmem:[%s388 + $0x228] sm:$0xff]
        %v461 = vld [vmem:[%s388 + $0x230] sm:$0xff]
        %v462 = vld [vmem:[%s388 + $0x238] sm:$0xff]
        %v463 = vld [vmem:[%s388 + $0x240] sm:$0xff]
        %v464 = vld [vmem:[%s388 + $0x248] sm:$0xff]
        %v465 = vld [vmem:[%s388 + $0x250] sm:$0xff]
        %v466 = vld [vmem:[%s388 + $0x258] sm:$0xff]
        %v467 = vld [vmem:[%s388 + $0x260] sm:$0xff]
        %v468 = vld [vmem:[%s388 + $0x268] sm:$0xff]
        %v469 = vld [vmem:[%s388 + $0x270] sm:$0xff]
        %v470 = vld [vmem:[%s388 + $0x278] sm:$0xff]
        %v471 = vld [vmem:[%s1] sm:$0xff]
        %v472 = vld [vmem:[%s1 + $0x8] sm:$0xff]
        %v473 = vld [vmem:[%s1 + $0x10] sm:$0xff]
        %v474 = vld [vmem:[%s1 + $0x18] sm:$0xff]
        %v475 = vld [vmem:[%s1 + $0x20] sm:$0xff]
        %v476 = vld [vmem:[%s1 + $0x28] sm:$0xff]
        %v477 = vld [vmem:[%s1 + $0x30] sm:$0xff]
        %v478 = vld [vmem:[%s1 + $0x38] sm:$0xff]
        %v479 = vld [vmem:[%s1 + $0x40] sm:$0xff]
        %v480 = vld [vmem:[%s1 + $0x48] sm:$0xff]
        %v481 = vld [vmem:[%s1 + $0x50] sm:$0xff]
        %v482 = vld [vmem:[%s1 + $0x58] sm:$0xff]
        %v483 = vld [vmem:[%s1 + $0x60] sm:$0xff]
        %v484 = vld [vmem:[%s1 + $0x68] sm:$0xff]
        %v485 = vld [vmem:[%s1 + $0x70] sm:$0xff]
        %v486 = vld [vmem:[%s1 + $0x78] sm:$0xff]
        %v487 = vld [vmem:[%s1 + $0x80] sm:$0xff]
        %v488 = vld [vmem:[%s1 + $0x88] sm:$0xff]
        %v489 = vld [vmem:[%s1 + $0x90] sm:$0xff]
        %v490 = vld [vmem:[%s1 + $0x98] sm:$0xff]
        %v491 = vld [vmem:[%s1 + $0xa0] sm:$0xff]
        %v492 = vld [vmem:[%s1 + $0xa8] sm:$0xff]
        %v493 = vld [vmem:[%s1 + $0xb0] sm:$0xff]
        %v494 = vld [vmem:[%s1 + $0xb8] sm:$0xff]
        %v495 = vld [vmem:[%s1 + $0xc0] sm:$0xff]
        %v496 = vld [vmem:[%s1 + $0xc8] sm:$0xff]
        %v497 = vld [vmem:[%s1 + $0xd0] sm:$0xff]
        %v498 = vld [vmem:[%s1 + $0xd8] sm:$0xff]
        %v499 = vld [vmem:[%s1 + $0xe0] sm:$0xff]
        %v500 = vld [vmem:[%s1 + $0xe8] sm:$0xff]
        %v501 = vld [vmem:[%s1 + $0xf0] sm:$0xff]
        %v502 = vld [vmem:[%s1 + $0xf8] sm:$0xff]
        %v503 = vld [vmem:[%s1 + $0x100] sm:$0xff]
        %v504 = vld [vmem:[%s1 + $0x108] sm:$0xff]
        %v505 = vld [vmem:[%s1 + $0x110] sm:$0xff]
        %v506 = vld [vmem:[%s1 + $0x118] sm:$0xff]
        %v507 = vld [vmem:[%s1 + $0x120] sm:$0xff]
        %v508 = vld [vmem:[%s1 + $0x128] sm:$0xff]
        %v509 = vld [vmem:[%s1 + $0x130] sm:$0xff]
        %v510 = vld [vmem:[%s1 + $0x138] sm:$0xff]
        %v511 = vld [vmem:[%s1 + $0x140] sm:$0xff]
        %v512 = vld [vmem:[%s1 + $0x148] sm:$0xff]
        %v513 = vld [vmem:[%s1 + $0x150] sm:$0xff]
        %v514 = vld [vmem:[%s1 + $0x158] sm:$0xff]
        %v515 = vld [vmem:[%s1 + $0x160] sm:$0xff]
        %v516 = vld [vmem:[%s1 + $0x168] sm:$0xff]
        %v517 = vld [vmem:[%s1 + $0x170] sm:$0xff]
        %v518 = vld [vmem:[%s1 + $0x178] sm:$0xff]
        %v519 = vld [vmem:[%s1 + $0x180] sm:$0xff]
        %v520 = vld [vmem:[%s1 + $0x188] sm:$0xff]
        %v521 = vld [vmem:[%s1 + $0x190] sm:$0xff]
        %v522 = vld [vmem:[%s1 + $0x198] sm:$0xff]
        %v523 = vld [vmem:[%s1 + $0x1a0] sm:$0xff]
        %v524 = vld [vmem:[%s1 + $0x1a8] sm:$0xff]
        %v525 = vld [vmem:[%s1 + $0x1b0] sm:$0xff]
        %v526 = vld [vmem:[%s1 + $0x1b8] sm:$0xff]
        %v527 = vld [vmem:[%s1 + $0x1c0] sm:$0xff]
        %v528 = vld [vmem:[%s1 + $0x1c8] sm:$0xff]
        %v529 = vld [vmem:[%s1 + $0x1d0] sm:$0xff]
        %v530 = vld [vmem:[%s1 + $0x1d8] sm:$0xff]
        %v531 = vld [vmem:[%s1 + $0x1e0] sm:$0xff]
        %v532 = vld [vmem:[%s1 + $0x1e8] sm:$0xff]
        %v533 = vld [vmem:[%s1 + $0x1f0] sm:$0xff]
        %v534 = vld [vmem:[%s1 + $0x1f8] sm:$0xff]
        %v535 = vld [vmem:[%s1 + $0x200] sm:$0xff]
        %v536 = vld [vmem:[%s1 + $0x208] sm:$0xff]
        %v537 = vld [vmem:[%s1 + $0x210] sm:$0xff]
        %v538 = vld [vmem:[%s1 + $0x218] sm:$0xff]
        %v539 = vld [vmem:[%s1 + $0x220] sm:$0xff]
        %v540 = vld [vmem:[%s1 + $0x228] sm:$0xff]
        %v541 = vld [vmem:[%s1 + $0x230] sm:$0xff]
        %v542 = vld [vmem:[%s1 + $0x238] sm:$0xff]
        %v543 = vld [vmem:[%s1 + $0x240] sm:$0xff]
        %v544 = vld [vmem:[%s1 + $0x248] sm:$0xff]
        %v545 = vld [vmem:[%s1 + $0x250] sm:$0xff]
        %v546 = vld [vmem:[%s1 + $0x258] sm:$0xff]
        %v547 = vld [vmem:[%s1 + $0x260] sm:$0xff]
        %v548 = vld [vmem:[%s1 + $0x268] sm:$0xff]
        %v549 = vld [vmem:[%s1 + $0x270] sm:$0xff]
        %v550 = vld [vmem:[%s1 + $0x278] sm:$0xff]
        %v551 = vld [vmem:[%s1 + $0x280] sm:$0xff]
        %v552 = vld [vmem:[%s1 + $0x288] sm:$0xff]
        %v553 = vld [vmem:[%s1 + $0x290] sm:$0xff]
        %v554 = vld [vmem:[%s1 + $0x298] sm:$0xff]
        %v555 = vld [vmem:[%s1 + $0x2a0] sm:$0xff]
        %v556 = vld [vmem:[%s1 + $0x2a8] sm:$0xff]
        %v557 = vld [vmem:[%s1 + $0x2b0] sm:$0xff]
        %v558 = vld [vmem:[%s1 + $0x2b8] sm:$0xff]
        %v559 = vld [vmem:[%s1 + $0x2c0] sm:$0xff]
        %v560 = vld [vmem:[%s1 + $0x2c8] sm:$0xff]
        %v561 = vld [vmem:[%s1 + $0x2d0] sm:$0xff]
        %v562 = vld [vmem:[%s1 + $0x2d8] sm:$0xff]
        %v563 = vld [vmem:[%s1 + $0x2e0] sm:$0xff]
        %v564 = vld [vmem:[%s1 + $0x2e8] sm:$0xff]
        %v565 = vld [vmem:[%s1 + $0x2f0] sm:$0xff]
        %v566 = vld [vmem:[%s1 + $0x2f8] sm:$0xff]
        %v567 = vld [vmem:[%s1 + $0x300] sm:$0xff]
        %v568 = vld [vmem:[%s1 + $0x308] sm:$0xff]
        %v569 = vld [vmem:[%s1 + $0x310] sm:$0xff]
        %v570 = vld [vmem:[%s1 + $0x318] sm:$0xff]
        %v571 = vld [vmem:[%s1 + $0x320] sm:$0xff]
        %v572 = vld [vmem:[%s1 + $0x328] sm:$0xff]
        %v573 = vld [vmem:[%s1 + $0x330] sm:$0xff]
        %v574 = vld [vmem:[%s1 + $0x338] sm:$0xff]
        %v575 = vld [vmem:[%s1 + $0x340] sm:$0xff]
        %v576 = vld [vmem:[%s1 + $0x348] sm:$0xff]
        %v577 = vld [vmem:[%s1 + $0x350] sm:$0xff]
        %v578 = vld [vmem:[%s1 + $0x358] sm:$0xff]
        %v579 = vld [vmem:[%s1 + $0x360] sm:$0xff]
        %v580 = vld [vmem:[%s1 + $0x368] sm:$0xff]
        %v581 = vld [vmem:[%s1 + $0x370] sm:$0xff]
        %v582 = vld [vmem:[%s1 + $0x378] sm:$0xff]
        %v583 = vld [vmem:[%s1 + $0x380] sm:$0xff]
        %v584 = vld [vmem:[%s1 + $0x388] sm:$0xff]
        %v585 = vld [vmem:[%s1 + $0x390] sm:$0xff]
        %v586 = vld [vmem:[%s1 + $0x398] sm:$0xff]
        %v587 = vld [vmem:[%s1 + $0x3a0] sm:$0xff]
        %v588 = vld [vmem:[%s1 + $0x3a8] sm:$0xff]
        %v589 = vld [vmem:[%s1 + $0x3b0] sm:$0xff]
        %v590 = vld [vmem:[%s1 + $0x3b8] sm:$0xff]
        %v591 = vld [vmem:[%s1 + $0x3c0] sm:$0xff]
        %v592 = vld [vmem:[%s1 + $0x3c8] sm:$0xff]
        %v593 = vld [vmem:[%s1 + $0x3d0] sm:$0xff]
        %v594 = vld [vmem:[%s1 + $0x3d8] sm:$0xff]
        %v595 = vld [vmem:[%s1 + $0x3e0] sm:$0xff]
        %v596 = vld [vmem:[%s1 + $0x3e8] sm:$0xff]
        %v597 = vld [vmem:[%s1 + $0x3f0] sm:$0xff]
        %v598 = vld [vmem:[%s1 + $0x3f8] sm:$0xff]
        %v599 = vld [vmem:[%s1 + $0x400] sm:$0xff]
        %v600 = vld [vmem:[%s1 + $0x408] sm:$0xff]
        %v601 = vld [vmem:[%s1 + $0x410] sm:$0xff]
        %v602 = vld [vmem:[%s1 + $0x418] sm:$0xff]
        %v603 = vld [vmem:[%s1 + $0x420] sm:$0xff]
        %v604 = vld [vmem:[%s1 + $0x428] sm:$0xff]
        %v605 = vld [vmem:[%s1 + $0x430] sm:$0xff]
        %v606 = vld [vmem:[%s1 + $0x438] sm:$0xff]
        %v607 = vld [vmem:[%s1 + $0x440] sm:$0xff]
        %v608 = vld [vmem:[%s1 + $0x448] sm:$0xff]
        %v609 = vld [vmem:[%s1 + $0x450] sm:$0xff]
        %v610 = vld [vmem:[%s1 + $0x458] sm:$0xff]
        %v611 = vld [vmem:[%s1 + $0x460] sm:$0xff]
        %v612 = vld [vmem:[%s1 + $0x468] sm:$0xff]
        %v613 = vld [vmem:[%s1 + $0x470] sm:$0xff]
        %v614 = vld [vmem:[%s1 + $0x478] sm:$0xff]
        %vm615 = vcmask 523264
        %v617 = vsel %vm615, %v395, 0
        %v620 = vsel %vm615, %v400, 0
        %v623 = vsel %vm615, %v405, 0
        %v626 = vsel %vm615, %v410, 0
        %v629 = vsel %vm615, %v415, 0
        %v632 = vsel %vm615, %v420, 0
        %v635 = vsel %vm615, %v425, 0
        %v638 = vsel %vm615, %v430, 0
        %v641 = vsel %vm615, %v435, 0
        %v644 = vsel %vm615, %v440, 0
        %v647 = vsel %vm615, %v445, 0
        %v650 = vsel %vm615, %v450, 0
        %v653 = vsel %vm615, %v455, 0
        %v656 = vsel %vm615, %v460, 0
        %v659 = vsel %vm615, %v465, 0
        %v662 = vsel %vm615, %v470, 0
        %664 = vmatprep.subr.mxu0 %v472
        %665 = vmatpush1.msra.mxu0 %v471
        %666 = vmatprep.subr.mxu0 %v474
        %667 = vmatpush1.msra.mxu0 %v473
        %668 = vmatprep.subr.mxu0 %v476
        %669 = vmatpush1.msra.mxu0 %v475
        %670 = vmatprep.subr.mxu0 %v478
        %671 = vmatpush1.msra.mxu0 %v477
        %672 = vmatprep.subr.mxu0 %v480
        %673 = vmatpush1.msra.mxu0 %v479
        %674 = vmatprep.subr.mxu0 %v482
        %675 = vmatpush1.msra.mxu0 %v481
        %676 = vmatprep.subr.mxu0 %v484
        %677 = vmatpush1.msra.mxu0 %v483
        %678 = vmatprep.subr.mxu0 %v486
        %679 = vmatpush1.msra.mxu0 %v485
        %680 = vmatprep.subr.mxu0 %v488
        %681 = vmatpush1.msra.mxu0 %v487
        %682 = vmatprep.subr.mxu0 %v490
        %683 = vmatpush1.msra.mxu0 %v489
        %684 = vmatprep.subr.mxu0 %v492
        %685 = vmatpush1.msra.mxu0 %v491
        %686 = vmatprep.subr.mxu0 %v494
        %687 = vmatpush1.msra.mxu0 %v493
        %688 = vmatprep.subr.mxu0 %v496
        %689 = vmatpush1.msra.mxu0 %v495
        %690 = vmatprep.subr.mxu0 %v498
        %691 = vmatpush1.msra.mxu0 %v497
        %692 = vmatprep.subr.mxu0 %v500
        %693 = vmatpush1.msra.mxu0 %v499
        %694 = vmatprep.subr.mxu0 %v502
        %695 = vmatpush1.msra.mxu0 %v501
        %696 = vmatprep.subr.mxu0 %v504
        %697 = vmatpush1.msra.mxu0 %v503
        %698 = vmatprep.subr.mxu0 %v506
        %699 = vmatpush1.msra.mxu0 %v505
        %700 = vmatprep.subr.mxu0 %v508
        %701 = vmatpush1.msra.mxu0 %v507
        %702 = vmatprep.subr.mxu0 %v510
        %703 = vmatpush1.msra.mxu0 %v509
        %704 = vmatprep.subr.mxu0 %v512
        %705 = vmatpush1.msra.mxu0 %v511
        %706 = vmatprep.subr.mxu0 %v514
        %707 = vmatpush1.msra.mxu0 %v513
        %708 = vmatprep.subr.mxu0 %v516
        %709 = vmatpush1.msra.mxu0 %v515
        %710 = vmatprep.subr.mxu0 %v518
        %711 = vmatpush1.msra.mxu0 %v517
        %712 = vmatprep.subr.mxu0 %v520
        %713 = vmatpush1.msra.mxu0 %v519
        %714 = vmatprep.subr.mxu0 %v522
        %715 = vmatpush1.msra.mxu0 %v521
        %716 = vmatprep.subr.mxu0 %v524
        %717 = vmatpush1.msra.mxu0 %v523
        %718 = vmatprep.subr.mxu0 %v526
        %719 = vmatpush1.msra.mxu0 %v525
        %720 = vmatprep.subr.mxu0 %v528
        %721 = vmatpush1.msra.mxu0 %v527
        %722 = vmatprep.subr.mxu0 %v530
        %723 = vmatpush1.msra.mxu0 %v529
        %724 = vmatprep.subr.mxu0 %v532
        %725 = vmatpush1.msra.mxu0 %v531
        %726 = vmatprep.subr.mxu0 %v534
        %727 = vmatpush1.msra.mxu0 %v533
        %728 = vmatprep.mubr.f32.mxu0 %v392
        %729 = vmatmul.mubr.f32.gmra.mrb[0].mxu0 %v391
        %v730 = vpop.f32.mrb[0].mxu0
        %v731 = vadd.f32 0.0, %v730
        %v732 = vpop.f32.mrb[0].mxu0
        %v733 = vadd.f32 0.0, %v732
        %734 = vmatprep.mubr.f32.mxu0 %v397
        %735 = vmatmul.mubr.f32.gmra.mrb[0].mxu0 %v396
        %v736 = vpop.f32.mrb[0].mxu0
        %v737 = vadd.f32 0.0, %v736
        %v738 = vpop.f32.mrb[0].mxu0
        %v739 = vadd.f32 0.0, %v738
        %740 = vmatprep.mubr.f32.mxu0 %v402
        %741 = vmatmul.mubr.f32.gmra.mrb[0].mxu0 %v401
        %v742 = vpop.f32.mrb[0].mxu0
        %v743 = vadd.f32 0.0, %v742
        %v744 = vpop.f32.mrb[0].mxu0
        %v745 = vadd.f32 0.0, %v744
        %746 = vmatprep.mubr.f32.mxu0 %v407
        %747 = vmatmul.mubr.f32.gmra.mrb[0].mxu0 %v406
        %v748 = vpop.f32.mrb[0].mxu0
        %v749 = vadd.f32 0.0, %v748
        %v750 = vpop.f32.mrb[0].mxu0
        %v751 = vadd.f32 0.0, %v750
        %752 = vmatprep.mubr.f32.mxu0 %v412
        %753 = vmatmul.mubr.f32.gmra.mrb[0].mxu0 %v411
        %v754 = vpop.f32.mrb[0].mxu0
        %v755 = vadd.f32 0.0, %v754
        %v756 = vpop.f32.mrb[0].mxu0
        %v757 = vadd.f32 0.0, %v756
        %758 = vmatprep.mubr.f32.mxu0 %v417
        %759 = vmatmul.mubr.f32.gmra.mrb[0].mxu0 %v416
        %v760 = vpop.f32.mrb[0].mxu0
        %v761 = vadd.f32 0.0, %v760
        %v762 = vpop.f32.mrb[0].mxu0
        %v763 = vadd.f32 0.0, %v762
        %764 = vmatprep.mubr.f32.mxu0 %v422
        %765 = vmatmul.mubr.f32.gmra.mrb[0].mxu0 %v421
        %v766 = vpop.f32.mrb[0].mxu0
        %v767 = vadd.f32 0.0, %v766
        %v768 = vpop.f32.mrb[0].mxu0
        %v769 = vadd.f32 0.0, %v768
        %770 = vmatprep.mubr.f32.mxu0 %v427
        %771 = vmatmul.mubr.f32.gmra.mrb[0].mxu0 %v426
        %v772 = vpop.f32.mrb[0].mxu0
        %v773 = vadd.f32 0.0, %v772
        %v774 = vpop.f32.mrb[0].mxu0
        %v775 = vadd.f32 0.0, %v774
        %776 = vmatprep.mubr.f32.mxu0 %v432
        %777 = vmatmul.mubr.f32.gmra.mrb[0].mxu0 %v431
        %v778 = vpop.f32.mrb[0].mxu0
        %v779 = vadd.f32 0.0, %v778
        %v780 = vpop.f32.mrb[0].mxu0
        %v781 = vadd.f32 0.0, %v780
        %782 = vmatprep.mubr.f32.mxu0 %v437
        %783 = vmatmul.mubr.f32.gmra.mrb[0].mxu0 %v436
        %v784 = vpop.f32.mrb[0].mxu0
        %v785 = vadd.f32 0.0, %v784
        %v786 = vpop.f32.mrb[0].mxu0
        %v787 = vadd.f32 0.0, %v786
        %788 = vmatprep.mubr.f32.mxu0 %v442
        %789 = vmatmul.mubr.f32.gmra.mrb[0].mxu0 %v441
        %v790 = vpop.f32.mrb[0].mxu0
        %v791 = vadd.f32 0.0, %v790
        %v792 = vpop.f32.mrb[0].mxu0
        %v793 = vadd.f32 0.0, %v792
        %794 = vmatprep.mubr.f32.mxu0 %v447
        %795 = vmatmul.mubr.f32.gmra.mrb[0].mxu0 %v446
        %v796 = vpop.f32.mrb[0].mxu0
        %v797 = vadd.f32 0.0, %v796
        %v798 = vpop.f32.mrb[0].mxu0
        %v799 = vadd.f32 0.0, %v798
        %800 = vmatprep.mubr.f32.mxu0 %v452
        %801 = vmatmul.mubr.f32.gmra.mrb[0].mxu0 %v451
        %v802 = vpop.f32.mrb[0].mxu0
        %v803 = vadd.f32 0.0, %v802
        %v804 = vpop.f32.mrb[0].mxu0
        %v805 = vadd.f32 0.0, %v804
        %806 = vmatprep.mubr.f32.mxu0 %v457
        %807 = vmatmul.mubr.f32.gmra.mrb[0].mxu0 %v456
        %v808 = vpop.f32.mrb[0].mxu0
        %v809 = vadd.f32 0.0, %v808
        %v810 = vpop.f32.mrb[0].mxu0
        %v811 = vadd.f32 0.0, %v810
        %812 = vmatprep.mubr.f32.mxu0 %v462
        %813 = vmatmul.mubr.f32.gmra.mrb[0].mxu0 %v461
        %v814 = vpop.f32.mrb[0].mxu0
        %v815 = vadd.f32 0.0, %v814
        %v816 = vpop.f32.mrb[0].mxu0
        %v817 = vadd.f32 0.0, %v816
        %818 = vmatprep.mubr.f32.mxu0 %v467
        %819 = vmatmul.mubr.f32.gmra.mrb[0].mxu0 %v466
        %v820 = vpop.f32.mrb[0].mxu0
        %v821 = vadd.f32 0.0, %v820
        %v822 = vpop.f32.mrb[0].mxu0
        %v823 = vadd.f32 0.0, %v822
        %824 = vdwg.mxu0
        %825 = vmatprep.subr.mxu0 %v536
        %826 = vmatpush1.msra.mxu0 %v535
        %827 = vmatprep.subr.mxu0 %v538
        %828 = vmatpush1.msra.mxu0 %v537
        %829 = vmatprep.subr.mxu0 %v540
        %830 = vmatpush1.msra.mxu0 %v539
        %831 = vmatprep.subr.mxu0 %v542
        %832 = vmatpush1.msra.mxu0 %v541
        %833 = vmatprep.subr.mxu0 %v544
        %834 = vmatpush1.msra.mxu0 %v543
        %835 = vmatprep.subr.mxu0 %v546
        %836 = vmatpush1.msra.mxu0 %v545
        %837 = vmatprep.subr.mxu0 %v548
        %838 = vmatpush1.msra.mxu0 %v547
        %839 = vmatprep.subr.mxu0 %v550
        %840 = vmatpush1.msra.mxu0 %v549
        %841 = vmatprep.subr.mxu0 %v552
        %842 = vmatpush1.msra.mxu0 %v551
        %843 = vmatprep.subr.mxu0 %v554
        %844 = vmatpush1.msra.mxu0 %v553
        %845 = vmatprep.subr.mxu0 %v556
        %846 = vmatpush1.msra.mxu0 %v555
        %847 = vmatprep.subr.mxu0 %v558
        %848 = vmatpush1.msra.mxu0 %v557
        %849 = vmatprep.subr.mxu0 %v560
        %850 = vmatpush1.msra.mxu0 %v559
        %851 = vmatprep.subr.mxu0 %v562
        %852 = vmatpush1.msra.mxu0 %v561
        %853 = vmatprep.subr.mxu0 %v564
        %854 = vmatpush1.msra.mxu0 %v563
        %855 = vmatprep.subr.mxu0 %v566
        %856 = vmatpush1.msra.mxu0 %v565
        %857 = vmatprep.subr.mxu0 %v568
        %858 = vmatpush1.msra.mxu0 %v567
        %859 = vmatprep.subr.mxu0 %v570
        %860 = vmatpush1.msra.mxu0 %v569
        %861 = vmatprep.subr.mxu0 %v572
        %862 = vmatpush1.msra.mxu0 %v571
        %863 = vmatprep.subr.mxu0 %v574
        %864 = vmatpush1.msra.mxu0 %v573
        %865 = vmatprep.subr.mxu0 %v576
        %866 = vmatpush1.msra.mxu0 %v575
        %867 = vmatprep.subr.mxu0 %v578
        %868 = vmatpush1.msra.mxu0 %v577
        %869 = vmatprep.subr.mxu0 %v580
        %870 = vmatpush1.msra.mxu0 %v579
        %871 = vmatprep.subr.mxu0 %v582
        %872 = vmatpush1.msra.mxu0 %v581
        %873 = vmatprep.subr.mxu0 %v584
        %874 = vmatpush1.msra.mxu0 %v583
        %875 = vmatprep.subr.mxu0 %v586
        %876 = vmatpush1.msra.mxu0 %v585
        %877 = vmatprep.subr.mxu0 %v588
        %878 = vmatpush1.msra.mxu0 %v587
        %879 = vmatprep.subr.mxu0 %v590
        %880 = vmatpush1.msra.mxu0 %v589
        %881 = vmatprep.subr.mxu0 %v592
        %882 = vmatpush1.msra.mxu0 %v591
        %883 = vmatprep.subr.mxu0 %v594
        %884 = vmatpush1.msra.mxu0 %v593
        %885 = vmatprep.subr.mxu0 %v596
        %886 = vmatpush1.msra.mxu0 %v595
        %887 = vmatprep.subr.mxu0 %v598
        %888 = vmatpush1.msra.mxu0 %v597
        %889 = vmatprep.mubr.f32.mxu0 %v394
        %890 = vmatmul.mubr.f32.gmra.mrb[0].mxu0 %v393
        %v891 = vpop.f32.mrb[0].mxu0
        %v892 = vadd.f32 %v731, %v891
        %v893 = vpop.f32.mrb[0].mxu0
        %v894 = vadd.f32 %v733, %v893
        %895 = vmatprep.mubr.f32.mxu0 %v399
        %896 = vmatmul.mubr.f32.gmra.mrb[0].mxu0 %v398
        %v897 = vpop.f32.mrb[0].mxu0
        %v898 = vadd.f32 %v737, %v897
        %v899 = vpop.f32.mrb[0].mxu0
        %v900 = vadd.f32 %v739, %v899
        %901 = vmatprep.mubr.f32.mxu0 %v404
        %902 = vmatmul.mubr.f32.gmra.mrb[0].mxu0 %v403
        %v903 = vpop.f32.mrb[0].mxu0
        %v904 = vadd.f32 %v743, %v903
        %v905 = vpop.f32.mrb[0].mxu0
        %v906 = vadd.f32 %v745, %v905
        %907 = vmatprep.mubr.f32.mxu0 %v409
        %908 = vmatmul.mubr.f32.gmra.mrb[0].mxu0 %v408
        %v909 = vpop.f32.mrb[0].mxu0
        %v910 = vadd.f32 %v749, %v909
        %v911 = vpop.f32.mrb[0].mxu0
        %v912 = vadd.f32 %v751, %v911
        %913 = vmatprep.mubr.f32.mxu0 %v414
        %914 = vmatmul.mubr.f32.gmra.mrb[0].mxu0 %v413
        %v915 = vpop.f32.mrb[0].mxu0
        %v916 = vadd.f32 %v755, %v915
        %v917 = vpop.f32.mrb[0].mxu0
        %v918 = vadd.f32 %v757, %v917
        %919 = vmatprep.mubr.f32.mxu0 %v419
        %920 = vmatmul.mubr.f32.gmra.mrb[0].mxu0 %v418
        %v921 = vpop.f32.mrb[0].mxu0
        %v922 = vadd.f32 %v761, %v921
        %v923 = vpop.f32.mrb[0].mxu0
        %v924 = vadd.f32 %v763, %v923
        %925 = vmatprep.mubr.f32.mxu0 %v424
        %926 = vmatmul.mubr.f32.gmra.mrb[0].mxu0 %v423
        %v927 = vpop.f32.mrb[0].mxu0
        %v928 = vadd.f32 %v767, %v927
        %v929 = vpop.f32.mrb[0].mxu0
        %v930 = vadd.f32 %v769, %v929
        %931 = vmatprep.mubr.f32.mxu0 %v429
        %932 = vmatmul.mubr.f32.gmra.mrb[0].mxu0 %v428
        %v933 = vpop.f32.mrb[0].mxu0
        %v934 = vadd.f32 %v773, %v933
        %v935 = vpop.f32.mrb[0].mxu0
        %v936 = vadd.f32 %v775, %v935
        %937 = vmatprep.mubr.f32.mxu0 %v434
        %938 = vmatmul.mubr.f32.gmra.mrb[0].mxu0 %v433
        %v939 = vpop.f32.mrb[0].mxu0
        %v940 = vadd.f32 %v779, %v939
        %v941 = vpop.f32.mrb[0].mxu0
        %v942 = vadd.f32 %v781, %v941
        %943 = vmatprep.mubr.f32.mxu0 %v439
        %944 = vmatmul.mubr.f32.gmra.mrb[0].mxu0 %v438
        %v945 = vpop.f32.mrb[0].mxu0
        %v946 = vadd.f32 %v785, %v945
        %v947 = vpop.f32.mrb[0].mxu0
        %v948 = vadd.f32 %v787, %v947
        %949 = vmatprep.mubr.f32.mxu0 %v444
        %950 = vmatmul.mubr.f32.gmra.mrb[0].mxu0 %v443
        %v951 = vpop.f32.mrb[0].mxu0
        %v952 = vadd.f32 %v791, %v951
        %v953 = vpop.f32.mrb[0].mxu0
        %v954 = vadd.f32 %v793, %v953
        %955 = vmatprep.mubr.f32.mxu0 %v449
        %956 = vmatmul.mubr.f32.gmra.mrb[0].mxu0 %v448
        %v957 = vpop.f32.mrb[0].mxu0
        %v958 = vadd.f32 %v797, %v957
        %v959 = vpop.f32.mrb[0].mxu0
        %v960 = vadd.f32 %v799, %v959
        %961 = vmatprep.mubr.f32.mxu0 %v454
        %962 = vmatmul.mubr.f32.gmra.mrb[0].mxu0 %v453
        %v963 = vpop.f32.mrb[0].mxu0
        %v964 = vadd.f32 %v803, %v963
        %v965 = vpop.f32.mrb[0].mxu0
        %v966 = vadd.f32 %v805, %v965
        %967 = vmatprep.mubr.f32.mxu0 %v459
        %968 = vmatmul.mubr.f32.gmra.mrb[0].mxu0 %v458
        %v969 = vpop.f32.mrb[0].mxu0
        %v970 = vadd.f32 %v809, %v969
        %v971 = vpop.f32.mrb[0].mxu0
        %v972 = vadd.f32 %v811, %v971
        %973 = vmatprep.mubr.f32.mxu0 %v464
        %974 = vmatmul.mubr.f32.gmra.mrb[0].mxu0 %v463
        %v975 = vpop.f32.mrb[0].mxu0
        %v976 = vadd.f32 %v815, %v975
        %v977 = vpop.f32.mrb[0].mxu0
        %v978 = vadd.f32 %v817, %v977
        %979 = vmatprep.mubr.f32.mxu0 %v469
        %980 = vmatmul.mubr.f32.gmra.mrb[0].mxu0 %v468
        %v981 = vpop.f32.mrb[0].mxu0
        %v982 = vadd.f32 %v821, %v981
        %v983 = vpop.f32.mrb[0].mxu0
        %v984 = vadd.f32 %v823, %v983
        %985 = vdwg.mxu0
        %986 = vmatprep.subr.mxu0 %v600
        %987 = vmatpush1.msra.mxu0 %v599
        %988 = vmatprep.subr.mxu0 %v602
        %989 = vmatpush1.msra.mxu0 %v601
        %990 = vmatprep.subr.mxu0 %v604
        %991 = vmatpush1.msra.mxu0 %v603
        %992 = vmatprep.subr.mxu0 %v606
        %993 = vmatpush1.msra.mxu0 %v605
        %994 = vmatprep.subr.mxu0 %v608
        %995 = vmatpush1.msra.mxu0 %v607
        %996 = vmatprep.subr.mxu0 %v610
        %997 = vmatpush1.msra.mxu0 %v609
        %998 = vmatprep.subr.mxu0 %v612
        %999 = vmatpush1.msra.mxu0 %v611
        %1000 = vmatprep.subr.mxu0 %v614
        %1001 = vmatpush1.msra.mxu0 %v613
        %1002 = vmatprep.subr.mxu0 0.0
        %1003 = vmatpush1.msra.mxu0 0.0
        %1004 = vmatprep.subr.mxu0 0.0
        %1005 = vmatpush1.msra.mxu0 0.0
        %1006 = vmatprep.subr.mxu0 0.0
        %1007 = vmatpush1.msra.mxu0 0.0
        %1008 = vmatprep.subr.mxu0 0.0
        %1009 = vmatpush1.msra.mxu0 0.0
        %1010 = vmatprep.subr.mxu0 0.0
        %1011 = vmatpush1.msra.mxu0 0.0
        %1012 = vmatprep.subr.mxu0 0.0
        %1013 = vmatpush1.msra.mxu0 0.0
        %1014 = vmatprep.subr.mxu0 0.0
        %1015 = vmatpush1.msra.mxu0 0.0
        %1016 = vmatprep.subr.mxu0 0.0
        %1017 = vmatpush1.msra.mxu0 0.0
        %1018 = vmatprep.subr.mxu0 0.0
        %1019 = vmatpush1.msra.mxu0 0.0
        %1020 = vmatprep.subr.mxu0 0.0
        %1021 = vmatpush1.msra.mxu0 0.0
        %1022 = vmatprep.subr.mxu0 0.0
        %1023 = vmatpush1.msra.mxu0 0.0
        %1024 = vmatprep.subr.mxu0 0.0
        %1025 = vmatpush1.msra.mxu0 0.0
        %1026 = vmatprep.subr.mxu0 0.0
        %1027 = vmatpush1.msra.mxu0 0.0
        %1028 = vmatprep.subr.mxu0 0.0
        %1029 = vmatpush1.msra.mxu0 0.0
        %1030 = vmatprep.subr.mxu0 0.0
        %1031 = vmatpush1.msra.mxu0 0.0
        %1032 = vmatprep.subr.mxu0 0.0
        %1033 = vmatpush1.msra.mxu0 0.0
        %1034 = vmatprep.subr.mxu0 0.0
        %1035 = vmatpush1.msra.mxu0 0.0
        %1036 = vmatprep.subr.mxu0 0.0
        %1037 = vmatpush1.msra.mxu0 0.0
        %1038 = vmatprep.subr.mxu0 0.0
        %1039 = vmatpush1.msra.mxu0 0.0
        %1040 = vmatprep.subr.mxu0 0.0
        %1041 = vmatpush1.msra.mxu0 0.0
        %1042 = vmatprep.subr.mxu0 0.0
        %1043 = vmatpush1.msra.mxu0 0.0
        %1044 = vmatprep.subr.mxu0 0.0
        %1045 = vmatpush1.msra.mxu0 0.0
        %1046 = vmatprep.subr.mxu0 0.0
        %1047 = vmatpush1.msra.mxu0 0.0
        %1048 = vmatprep.subr.mxu0 0.0
        %1049 = vmatpush1.msra.mxu0 0.0
        %1050 = vmatprep.mubr.f32.mxu0 0.0
        %1051 = vmatmul.mubr.f32.gmra.mrb[0].mxu0 %v617
        %v1052 = vpop.f32.mrb[0].mxu0
        %v1053 = vadd.f32 %v892, %v1052
        %v1054 = vpop.f32.mrb[0].mxu0
        %v1055 = vadd.f32 %v894, %v1054
        %1056 = vmatprep.mubr.f32.mxu0 0.0
        %1057 = vmatmul.mubr.f32.gmra.mrb[0].mxu0 %v620
        %v1058 = vpop.f32.mrb[0].mxu0
        %v1059 = vadd.f32 %v898, %v1058
        %v1060 = vpop.f32.mrb[0].mxu0
        %v1061 = vadd.f32 %v900, %v1060
        %1062 = vmatprep.mubr.f32.mxu0 0.0
        %1063 = vmatmul.mubr.f32.gmra.mrb[0].mxu0 %v623
        %v1064 = vpop.f32.mrb[0].mxu0
        %v1065 = vadd.f32 %v904, %v1064
        %v1066 = vpop.f32.mrb[0].mxu0
        %v1067 = vadd.f32 %v906, %v1066
        %1068 = vmatprep.mubr.f32.mxu0 0.0
        %1069 = vmatmul.mubr.f32.gmra.mrb[0].mxu0 %v626
        %v1070 = vpop.f32.mrb[0].mxu0
        %v1071 = vadd.f32 %v910, %v1070
        %v1072 = vpop.f32.mrb[0].mxu0
        %v1073 = vadd.f32 %v912, %v1072
        %1074 = vmatprep.mubr.f32.mxu0 0.0
        %1075 = vmatmul.mubr.f32.gmra.mrb[0].mxu0 %v629
        %v1076 = vpop.f32.mrb[0].mxu0
        %v1077 = vadd.f32 %v916, %v1076
        %v1078 = vpop.f32.mrb[0].mxu0
        %v1079 = vadd.f32 %v918, %v1078
        %1080 = vmatprep.mubr.f32.mxu0 0.0
        %1081 = vmatmul.mubr.f32.gmra.mrb[0].mxu0 %v632
        %v1082 = vpop.f32.mrb[0].mxu0
        %v1083 = vadd.f32 %v922, %v1082
        %v1084 = vpop.f32.mrb[0].mxu0
        %v1085 = vadd.f32 %v924, %v1084
        %1086 = vmatprep.mubr.f32.mxu0 0.0
        %1087 = vmatmul.mubr.f32.gmra.mrb[0].mxu0 %v635
        %v1088 = vpop.f32.mrb[0].mxu0
        %v1089 = vadd.f32 %v928, %v1088
        %v1090 = vpop.f32.mrb[0].mxu0
        %v1091 = vadd.f32 %v930, %v1090
        %1092 = vmatprep.mubr.f32.mxu0 0.0
        %1093 = vmatmul.mubr.f32.gmra.mrb[0].mxu0 %v638
        %v1094 = vpop.f32.mrb[0].mxu0
        %v1095 = vadd.f32 %v934, %v1094
        %v1096 = vpop.f32.mrb[0].mxu0
        %v1097 = vadd.f32 %v936, %v1096
        %1098 = vmatprep.mubr.f32.mxu0 0.0
        %1099 = vmatmul.mubr.f32.gmra.mrb[0].mxu0 %v641
        %v1100 = vpop.f32.mrb[0].mxu0
        %v1101 = vadd.f32 %v940, %v1100
        %v1102 = vpop.f32.mrb[0].mxu0
        %v1103 = vadd.f32 %v942, %v1102
        %1104 = vmatprep.mubr.f32.mxu0 0.0
        %1105 = vmatmul.mubr.f32.gmra.mrb[0].mxu0 %v644
        %v1106 = vpop.f32.mrb[0].mxu0
        %v1107 = vadd.f32 %v946, %v1106
        %v1108 = vpop.f32.mrb[0].mxu0
        %v1109 = vadd.f32 %v948, %v1108
        %1110 = vmatprep.mubr.f32.mxu0 0.0
        %1111 = vmatmul.mubr.f32.gmra.mrb[0].mxu0 %v647
        %v1112 = vpop.f32.mrb[0].mxu0
        %v1113 = vadd.f32 %v952, %v1112
        %v1114 = vpop.f32.mrb[0].mxu0
        %v1115 = vadd.f32 %v954, %v1114
        %1116 = vmatprep.mubr.f32.mxu0 0.0
        %1117 = vmatmul.mubr.f32.gmra.mrb[0].mxu0 %v650
        %v1118 = vpop.f32.mrb[0].mxu0
        %v1119 = vadd.f32 %v958, %v1118
        %v1120 = vpop.f32.mrb[0].mxu0
        %v1121 = vadd.f32 %v960, %v1120
        %1122 = vmatprep.mubr.f32.mxu0 0.0
        %1123 = vmatmul.mubr.f32.gmra.mrb[0].mxu0 %v653
        %v1124 = vpop.f32.mrb[0].mxu0
        %v1125 = vadd.f32 %v964, %v1124
        %v1126 = vpop.f32.mrb[0].mxu0
        %v1127 = vadd.f32 %v966, %v1126
        %1128 = vmatprep.mubr.f32.mxu0 0.0
        %1129 = vmatmul.mubr.f32.gmra.mrb[0].mxu0 %v656
        %v1130 = vpop.f32.mrb[0].mxu0
        %v1131 = vadd.f32 %v970, %v1130
        %v1132 = vpop.f32.mrb[0].mxu0
        %v1133 = vadd.f32 %v972, %v1132
        %1134 = vmatprep.mubr.f32.mxu0 0.0
        %1135 = vmatmul.mubr.f32.gmra.mrb[0].mxu0 %v659
        %v1136 = vpop.f32.mrb[0].mxu0
        %v1137 = vadd.f32 %v976, %v1136
        %v1138 = vpop.f32.mrb[0].mxu0
        %v1139 = vadd.f32 %v978, %v1138
        %1140 = vmatprep.mubr.f32.mxu0 0.0
        %1141 = vmatmul.mubr.f32.gmra.mrb[0].mxu0 %v662
        %v1142 = vpop.f32.mrb[0].mxu0
        %v1143 = vadd.f32 %v982, %v1142
        %v1144 = vpop.f32.mrb[0].mxu0
        %v1145 = vadd.f32 %v984, %v1144
        %1146 = vdwg.mxu0
        %v1147 = vld [vmem:[%s2] sm:$0x3]
        %v1149 = vlaneseq
        %v1150 = vshrl.u32 %v1149, 7
        %v1151 = vsub.s32 0, %v1150
        %v1152 = vrot.slane %v1147, %v1151
        %v1153 = vlaneseq
        %v1154 = vshrl.u32 %v1153, 7
        %v1155 = vsub.s32 1, %v1154
        %v1156 = vrot.slane %v1147, %v1155
        %v1159 = vmul.f32 %v1053, %v1152
        %v1160 = vmul.f32 %v1055, %v1156
        %v1161 = vmul.f32 %v1059, %v1152
        %v1162 = vmul.f32 %v1061, %v1156
        %v1163 = vmul.f32 %v1065, %v1152
        %v1164 = vmul.f32 %v1067, %v1156
        %v1165 = vmul.f32 %v1071, %v1152
        %v1166 = vmul.f32 %v1073, %v1156
        %v1167 = vmul.f32 %v1077, %v1152
        %v1168 = vmul.f32 %v1079, %v1156
        %v1169 = vmul.f32 %v1083, %v1152
        %v1170 = vmul.f32 %v1085, %v1156
        %v1171 = vmul.f32 %v1089, %v1152
        %v1172 = vmul.f32 %v1091, %v1156
        %v1173 = vmul.f32 %v1095, %v1152
        %v1174 = vmul.f32 %v1097, %v1156
        %v1175 = vmul.f32 %v1101, %v1152
        %v1176 = vmul.f32 %v1103, %v1156
        %v1177 = vmul.f32 %v1107, %v1152
        %v1178 = vmul.f32 %v1109, %v1156
        %v1179 = vmul.f32 %v1113, %v1152
        %v1180 = vmul.f32 %v1115, %v1156
        %v1181 = vmul.f32 %v1119, %v1152
        %v1182 = vmul.f32 %v1121, %v1156
        %v1183 = vmul.f32 %v1125, %v1152
        %v1184 = vmul.f32 %v1127, %v1156
        %v1185 = vmul.f32 %v1131, %v1152
        %v1186 = vmul.f32 %v1133, %v1156
        %v1187 = vmul.f32 %v1137, %v1152
        %v1188 = vmul.f32 %v1139, %v1156
        %v1189 = vmul.f32 %v1143, %v1152
        %v1190 = vmul.f32 %v1145, %v1156
        %v1191 = vld [vmem:[%s3] sm:$0x3]
        %v1193 = vlaneseq
        %v1194 = vshrl.u32 %v1193, 7
        %v1195 = vsub.s32 0, %v1194
        %v1196 = vrot.slane %v1191, %v1195
        %v1197 = vlaneseq
        %v1198 = vshrl.u32 %v1197, 7
        %v1199 = vsub.s32 1, %v1198
        %v1200 = vrot.slane %v1191, %v1199
        %v1203 = vadd.f32 %v1159, %v1196
        %v1204 = vadd.f32 %v1160, %v1200
        %v1205 = vadd.f32 %v1161, %v1196
        %v1206 = vadd.f32 %v1162, %v1200
        %v1207 = vadd.f32 %v1163, %v1196
        %v1208 = vadd.f32 %v1164, %v1200
        %v1209 = vadd.f32 %v1165, %v1196
        %v1210 = vadd.f32 %v1166, %v1200
        %v1211 = vadd.f32 %v1167, %v1196
        %v1212 = vadd.f32 %v1168, %v1200
        %v1213 = vadd.f32 %v1169, %v1196
        %v1214 = vadd.f32 %v1170, %v1200
        %v1215 = vadd.f32 %v1171, %v1196
        %v1216 = vadd.f32 %v1172, %v1200
        %v1217 = vadd.f32 %v1173, %v1196
        %v1218 = vadd.f32 %v1174, %v1200
        %v1219 = vadd.f32 %v1175, %v1196
        %v1220 = vadd.f32 %v1176, %v1200
        %v1221 = vadd.f32 %v1177, %v1196
        %v1222 = vadd.f32 %v1178, %v1200
        %v1223 = vadd.f32 %v1179, %v1196
        %v1224 = vadd.f32 %v1180, %v1200
        %v1225 = vadd.f32 %v1181, %v1196
        %v1226 = vadd.f32 %v1182, %v1200
        %v1227 = vadd.f32 %v1183, %v1196
        %v1228 = vadd.f32 %v1184, %v1200
        %v1229 = vadd.f32 %v1185, %v1196
        %v1230 = vadd.f32 %v1186, %v1200
        %v1231 = vadd.f32 %v1187, %v1196
        %v1232 = vadd.f32 %v1188, %v1200
        %v1233 = vadd.f32 %v1189, %v1196
        %v1234 = vadd.f32 %v1190, %v1200
        %v1235 = vmax.f32 %v1203, 0.0
        %v1236 = vmax.f32 %v1205, 0.0
        %v1237 = vmax.f32 %v1207, 0.0
        %v1238 = vmax.f32 %v1209, 0.0
        %v1239 = vmax.f32 %v1211, 0.0
        %v1240 = vmax.f32 %v1213, 0.0
        %v1241 = vmax.f32 %v1215, 0.0
        %v1242 = vmax.f32 %v1217, 0.0
        %v1243 = vmax.f32 %v1219, 0.0
        %v1244 = vmax.f32 %v1221, 0.0
        %v1245 = vmax.f32 %v1223, 0.0
        %v1246 = vmax.f32 %v1225, 0.0
        %v1247 = vmax.f32 %v1227, 0.0
        %v1248 = vmax.f32 %v1229, 0.0
        %v1249 = vmax.f32 %v1231, 0.0
        %v1250 = vmax.f32 %v1233, 0.0
        %1251 = vst [vmem:[#allocation2] sm:$0xff] 0.0
        %1252 = vst [vmem:[#allocation2 + $0x8] sm:$0x3] 0.0
        %1253 = vst [vmem:[#allocation2 + $0xa0] sm:$0xff] 0.0
        %1254 = vst [vmem:[#allocation2 + $0xa8] sm:$0x3] 0.0
        %s1255 = scalar_lea.vmem [#allocation2], 144
        %1256 = vst [vmem:[%s1255] sm:$0xff] 0.0
        %1257 = vst [vmem:[%s1255 + $0x8] sm:$0x3] 0.0
        %1258 = vst [vmem:[%s1255 + $0xa0] sm:$0xff] 0.0
        %1259 = vst [vmem:[%s1255 + $0xa8] sm:$0x3] 0.0
        %1260 = vst [vmem:[#allocation2] sm:$0x1] 0.0
        %1261 = vst [vmem:[#allocation2 + $0x10] sm:$0x1] 0.0
        %1262 = vst [vmem:[#allocation2 + $0x20] sm:$0x1] 0.0
        %1263 = vst [vmem:[#allocation2 + $0x30] sm:$0x1] 0.0
        %1264 = vst [vmem:[#allocation2 + $0x40] sm:$0x1] 0.0
        %1265 = vst [vmem:[#allocation2 + $0x50] sm:$0x1] 0.0
        %1266 = vst [vmem:[#allocation2 + $0x60] sm:$0x1] 0.0
        %1267 = vst [vmem:[#allocation2 + $0x70] sm:$0x1] 0.0
        %1268 = vst [vmem:[#allocation2 + $0x80] sm:$0x1] 0.0
        %1269 = vst [vmem:[#allocation2 + $0x90] sm:$0x1] 0.0
        %1270 = vst [vmem:[#allocation2 + $0xa0] sm:$0x1] 0.0
        %1271 = vst [vmem:[#allocation2 + $0xb0] sm:$0x1] 0.0
        %1272 = vst [vmem:[#allocation2 + $0xc0] sm:$0x1] 0.0
        %1273 = vst [vmem:[#allocation2 + $0xd0] sm:$0x1] 0.0
        %1274 = vst [vmem:[#allocation2 + $0xe0] sm:$0x1] 0.0
        %1275 = vst [vmem:[#allocation2 + $0xf0] sm:$0x1] 0.0
        %1276 = vst [vmem:[#allocation2 + $0x100] sm:$0x1] 0.0
        %1277 = vst [vmem:[#allocation2 + $0x110] sm:$0x1] 0.0
        %1278 = vst [vmem:[#allocation2 + $0x120] sm:$0x1] 0.0
        %1279 = vst [vmem:[#allocation2 + $0x130] sm:$0x1] 0.0
        %1280 = vst [vmem:[#allocation2 + $0x9] sm:$0x1] 0.0
        %1281 = vst [vmem:[#allocation2 + $0x19] sm:$0x1] 0.0
        %1282 = vst [vmem:[#allocation2 + $0x29] sm:$0x1] 0.0
        %1283 = vst [vmem:[#allocation2 + $0x39] sm:$0x1] 0.0
        %1284 = vst [vmem:[#allocation2 + $0x49] sm:$0x1] 0.0
        %1285 = vst [vmem:[#allocation2 + $0x59] sm:$0x1] 0.0
        %1286 = vst [vmem:[#allocation2 + $0x69] sm:$0x1] 0.0
        %1287 = vst [vmem:[#allocation2 + $0x79] sm:$0x1] 0.0
        %1288 = vst [vmem:[#allocation2 + $0x89] sm:$0x1] 0.0
        %1289 = vst [vmem:[#allocation2 + $0x99] sm:$0x1] 0.0
        %1290 = vst [vmem:[#allocation2 + $0xa9] sm:$0x1] 0.0
        %1291 = vst [vmem:[#allocation2 + $0xb9] sm:$0x1] 0.0
        %1292 = vst [vmem:[#allocation2 + $0xc9] sm:$0x1] 0.0
        %1293 = vst [vmem:[#allocation2 + $0xd9] sm:$0x1] 0.0
        %1294 = vst [vmem:[#allocation2 + $0xe9] sm:$0x1] 0.0
        %1295 = vst [vmem:[#allocation2 + $0xf9] sm:$0x1] 0.0
        %1296 = vst [vmem:[#allocation2 + $0x109] sm:$0x1] 0.0
        %1297 = vst [vmem:[#allocation2 + $0x119] sm:$0x1] 0.0
        %1298 = vst [vmem:[#allocation2 + $0x129] sm:$0x1] 0.0
        %1299 = vst [vmem:[#allocation2 + $0x139] sm:$0x1] 0.0
        %s1300 = scalar_lea.vmem [#allocation2], 16
        %1301 = vst [vmem:[%s1300 + $0x1] sm:$0xff] %v1235
        %1302 = vst [vmem:[%s1300 + $0x11] sm:$0xff] %v1236
        %1303 = vst [vmem:[%s1300 + $0x21] sm:$0xff] %v1237
        %1304 = vst [vmem:[%s1300 + $0x31] sm:$0xff] %v1238
        %1305 = vst [vmem:[%s1300 + $0x41] sm:$0xff] %v1239
        %1306 = vst [vmem:[%s1300 + $0x51] sm:$0xff] %v1240
        %1307 = vst [vmem:[%s1300 + $0x61] sm:$0xff] %v1241
        %1308 = vst [vmem:[%s1300 + $0x71] sm:$0xff] %v1242
        %1309 = vst [vmem:[%s1300 + $0xa1] sm:$0xff] %v1243
        %1310 = vst [vmem:[%s1300 + $0xb1] sm:$0xff] %v1244
        %1311 = vst [vmem:[%s1300 + $0xc1] sm:$0xff] %v1245
        %1312 = vst [vmem:[%s1300 + $0xd1] sm:$0xff] %v1246
        %1313 = vst [vmem:[%s1300 + $0xe1] sm:$0xff] %v1247
        %1314 = vst [vmem:[%s1300 + $0xf1] sm:$0xff] %v1248
        %1315 = vst [vmem:[%s1300 + $0x101] sm:$0xff] %v1249
        %1316 = vst [vmem:[%s1300 + $0x111] sm:$0xff] %v1250
        %v1317 = vld [vmem:[#allocation2] sm:$0xff]
        %v1318 = vld [vmem:[#allocation2 + $0x8] sm:$0x3]
        %v1319 = vld [vmem:[#allocation2 + $0x10] sm:$0xff]
        %v1320 = vld [vmem:[#allocation2 + $0x18] sm:$0x3]
        %v1321 = vld [vmem:[#allocation2 + $0x20] sm:$0xff]
        %v1322 = vld [vmem:[#allocation2 + $0x28] sm:$0x3]
        %v1323 = vld [vmem:[#allocation2 + $0x30] sm:$0xff]
        %v1324 = vld [vmem:[#allocation2 + $0x38] sm:$0x3]
        %v1325 = vld [vmem:[#allocation2 + $0x40] sm:$0xff]
        %v1326 = vld [vmem:[#allocation2 + $0x48] sm:$0x3]
        %v1327 = vld [vmem:[#allocation2 + $0x50] sm:$0xff]
        %v1328 = vld [vmem:[#allocation2 + $0x58] sm:$0x3]
        %v1329 = vld [vmem:[#allocation2 + $0x60] sm:$0xff]
        %v1330 = vld [vmem:[#allocation2 + $0x68] sm:$0x3]
        %v1331 = vld [vmem:[#allocation2 + $0x70] sm:$0xff]
        %v1332 = vld [vmem:[#allocation2 + $0x78] sm:$0x3]
        %v1333 = vld [vmem:[#allocation2 + $0xa0] sm:$0xff]
        %v1334 = vld [vmem:[#allocation2 + $0xa8] sm:$0x3]
        %v1335 = vld [vmem:[#allocation2 + $0xb0] sm:$0xff]
        %v1336 = vld [vmem:[#allocation2 + $0xb8] sm:$0x3]
        %v1337 = vld [vmem:[#allocation2 + $0xc0] sm:$0xff]
        %v1338 = vld [vmem:[#allocation2 + $0xc8] sm:$0x3]
        %v1339 = vld [vmem:[#allocation2 + $0xd0] sm:$0xff]
        %v1340 = vld [vmem:[#allocation2 + $0xd8] sm:$0x3]
        %v1341 = vld [vmem:[#allocation2 + $0xe0] sm:$0xff]
        %v1342 = vld [vmem:[#allocation2 + $0xe8] sm:$0x3]
        %v1343 = vld [vmem:[#allocation2 + $0xf0] sm:$0xff]
        %v1344 = vld [vmem:[#allocation2 + $0xf8] sm:$0x3]
        %v1345 = vld [vmem:[#allocation2 + $0x100] sm:$0xff]
        %v1346 = vld [vmem:[#allocation2 + $0x108] sm:$0x3]
        %v1347 = vld [vmem:[#allocation2 + $0x110] sm:$0xff]
        %v1348 = vld [vmem:[#allocation2 + $0x118] sm:$0x3]
        %1349 = vst [vmem:[#allocation3] sm:$0xff] %v1317
        %1350 = vst [vmem:[#allocation3 + $0x48] sm:$0xff] %v1319
        %1351 = vst [vmem:[#allocation3 + $0x90] sm:$0xff] %v1321
        %1352 = vst [vmem:[#allocation3 + $0xd8] sm:$0xff] %v1323
        %1353 = vst [vmem:[#allocation3 + $0x120] sm:$0xff] %v1325
        %1354 = vst [vmem:[#allocation3 + $0x168] sm:$0xff] %v1327
        %1355 = vst [vmem:[#allocation3 + $0x1b0] sm:$0xff] %v1329
        %1356 = vst [vmem:[#allocation3 + $0x1f8] sm:$0xff] %v1331
        %1357 = vst [vmem:[#allocation3 + $0x240] sm:$0xff] %v1333
        %1358 = vst [vmem:[#allocation3 + $0x288] sm:$0xff] %v1335
        %1359 = vst [vmem:[#allocation3 + $0x2d0] sm:$0xff] %v1337
        %1360 = vst [vmem:[#allocation3 + $0x318] sm:$0xff] %v1339
        %1361 = vst [vmem:[#allocation3 + $0x360] sm:$0xff] %v1341
        %1362 = vst [vmem:[#allocation3 + $0x3a8] sm:$0xff] %v1343
        %1363 = vst [vmem:[#allocation3 + $0x3f0] sm:$0xff] %v1345
        %1364 = vst [vmem:[#allocation3 + $0x438] sm:$0xff] %v1347
        %vm1397 = vcmask 1046528
        %v1398 = vrot.slane %v1317, 1
        %v1399 = vrot.slane %v1318, 1
        %v1400 = vsel %vm1397, %v1398, %v1399
        %v1401 = vrot.slane %v1319, 1
        %v1402 = vrot.slane %v1320, 1
        %v1403 = vsel %vm1397, %v1401, %v1402
        %v1404 = vrot.slane %v1321, 1
        %v1405 = vrot.slane %v1322, 1
        %v1406 = vsel %vm1397, %v1404, %v1405
        %v1407 = vrot.slane %v1323, 1
        %v1408 = vrot.slane %v1324, 1
        %v1409 = vsel %vm1397, %v1407, %v1408
        %v1410 = vrot.slane %v1325, 1
        %v1411 = vrot.slane %v1326, 1
        %v1412 = vsel %vm1397, %v1410, %v1411
        %v1413 = vrot.slane %v1327, 1
        %v1414 = vrot.slane %v1328, 1
        %v1415 = vsel %vm1397, %v1413, %v1414
        %v1416 = vrot.slane %v1329, 1
        %v1417 = vrot.slane %v1330, 1
        %v1418 = vsel %vm1397, %v1416, %v1417
        %v1419 = vrot.slane %v1331, 1
        %v1420 = vrot.slane %v1332, 1
        %v1421 = vsel %vm1397, %v1419, %v1420
        %v1422 = vrot.slane %v1333, 1
        %v1423 = vrot.slane %v1334, 1
        %v1424 = vsel %vm1397, %v1422, %v1423
        %v1425 = vrot.slane %v1335, 1
        %v1426 = vrot.slane %v1336, 1
        %v1427 = vsel %vm1397, %v1425, %v1426
        %v1428 = vrot.slane %v1337, 1
        %v1429 = vrot.slane %v1338, 1
        %v1430 = vsel %vm1397, %v1428, %v1429
        %v1431 = vrot.slane %v1339, 1
        %v1432 = vrot.slane %v1340, 1
        %v1433 = vsel %vm1397, %v1431, %v1432
        %v1434 = vrot.slane %v1341, 1
        %v1435 = vrot.slane %v1342, 1
        %v1436 = vsel %vm1397, %v1434, %v1435
        %v1437 = vrot.slane %v1343, 1
        %v1438 = vrot.slane %v1344, 1
        %v1439 = vsel %vm1397, %v1437, %v1438
        %v1440 = vrot.slane %v1345, 1
        %v1441 = vrot.slane %v1346, 1
        %v1442 = vsel %vm1397, %v1440, %v1441
        %v1443 = vrot.slane %v1347, 1
        %v1444 = vrot.slane %v1348, 1
        %v1445 = vsel %vm1397, %v1443, %v1444
        %1462 = vst [vmem:[#allocation3 + $0x8] sm:$0xff] %v1400
        %1463 = vst [vmem:[#allocation3 + $0x50] sm:$0xff] %v1403
        %1464 = vst [vmem:[#allocation3 + $0x98] sm:$0xff] %v1406
        %1465 = vst [vmem:[#allocation3 + $0xe0] sm:$0xff] %v1409
        %1466 = vst [vmem:[#allocation3 + $0x128] sm:$0xff] %v1412
        %1467 = vst [vmem:[#allocation3 + $0x170] sm:$0xff] %v1415
        %1468 = vst [vmem:[#allocation3 + $0x1b8] sm:$0xff] %v1418
        %1469 = vst [vmem:[#allocation3 + $0x200] sm:$0xff] %v1421
        %1470 = vst [vmem:[#allocation3 + $0x248] sm:$0xff] %v1424
        %1471 = vst [vmem:[#allocation3 + $0x290] sm:$0xff] %v1427
        %1472 = vst [vmem:[#allocation3 + $0x2d8] sm:$0xff] %v1430
        %1473 = vst [vmem:[#allocation3 + $0x320] sm:$0xff] %v1433
        %1474 = vst [vmem:[#allocation3 + $0x368] sm:$0xff] %v1436
        %1475 = vst [vmem:[#allocation3 + $0x3b0] sm:$0xff] %v1439
        %1476 = vst [vmem:[#allocation3 + $0x3f8] sm:$0xff] %v1442
        %1477 = vst [vmem:[#allocation3 + $0x440] sm:$0xff] %v1445
        %vm1478 = vcmask 1045504
        %v1479 = vrot.slane %v1317, 2
        %v1480 = vrot.slane %v1318, 2
        %v1481 = vsel %vm1478, %v1479, %v1480
        %v1482 = vrot.slane %v1319, 2
        %v1483 = vrot.slane %v1320, 2
        %v1484 = vsel %vm1478, %v1482, %v1483
        %v1485 = vrot.slane %v1321, 2
        %v1486 = vrot.slane %v1322, 2
        %v1487 = vsel %vm1478, %v1485, %v1486
        %v1488 = vrot.slane %v1323, 2
        %v1489 = vrot.slane %v1324, 2
        %v1490 = vsel %vm1478, %v1488, %v1489
        %v1491 = vrot.slane %v1325, 2
        %v1492 = vrot.slane %v1326, 2
        %v1493 = vsel %vm1478, %v1491, %v1492
        %v1494 = vrot.slane %v1327, 2
        %v1495 = vrot.slane %v1328, 2
        %v1496 = vsel %vm1478, %v1494, %v1495
        %v1497 = vrot.slane %v1329, 2
        %v1498 = vrot.slane %v1330, 2
        %v1499 = vsel %vm1478, %v1497, %v1498
        %v1500 = vrot.slane %v1331, 2
        %v1501 = vrot.slane %v1332, 2
        %v1502 = vsel %vm1478, %v1500, %v1501
        %v1503 = vrot.slane %v1333, 2
        %v1504 = vrot.slane %v1334, 2
        %v1505 = vsel %vm1478, %v1503, %v1504
        %v1506 = vrot.slane %v1335, 2
        %v1507 = vrot.slane %v1336, 2
        %v1508 = vsel %vm1478, %v1506, %v1507
        %v1509 = vrot.slane %v1337, 2
        %v1510 = vrot.slane %v1338, 2
        %v1511 = vsel %vm1478, %v1509, %v1510
        %v1512 = vrot.slane %v1339, 2
        %v1513 = vrot.slane %v1340, 2
        %v1514 = vsel %vm1478, %v1512, %v1513
        %v1515 = vrot.slane %v1341, 2
        %v1516 = vrot.slane %v1342, 2
        %v1517 = vsel %vm1478, %v1515, %v1516
        %v1518 = vrot.slane %v1343, 2
        %v1519 = vrot.slane %v1344, 2
        %v1520 = vsel %vm1478, %v1518, %v1519
        %v1521 = vrot.slane %v1345, 2
        %v1522 = vrot.slane %v1346, 2
        %v1523 = vsel %vm1478, %v1521, %v1522
        %v1524 = vrot.slane %v1347, 2
        %v1525 = vrot.slane %v1348, 2
        %v1526 = vsel %vm1478, %v1524, %v1525
        %1543 = vst [vmem:[#allocation3 + $0x10] sm:$0xff] %v1481
        %1544 = vst [vmem:[#allocation3 + $0x58] sm:$0xff] %v1484
        %1545 = vst [vmem:[#allocation3 + $0xa0] sm:$0xff] %v1487
        %1546 = vst [vmem:[#allocation3 + $0xe8] sm:$0xff] %v1490
        %1547 = vst [vmem:[#allocation3 + $0x130] sm:$0xff] %v1493
        %1548 = vst [vmem:[#allocation3 + $0x178] sm:$0xff] %v1496
        %1549 = vst [vmem:[#allocation3 + $0x1c0] sm:$0xff] %v1499
        %1550 = vst [vmem:[#allocation3 + $0x208] sm:$0xff] %v1502
        %1551 = vst [vmem:[#allocation3 + $0x250] sm:$0xff] %v1505
        %1552 = vst [vmem:[#allocation3 + $0x298] sm:$0xff] %v1508
        %1553 = vst [vmem:[#allocation3 + $0x2e0] sm:$0xff] %v1511
        %1554 = vst [vmem:[#allocation3 + $0x328] sm:$0xff] %v1514
        %1555 = vst [vmem:[#allocation3 + $0x370] sm:$0xff] %v1517
        %1556 = vst [vmem:[#allocation3 + $0x3b8] sm:$0xff] %v1520
        %1557 = vst [vmem:[#allocation3 + $0x400] sm:$0xff] %v1523
        %1558 = vst [vmem:[#allocation3 + $0x448] sm:$0xff] %v1526
        %v1559 = vld [vmem:[%s1300] sm:$0xff]
        %v1560 = vld [vmem:[%s1300 + $0x8] sm:$0x3]
        %v1561 = vld [vmem:[%s1300 + $0x10] sm:$0xff]
        %v1562 = vld [vmem:[%s1300 + $0x18] sm:$0x3]
        %v1563 = vld [vmem:[%s1300 + $0x20] sm:$0xff]
        %v1564 = vld [vmem:[%s1300 + $0x28] sm:$0x3]
        %v1565 = vld [vmem:[%s1300 + $0x30] sm:$0xff]
        %v1566 = vld [vmem:[%s1300 + $0x38] sm:$0x3]
        %v1567 = vld [vmem:[%s1300 + $0x40] sm:$0xff]
        %v1568 = vld [vmem:[%s1300 + $0x48] sm:$0x3]
        %v1569 = vld [vmem:[%s1300 + $0x50] sm:$0xff]
        %v1570 = vld [vmem:[%s1300 + $0x58] sm:$0x3]
        %v1571 = vld [vmem:[%s1300 + $0x60] sm:$0xff]
        %v1572 = vld [vmem:[%s1300 + $0x68] sm:$0x3]
        %v1573 = vld [vmem:[%s1300 + $0x70] sm:$0xff]
        %v1574 = vld [vmem:[%s1300 + $0x78] sm:$0x3]
        %v1575 = vld [vmem:[%s1300 + $0xa0] sm:$0xff]
        %v1576 = vld [vmem:[%s1300 + $0xa8] sm:$0x3]
        %v1577 = vld [vmem:[%s1300 + $0xb0] sm:$0xff]
        %v1578 = vld [vmem:[%s1300 + $0xb8] sm:$0x3]
        %v1579 = vld [vmem:[%s1300 + $0xc0] sm:$0xff]
        %v1580 = vld [vmem:[%s1300 + $0xc8] sm:$0x3]
        %v1581 = vld [vmem:[%s1300 + $0xd0] sm:$0xff]
        %v1582 = vld [vmem:[%s1300 + $0xd8] sm:$0x3]
        %v1583 = vld [vmem:[%s1300 + $0xe0] sm:$0xff]
        %v1584 = vld [vmem:[%s1300 + $0xe8] sm:$0x3]
        %v1585 = vld [vmem:[%s1300 + $0xf0] sm:$0xff]
        %v1586 = vld [vmem:[%s1300 + $0xf8] sm:$0x3]
        %v1587 = vld [vmem:[%s1300 + $0x100] sm:$0xff]
        %v1588 = vld [vmem:[%s1300 + $0x108] sm:$0x3]
        %v1589 = vld [vmem:[%s1300 + $0x110] sm:$0xff]
        %v1590 = vld [vmem:[%s1300 + $0x118] sm:$0x3]
        %1591 = vst [vmem:[#allocation3 + $0x18] sm:$0xff] %v1559
        %1592 = vst [vmem:[#allocation3 + $0x60] sm:$0xff] %v1561
        %1593 = vst [vmem:[#allocation3 + $0xa8] sm:$0xff] %v1563
        %1594 = vst [vmem:[#allocation3 + $0xf0] sm:$0xff] %v1565
        %1595 = vst [vmem:[#allocation3 + $0x138] sm:$0xff] %v1567
        %1596 = vst [vmem:[#allocation3 + $0x180] sm:$0xff] %v1569
        %1597 = vst [vmem:[#allocation3 + $0x1c8] sm:$0xff] %v1571
        %1598 = vst [vmem:[#allocation3 + $0x210] sm:$0xff] %v1573
        %1599 = vst [vmem:[#allocation3 + $0x258] sm:$0xff] %v1575
        %1600 = vst [vmem:[#allocation3 + $0x2a0] sm:$0xff] %v1577
        %1601 = vst [vmem:[#allocation3 + $0x2e8] sm:$0xff] %v1579
        %1602 = vst [vmem:[#allocation3 + $0x330] sm:$0xff] %v1581
        %1603 = vst [vmem:[#allocation3 + $0x378] sm:$0xff] %v1583
        %1604 = vst [vmem:[#allocation3 + $0x3c0] sm:$0xff] %v1585
        %1605 = vst [vmem:[#allocation3 + $0x408] sm:$0xff] %v1587
        %1606 = vst [vmem:[#allocation3 + $0x450] sm:$0xff] %v1589
        %v1639 = vrot.slane %v1559, 1
        %v1640 = vrot.slane %v1560, 1
        %v1641 = vsel %vm1397, %v1639, %v1640
        %v1642 = vrot.slane %v1561, 1
        %v1643 = vrot.slane %v1562, 1
        %v1644 = vsel %vm1397, %v1642, %v1643
        %v1645 = vrot.slane %v1563, 1
        %v1646 = vrot.slane %v1564, 1
        %v1647 = vsel %vm1397, %v1645, %v1646
        %v1648 = vrot.slane %v1565, 1
        %v1649 = vrot.slane %v1566, 1
        %v1650 = vsel %vm1397, %v1648, %v1649
        %v1651 = vrot.slane %v1567, 1
        %v1652 = vrot.slane %v1568, 1
        %v1653 = vsel %vm1397, %v1651, %v1652
        %v1654 = vrot.slane %v1569, 1
        %v1655 = vrot.slane %v1570, 1
        %v1656 = vsel %vm1397, %v1654, %v1655
        %v1657 = vrot.slane %v1571, 1
        %v1658 = vrot.slane %v1572, 1
        %v1659 = vsel %vm1397, %v1657, %v1658
        %v1660 = vrot.slane %v1573, 1
        %v1661 = vrot.slane %v1574, 1
        %v1662 = vsel %vm1397, %v1660, %v1661
        %v1663 = vrot.slane %v1575, 1
        %v1664 = vrot.slane %v1576, 1
        %v1665 = vsel %vm1397, %v1663, %v1664
        %v1666 = vrot.slane %v1577, 1
        %v1667 = vrot.slane %v1578, 1
        %v1668 = vsel %vm1397, %v1666, %v1667
        %v1669 = vrot.slane %v1579, 1
        %v1670 = vrot.slane %v1580, 1
        %v1671 = vsel %vm1397, %v1669, %v1670
        %v1672 = vrot.slane %v1581, 1
        %v1673 = vrot.slane %v1582, 1
        %v1674 = vsel %vm1397, %v1672, %v1673
        %v1675 = vrot.slane %v1583, 1
        %v1676 = vrot.slane %v1584, 1
        %v1677 = vsel %vm1397, %v1675, %v1676
        %v1678 = vrot.slane %v1585, 1
        %v1679 = vrot.slane %v1586, 1
        %v1680 = vsel %vm1397, %v1678, %v1679
        %v1681 = vrot.slane %v1587, 1
        %v1682 = vrot.slane %v1588, 1
        %v1683 = vsel %vm1397, %v1681, %v1682
        %v1684 = vrot.slane %v1589, 1
        %v1685 = vrot.slane %v1590, 1
        %v1686 = vsel %vm1397, %v1684, %v1685
        %1703 = vst [vmem:[#allocation3 + $0x20] sm:$0xff] %v1641
        %1704 = vst [vmem:[#allocation3 + $0x68] sm:$0xff] %v1644
        %1705 = vst [vmem:[#allocation3 + $0xb0] sm:$0xff] %v1647
        %1706 = vst [vmem:[#allocation3 + $0xf8] sm:$0xff] %v1650
        %1707 = vst [vmem:[#allocation3 + $0x140] sm:$0xff] %v1653
        %1708 = vst [vmem:[#allocation3 + $0x188] sm:$0xff] %v1656
        %1709 = vst [vmem:[#allocation3 + $0x1d0] sm:$0xff] %v1659
        %1710 = vst [vmem:[#allocation3 + $0x218] sm:$0xff] %v1662
        %1711 = vst [vmem:[#allocation3 + $0x260] sm:$0xff] %v1665
        %1712 = vst [vmem:[#allocation3 + $0x2a8] sm:$0xff] %v1668
        %1713 = vst [vmem:[#allocation3 + $0x2f0] sm:$0xff] %v1671
        %1714 = vst [vmem:[#allocation3 + $0x338] sm:$0xff] %v1674
        %1715 = vst [vmem:[#allocation3 + $0x380] sm:$0xff] %v1677
        %1716 = vst [vmem:[#allocation3 + $0x3c8] sm:$0xff] %v1680
        %1717 = vst [vmem:[#allocation3 + $0x410] sm:$0xff] %v1683
        %1718 = vst [vmem:[#allocation3 + $0x458] sm:$0xff] %v1686
        %v1719 = vrot.slane %v1559, 2
        %v1720 = vrot.slane %v1560, 2
        %v1721 = vsel %vm1478, %v1719, %v1720
        %v1722 = vrot.slane %v1561, 2
        %v1723 = vrot.slane %v1562, 2
        %v1724 = vsel %vm1478, %v1722, %v1723
        %v1725 = vrot.slane %v1563, 2
        %v1726 = vrot.slane %v1564, 2
        %v1727 = vsel %vm1478, %v1725, %v1726
        %v1728 = vrot.slane %v1565, 2
        %v1729 = vrot.slane %v1566, 2
        %v1730 = vsel %vm1478, %v1728, %v1729
        %v1731 = vrot.slane %v1567, 2
        %v1732 = vrot.slane %v1568, 2
        %v1733 = vsel %vm1478, %v1731, %v1732
        %v1734 = vrot.slane %v1569, 2
        %v1735 = vrot.slane %v1570, 2
        %v1736 = vsel %vm1478, %v1734, %v1735
        %v1737 = vrot.slane %v1571, 2
        %v1738 = vrot.slane %v1572, 2
        %v1739 = vsel %vm1478, %v1737, %v1738
        %v1740 = vrot.slane %v1573, 2
        %v1741 = vrot.slane %v1574, 2
        %v1742 = vsel %vm1478, %v1740, %v1741
        %v1743 = vrot.slane %v1575, 2
        %v1744 = vrot.slane %v1576, 2
        %v1745 = vsel %vm1478, %v1743, %v1744
        %v1746 = vrot.slane %v1577, 2
        %v1747 = vrot.slane %v1578, 2
        %v1748 = vsel %vm1478, %v1746, %v1747
        %v1749 = vrot.slane %v1579, 2
        %v1750 = vrot.slane %v1580, 2
        %v1751 = vsel %vm1478, %v1749, %v1750
        %v1752 = vrot.slane %v1581, 2
        %v1753 = vrot.slane %v1582, 2
        %v1754 = vsel %vm1478, %v1752, %v1753
        %v1755 = vrot.slane %v1583, 2
        %v1756 = vrot.slane %v1584, 2
        %v1757 = vsel %vm1478, %v1755, %v1756
        %v1758 = vrot.slane %v1585, 2
        %v1759 = vrot.slane %v1586, 2
        %v1760 = vsel %vm1478, %v1758, %v1759
        %v1761 = vrot.slane %v1587, 2
        %v1762 = vrot.slane %v1588, 2
        %v1763 = vsel %vm1478, %v1761, %v1762
        %v1764 = vrot.slane %v1589, 2
        %v1765 = vrot.slane %v1590, 2
        %v1766 = vsel %vm1478, %v1764, %v1765
        %1783 = vst [vmem:[#allocation3 + $0x28] sm:$0xff] %v1721
        %1784 = vst [vmem:[#allocation3 + $0x70] sm:$0xff] %v1724
        %1785 = vst [vmem:[#allocation3 + $0xb8] sm:$0xff] %v1727
        %1786 = vst [vmem:[#allocation3 + $0x100] sm:$0xff] %v1730
        %1787 = vst [vmem:[#allocation3 + $0x148] sm:$0xff] %v1733
        %1788 = vst [vmem:[#allocation3 + $0x190] sm:$0xff] %v1736
        %1789 = vst [vmem:[#allocation3 + $0x1d8] sm:$0xff] %v1739
        %1790 = vst [vmem:[#allocation3 + $0x220] sm:$0xff] %v1742
        %1791 = vst [vmem:[#allocation3 + $0x268] sm:$0xff] %v1745
        %1792 = vst [vmem:[#allocation3 + $0x2b0] sm:$0xff] %v1748
        %1793 = vst [vmem:[#allocation3 + $0x2f8] sm:$0xff] %v1751
        %1794 = vst [vmem:[#allocation3 + $0x340] sm:$0xff] %v1754
        %1795 = vst [vmem:[#allocation3 + $0x388] sm:$0xff] %v1757
        %1796 = vst [vmem:[#allocation3 + $0x3d0] sm:$0xff] %v1760
        %1797 = vst [vmem:[#allocation3 + $0x418] sm:$0xff] %v1763
        %1798 = vst [vmem:[#allocation3 + $0x460] sm:$0xff] %v1766
        %s1799 = scalar_lea.vmem [#allocation2], 32
        %v1800 = vld [vmem:[%s1799] sm:$0xff]
        %v1801 = vld [vmem:[%s1799 + $0x8] sm:$0x3]
        %v1802 = vld [vmem:[%s1799 + $0x10] sm:$0xff]
        %v1803 = vld [vmem:[%s1799 + $0x18] sm:$0x3]
        %v1804 = vld [vmem:[%s1799 + $0x20] sm:$0xff]
        %v1805 = vld [vmem:[%s1799 + $0x28] sm:$0x3]
        %v1806 = vld [vmem:[%s1799 + $0x30] sm:$0xff]
        %v1807 = vld [vmem:[%s1799 + $0x38] sm:$0x3]
        %v1808 = vld [vmem:[%s1799 + $0x40] sm:$0xff]
        %v1809 = vld [vmem:[%s1799 + $0x48] sm:$0x3]
        %v1810 = vld [vmem:[%s1799 + $0x50] sm:$0xff]
        %v1811 = vld [vmem:[%s1799 + $0x58] sm:$0x3]
        %v1812 = vld [vmem:[%s1799 + $0x60] sm:$0xff]
        %v1813 = vld [vmem:[%s1799 + $0x68] sm:$0x3]
        %v1814 = vld [vmem:[%s1799 + $0x70] sm:$0xff]
        %v1815 = vld [vmem:[%s1799 + $0x78] sm:$0x3]
        %v1816 = vld [vmem:[%s1799 + $0xa0] sm:$0xff]
        %v1817 = vld [vmem:[%s1799 + $0xa8] sm:$0x3]
        %v1818 = vld [vmem:[%s1799 + $0xb0] sm:$0xff]
        %v1819 = vld [vmem:[%s1799 + $0xb8] sm:$0x3]
        %v1820 = vld [vmem:[%s1799 + $0xc0] sm:$0xff]
        %v1821 = vld [vmem:[%s1799 + $0xc8] sm:$0x3]
        %v1822 = vld [vmem:[%s1799 + $0xd0] sm:$0xff]
        %v1823 = vld [vmem:[%s1799 + $0xd8] sm:$0x3]
        %v1824 = vld [vmem:[%s1799 + $0xe0] sm:$0xff]
        %v1825 = vld [vmem:[%s1799 + $0xe8] sm:$0x3]
        %v1826 = vld [vmem:[%s1799 + $0xf0] sm:$0xff]
        %v1827 = vld [vmem:[%s1799 + $0xf8] sm:$0x3]
        %v1828 = vld [vmem:[%s1799 + $0x100] sm:$0xff]
        %v1829 = vld [vmem:[%s1799 + $0x108] sm:$0x3]
        %v1830 = vld [vmem:[%s1799 + $0x110] sm:$0xff]
        %v1831 = vld [vmem:[%s1799 + $0x118] sm:$0x3]
        %1832 = vst [vmem:[#allocation3 + $0x30] sm:$0xff] %v1800
        %1833 = vst [vmem:[#allocation3 + $0x78] sm:$0xff] %v1802
        %1834 = vst [vmem:[#allocation3 + $0xc0] sm:$0xff] %v1804
        %1835 = vst [vmem:[#allocation3 + $0x108] sm:$0xff] %v1806
        %1836 = vst [vmem:[#allocation3 + $0x150] sm:$0xff] %v1808
        %1837 = vst [vmem:[#allocation3 + $0x198] sm:$0xff] %v1810
        %1838 = vst [vmem:[#allocation3 + $0x1e0] sm:$0xff] %v1812
        %1839 = vst [vmem:[#allocation3 + $0x228] sm:$0xff] %v1814
        %1840 = vst [vmem:[#allocation3 + $0x270] sm:$0xff] %v1816
        %1841 = vst [vmem:[#allocation3 + $0x2b8] sm:$0xff] %v1818
        %1842 = vst [vmem:[#allocation3 + $0x300] sm:$0xff] %v1820
        %1843 = vst [vmem:[#allocation3 + $0x348] sm:$0xff] %v1822
        %1844 = vst [vmem:[#allocation3 + $0x390] sm:$0xff] %v1824
        %1845 = vst [vmem:[#allocation3 + $0x3d8] sm:$0xff] %v1826
        %1846 = vst [vmem:[#allocation3 + $0x420] sm:$0xff] %v1828
        %1847 = vst [vmem:[#allocation3 + $0x468] sm:$0xff] %v1830
        %v1880 = vrot.slane %v1800, 1
        %v1881 = vrot.slane %v1801, 1
        %v1882 = vsel %vm1397, %v1880, %v1881
        %v1883 = vrot.slane %v1802, 1
        %v1884 = vrot.slane %v1803, 1
        %v1885 = vsel %vm1397, %v1883, %v1884
        %v1886 = vrot.slane %v1804, 1
        %v1887 = vrot.slane %v1805, 1
        %v1888 = vsel %vm1397, %v1886, %v1887
        %v1889 = vrot.slane %v1806, 1
        %v1890 = vrot.slane %v1807, 1
        %v1891 = vsel %vm1397, %v1889, %v1890
        %v1892 = vrot.slane %v1808, 1
        %v1893 = vrot.slane %v1809, 1
        %v1894 = vsel %vm1397, %v1892, %v1893
        %v1895 = vrot.slane %v1810, 1
        %v1896 = vrot.slane %v1811, 1
        %v1897 = vsel %vm1397, %v1895, %v1896
        %v1898 = vrot.slane %v1812, 1
        %v1899 = vrot.slane %v1813, 1
        %v1900 = vsel %vm1397, %v1898, %v1899
        %v1901 = vrot.slane %v1814, 1
        %v1902 = vrot.slane %v1815, 1
        %v1903 = vsel %vm1397, %v1901, %v1902
        %v1904 = vrot.slane %v1816, 1
        %v1905 = vrot.slane %v1817, 1
        %v1906 = vsel %vm1397, %v1904, %v1905
        %v1907 = vrot.slane %v1818, 1
        %v1908 = vrot.slane %v1819, 1
        %v1909 = vsel %vm1397, %v1907, %v1908
        %v1910 = vrot.slane %v1820, 1
        %v1911 = vrot.slane %v1821, 1
        %v1912 = vsel %vm1397, %v1910, %v1911
        %v1913 = vrot.slane %v1822, 1
        %v1914 = vrot.slane %v1823, 1
        %v1915 = vsel %vm1397, %v1913, %v1914
        %v1916 = vrot.slane %v1824, 1
        %v1917 = vrot.slane %v1825, 1
        %v1918 = vsel %vm1397, %v1916, %v1917
        %v1919 = vrot.slane %v1826, 1
        %v1920 = vrot.slane %v1827, 1
        %v1921 = vsel %vm1397, %v1919, %v1920
        %v1922 = vrot.slane %v1828, 1
        %v1923 = vrot.slane %v1829, 1
        %v1924 = vsel %vm1397, %v1922, %v1923
        %v1925 = vrot.slane %v1830, 1
        %v1926 = vrot.slane %v1831, 1
        %v1927 = vsel %vm1397, %v1925, %v1926
        %1944 = vst [vmem:[#allocation3 + $0x38] sm:$0xff] %v1882
        %1945 = vst [vmem:[#allocation3 + $0x80] sm:$0xff] %v1885
        %1946 = vst [vmem:[#allocation3 + $0xc8] sm:$0xff] %v1888
        %1947 = vst [vmem:[#allocation3 + $0x110] sm:$0xff] %v1891
        %1948 = vst [vmem:[#allocation3 + $0x158] sm:$0xff] %v1894
        %1949 = vst [vmem:[#allocation3 + $0x1a0] sm:$0xff] %v1897
        %1950 = vst [vmem:[#allocation3 + $0x1e8] sm:$0xff] %v1900
        %1951 = vst [vmem:[#allocation3 + $0x230] sm:$0xff] %v1903
        %1952 = vst [vmem:[#allocation3 + $0x278] sm:$0xff] %v1906
        %1953 = vst [vmem:[#allocation3 + $0x2c0] sm:$0xff] %v1909
        %1954 = vst [vmem:[#allocation3 + $0x308] sm:$0xff] %v1912
        %1955 = vst [vmem:[#allocation3 + $0x350] sm:$0xff] %v1915
        %1956 = vst [vmem:[#allocation3 + $0x398] sm:$0xff] %v1918
        %1957 = vst [vmem:[#allocation3 + $0x3e0] sm:$0xff] %v1921
        %1958 = vst [vmem:[#allocation3 + $0x428] sm:$0xff] %v1924
        %1959 = vst [vmem:[#allocation3 + $0x470] sm:$0xff] %v1927
        %v1960 = vrot.slane %v1800, 2
        %v1961 = vrot.slane %v1801, 2
        %v1962 = vsel %vm1478, %v1960, %v1961
        %v1963 = vrot.slane %v1802, 2
        %v1964 = vrot.slane %v1803, 2
        %v1965 = vsel %vm1478, %v1963, %v1964
        %v1966 = vrot.slane %v1804, 2
        %v1967 = vrot.slane %v1805, 2
        %v1968 = vsel %vm1478, %v1966, %v1967
        %v1969 = vrot.slane %v1806, 2
        %v1970 = vrot.slane %v1807, 2
        %v1971 = vsel %vm1478, %v1969, %v1970
        %v1972 = vrot.slane %v1808, 2
        %v1973 = vrot.slane %v1809, 2
        %v1974 = vsel %vm1478, %v1972, %v1973
        %v1975 = vrot.slane %v1810, 2
        %v1976 = vrot.slane %v1811, 2
        %v1977 = vsel %vm1478, %v1975, %v1976
        %v1978 = vrot.slane %v1812, 2
        %v1979 = vrot.slane %v1813, 2
        %v1980 = vsel %vm1478, %v1978, %v1979
        %v1981 = vrot.slane %v1814, 2
        %v1982 = vrot.slane %v1815, 2
        %v1983 = vsel %vm1478, %v1981, %v1982
        %v1984 = vrot.slane %v1816, 2
        %v1985 = vrot.slane %v1817, 2
        %v1986 = vsel %vm1478, %v1984, %v1985
        %v1987 = vrot.slane %v1818, 2
        %v1988 = vrot.slane %v1819, 2
        %v1989 = vsel %vm1478, %v1987, %v1988
        %v1990 = vrot.slane %v1820, 2
        %v1991 = vrot.slane %v1821, 2
        %v1992 = vsel %vm1478, %v1990, %v1991
        %v1993 = vrot.slane %v1822, 2
        %v1994 = vrot.slane %v1823, 2
        %v1995 = vsel %vm1478, %v1993, %v1994
        %v1996 = vrot.slane %v1824, 2
        %v1997 = vrot.slane %v1825, 2
        %v1998 = vsel %vm1478, %v1996, %v1997
        %v1999 = vrot.slane %v1826, 2
        %v2000 = vrot.slane %v1827, 2
        %v2001 = vsel %vm1478, %v1999, %v2000
        %v2002 = vrot.slane %v1828, 2
        %v2003 = vrot.slane %v1829, 2
        %v2004 = vsel %vm1478, %v2002, %v2003
        %v2005 = vrot.slane %v1830, 2
        %v2006 = vrot.slane %v1831, 2
        %v2007 = vsel %vm1478, %v2005, %v2006
        %2024 = vst [vmem:[#allocation3 + $0x40] sm:$0xff] %v1962
        %2025 = vst [vmem:[#allocation3 + $0x88] sm:$0xff] %v1965
        %2026 = vst [vmem:[#allocation3 + $0xd0] sm:$0xff] %v1968
        %2027 = vst [vmem:[#allocation3 + $0x118] sm:$0xff] %v1971
        %2028 = vst [vmem:[#allocation3 + $0x160] sm:$0xff] %v1974
        %2029 = vst [vmem:[#allocation3 + $0x1a8] sm:$0xff] %v1977
        %2030 = vst [vmem:[#allocation3 + $0x1f0] sm:$0xff] %v1980
        %2031 = vst [vmem:[#allocation3 + $0x238] sm:$0xff] %v1983
        %2032 = vst [vmem:[#allocation3 + $0x280] sm:$0xff] %v1986
        %2033 = vst [vmem:[#allocation3 + $0x2c8] sm:$0xff] %v1989
        %2034 = vst [vmem:[#allocation3 + $0x310] sm:$0xff] %v1992
        %2035 = vst [vmem:[#allocation3 + $0x358] sm:$0xff] %v1995
        %2036 = vst [vmem:[#allocation3 + $0x3a0] sm:$0xff] %v1998
        %2037 = vst [vmem:[#allocation3 + $0x3e8] sm:$0xff] %v2001
        %2038 = vst [vmem:[#allocation3 + $0x430] sm:$0xff] %v2004
        %2039 = vst [vmem:[#allocation3 + $0x478] sm:$0xff] %v2007
        %v2040 = vld [vmem:[#allocation3] sm:$0xff]
        %v2041 = vld [vmem:[#allocation3 + $0x8] sm:$0xff]
        %v2042 = vld [vmem:[#allocation3 + $0x10] sm:$0xff]
        %v2043 = vld [vmem:[#allocation3 + $0x18] sm:$0xff]
        %v2044 = vld [vmem:[#allocation3 + $0x20] sm:$0xff]
        %v2045 = vld [vmem:[#allocation3 + $0x28] sm:$0xff]
        %v2046 = vld [vmem:[#allocation3 + $0x30] sm:$0xff]
        %v2047 = vld [vmem:[#allocation3 + $0x38] sm:$0xff]
        %v2048 = vld [vmem:[#allocation3 + $0x40] sm:$0xff]
        %v2049 = vld [vmem:[#allocation3 + $0x48] sm:$0xff]
        %v2050 = vld [vmem:[#allocation3 + $0x50] sm:$0xff]
        %v2051 = vld [vmem:[#allocation3 + $0x58] sm:$0xff]
        %v2052 = vld [vmem:[#allocation3 + $0x60] sm:$0xff]
        %v2053 = vld [vmem:[#allocation3 + $0x68] sm:$0xff]
        %v2054 = vld [vmem:[#allocation3 + $0x70] sm:$0xff]
        %v2055 = vld [vmem:[#allocation3 + $0x78] sm:$0xff]
        %v2056 = vld [vmem:[#allocation3 + $0x80] sm:$0xff]
        %v2057 = vld [vmem:[#allocation3 + $0x88] sm:$0xff]
        %v2058 = vld [vmem:[#allocation3 + $0x90] sm:$0xff]
        %v2059 = vld [vmem:[#allocation3 + $0x98] sm:$0xff]
        %v2060 = vld [vmem:[#allocation3 + $0xa0] sm:$0xff]
        %v2061 = vld [vmem:[#allocation3 + $0xa8] sm:$0xff]
        %v2062 = vld [vmem:[#allocation3 + $0xb0] sm:$0xff]
        %v2063 = vld [vmem:[#allocation3 + $0xb8] sm:$0xff]
        %v2064 = vld [vmem:[#allocation3 + $0xc0] sm:$0xff]
        %v2065 = vld [vmem:[#allocation3 + $0xc8] sm:$0xff]
        %v2066 = vld [vmem:[#allocation3 + $0xd0] sm:$0xff]
        %v2067 = vld [vmem:[#allocation3 + $0xd8] sm:$0xff]
        %v2068 = vld [vmem:[#allocation3 + $0xe0] sm:$0xff]
        %v2069 = vld [vmem:[#allocation3 + $0xe8] sm:$0xff]
        %v2070 = vld [vmem:[#allocation3 + $0xf0] sm:$0xff]
        %v2071 = vld [vmem:[#allocation3 + $0xf8] sm:$0xff]
        %v2072 = vld [vmem:[#allocation3 + $0x100] sm:$0xff]
        %v2073 = vld [vmem:[#allocation3 + $0x108] sm:$0xff]
        %v2074 = vld [vmem:[#allocation3 + $0x110] sm:$0xff]
        %v2075 = vld [vmem:[#allocation3 + $0x118] sm:$0xff]
        %v2076 = vld [vmem:[#allocation3 + $0x120] sm:$0xff]
        %v2077 = vld [vmem:[#allocation3 + $0x128] sm:$0xff]
        %v2078 = vld [vmem:[#allocation3 + $0x130] sm:$0xff]
        %v2079 = vld [vmem:[#allocation3 + $0x138] sm:$0xff]
        %v2080 = vld [vmem:[#allocation3 + $0x140] sm:$0xff]
        %v2081 = vld [vmem:[#allocation3 + $0x148] sm:$0xff]
        %v2082 = vld [vmem:[#allocation3 + $0x150] sm:$0xff]
        %v2083 = vld [vmem:[#allocation3 + $0x158] sm:$0xff]
        %v2084 = vld [vmem:[#allocation3 + $0x160] sm:$0xff]
        %v2085 = vld [vmem:[#allocation3 + $0x168] sm:$0xff]
        %v2086 = vld [vmem:[#allocation3 + $0x170] sm:$0xff]
        %v2087 = vld [vmem:[#allocation3 + $0x178] sm:$0xff]
        %v2088 = vld [vmem:[#allocation3 + $0x180] sm:$0xff]
        %v2089 = vld [vmem:[#allocation3 + $0x188] sm:$0xff]
        %v2090 = vld [vmem:[#allocation3 + $0x190] sm:$0xff]
        %v2091 = vld [vmem:[#allocation3 + $0x198] sm:$0xff]
        %v2092 = vld [vmem:[#allocation3 + $0x1a0] sm:$0xff]
        %v2093 = vld [vmem:[#allocation3 + $0x1a8] sm:$0xff]
        %v2094 = vld [vmem:[#allocation3 + $0x1b0] sm:$0xff]
        %v2095 = vld [vmem:[#allocation3 + $0x1b8] sm:$0xff]
        %v2096 = vld [vmem:[#allocation3 + $0x1c0] sm:$0xff]
        %v2097 = vld [vmem:[#allocation3 + $0x1c8] sm:$0xff]
        %v2098 = vld [vmem:[#allocation3 + $0x1d0] sm:$0xff]
        %v2099 = vld [vmem:[#allocation3 + $0x1d8] sm:$0xff]
        %v2100 = vld [vmem:[#allocation3 + $0x1e0] sm:$0xff]
        %v2101 = vld [vmem:[#allocation3 + $0x1e8] sm:$0xff]
        %v2102 = vld [vmem:[#allocation3 + $0x1f0] sm:$0xff]
        %v2103 = vld [vmem:[#allocation3 + $0x1f8] sm:$0xff]
        %v2104 = vld [vmem:[#allocation3 + $0x200] sm:$0xff]
        %v2105 = vld [vmem:[#allocation3 + $0x208] sm:$0xff]
        %v2106 = vld [vmem:[#allocation3 + $0x210] sm:$0xff]
        %v2107 = vld [vmem:[#allocation3 + $0x218] sm:$0xff]
        %v2108 = vld [vmem:[#allocation3 + $0x220] sm:$0xff]
        %v2109 = vld [vmem:[#allocation3 + $0x228] sm:$0xff]
        %v2110 = vld [vmem:[#allocation3 + $0x230] sm:$0xff]
        %v2111 = vld [vmem:[#allocation3 + $0x238] sm:$0xff]
        %v2112 = vld [vmem:[#allocation3 + $0x240] sm:$0xff]
        %v2113 = vld [vmem:[#allocation3 + $0x248] sm:$0xff]
        %v2114 = vld [vmem:[#allocation3 + $0x250] sm:$0xff]
        %v2115 = vld [vmem:[#allocation3 + $0x258] sm:$0xff]
        %v2116 = vld [vmem:[#allocation3 + $0x260] sm:$0xff]
        %v2117 = vld [vmem:[#allocation3 + $0x268] sm:$0xff]
        %v2118 = vld [vmem:[#allocation3 + $0x270] sm:$0xff]
        %v2119 = vld [vmem:[#allocation3 + $0x278] sm:$0xff]
        %v2120 = vld [vmem:[#allocation3 + $0x280] sm:$0xff]
        %v2121 = vld [vmem:[#allocation3 + $0x288] sm:$0xff]
        %v2122 = vld [vmem:[#allocation3 + $0x290] sm:$0xff]
        %v2123 = vld [vmem:[#allocation3 + $0x298] sm:$0xff]
        %v2124 = vld [vmem:[#allocation3 + $0x2a0] sm:$0xff]
        %v2125 = vld [vmem:[#allocation3 + $0x2a8] sm:$0xff]
        %v2126 = vld [vmem:[#allocation3 + $0x2b0] sm:$0xff]
        %v2127 = vld [vmem:[#allocation3 + $0x2b8] sm:$0xff]
        %v2128 = vld [vmem:[#allocation3 + $0x2c0] sm:$0xff]
        %v2129 = vld [vmem:[#allocation3 + $0x2c8] sm:$0xff]
        %v2130 = vld [vmem:[#allocation3 + $0x2d0] sm:$0xff]
        %v2131 = vld [vmem:[#allocation3 + $0x2d8] sm:$0xff]
        %v2132 = vld [vmem:[#allocation3 + $0x2e0] sm:$0xff]
        %v2133 = vld [vmem:[#allocation3 + $0x2e8] sm:$0xff]
        %v2134 = vld [vmem:[#allocation3 + $0x2f0] sm:$0xff]
        %v2135 = vld [vmem:[#allocation3 + $0x2f8] sm:$0xff]
        %v2136 = vld [vmem:[#allocation3 + $0x300] sm:$0xff]
        %v2137 = vld [vmem:[#allocation3 + $0x308] sm:$0xff]
        %v2138 = vld [vmem:[#allocation3 + $0x310] sm:$0xff]
        %v2139 = vld [vmem:[#allocation3 + $0x318] sm:$0xff]
        %v2140 = vld [vmem:[#allocation3 + $0x320] sm:$0xff]
        %v2141 = vld [vmem:[#allocation3 + $0x328] sm:$0xff]
        %v2142 = vld [vmem:[#allocation3 + $0x330] sm:$0xff]
        %v2143 = vld [vmem:[#allocation3 + $0x338] sm:$0xff]
        %v2144 = vld [vmem:[#allocation3 + $0x340] sm:$0xff]
        %v2145 = vld [vmem:[#allocation3 + $0x348] sm:$0xff]
        %v2146 = vld [vmem:[#allocation3 + $0x350] sm:$0xff]
        %v2147 = vld [vmem:[#allocation3 + $0x358] sm:$0xff]
        %v2148 = vld [vmem:[#allocation3 + $0x360] sm:$0xff]
        %v2149 = vld [vmem:[#allocation3 + $0x368] sm:$0xff]
        %v2150 = vld [vmem:[#allocation3 + $0x370] sm:$0xff]
        %v2151 = vld [vmem:[#allocation3 + $0x378] sm:$0xff]
        %v2152 = vld [vmem:[#allocation3 + $0x380] sm:$0xff]
        %v2153 = vld [vmem:[#allocation3 + $0x388] sm:$0xff]
        %v2154 = vld [vmem:[#allocation3 + $0x390] sm:$0xff]
        %v2155 = vld [vmem:[#allocation3 + $0x398] sm:$0xff]
        %v2156 = vld [vmem:[#allocation3 + $0x3a0] sm:$0xff]
        %v2157 = vld [vmem:[#allocation3 + $0x3a8] sm:$0xff]
        %v2158 = vld [vmem:[#allocation3 + $0x3b0] sm:$0xff]
        %v2159 = vld [vmem:[#allocation3 + $0x3b8] sm:$0xff]
        %v2160 = vld [vmem:[#allocation3 + $0x3c0] sm:$0xff]
        %v2161 = vld [vmem:[#allocation3 + $0x3c8] sm:$0xff]
        %v2162 = vld [vmem:[#allocation3 + $0x3d0] sm:$0xff]
        %v2163 = vld [vmem:[#allocation3 + $0x3d8] sm:$0xff]
        %v2164 = vld [vmem:[#allocation3 + $0x3e0] sm:$0xff]
        %v2165 = vld [vmem:[#allocation3 + $0x3e8] sm:$0xff]
        %v2166 = vld [vmem:[#allocation3 + $0x3f0] sm:$0xff]
        %v2167 = vld [vmem:[#allocation3 + $0x3f8] sm:$0xff]
        %v2168 = vld [vmem:[#allocation3 + $0x400] sm:$0xff]
        %v2169 = vld [vmem:[#allocation3 + $0x408] sm:$0xff]
        %v2170 = vld [vmem:[#allocation3 + $0x410] sm:$0xff]
        %v2171 = vld [vmem:[#allocation3 + $0x418] sm:$0xff]
        %v2172 = vld [vmem:[#allocation3 + $0x420] sm:$0xff]
        %v2173 = vld [vmem:[#allocation3 + $0x428] sm:$0xff]
        %v2174 = vld [vmem:[#allocation3 + $0x430] sm:$0xff]
        %v2175 = vld [vmem:[#allocation3 + $0x438] sm:$0xff]
        %v2176 = vld [vmem:[#allocation3 + $0x440] sm:$0xff]
        %v2177 = vld [vmem:[#allocation3 + $0x448] sm:$0xff]
        %v2178 = vld [vmem:[#allocation3 + $0x450] sm:$0xff]
        %v2179 = vld [vmem:[#allocation3 + $0x458] sm:$0xff]
        %v2180 = vld [vmem:[#allocation3 + $0x460] sm:$0xff]
        %v2181 = vld [vmem:[#allocation3 + $0x468] sm:$0xff]
        %v2182 = vld [vmem:[#allocation3 + $0x470] sm:$0xff]
        %v2183 = vld [vmem:[#allocation3 + $0x478] sm:$0xff]
        %v2184 = vld [vmem:[%s4] sm:$0xff]
        %v2185 = vld [vmem:[%s4 + $0x8] sm:$0xff]
        %v2186 = vld [vmem:[%s4 + $0x10] sm:$0xff]
        %v2187 = vld [vmem:[%s4 + $0x18] sm:$0xff]
        %v2188 = vld [vmem:[%s4 + $0x20] sm:$0xff]
        %v2189 = vld [vmem:[%s4 + $0x28] sm:$0xff]
        %v2190 = vld [vmem:[%s4 + $0x30] sm:$0xff]
        %v2191 = vld [vmem:[%s4 + $0x38] sm:$0xff]
        %v2192 = vld [vmem:[%s4 + $0x40] sm:$0xff]
        %v2193 = vld [vmem:[%s4 + $0x48] sm:$0xff]
        %v2194 = vld [vmem:[%s4 + $0x50] sm:$0xff]
        %v2195 = vld [vmem:[%s4 + $0x58] sm:$0xff]
        %v2196 = vld [vmem:[%s4 + $0x60] sm:$0xff]
        %v2197 = vld [vmem:[%s4 + $0x68] sm:$0xff]
        %v2198 = vld [vmem:[%s4 + $0x70] sm:$0xff]
        %v2199 = vld [vmem:[%s4 + $0x78] sm:$0xff]
        %v2200 = vld [vmem:[%s4 + $0x80] sm:$0xff]
        %v2201 = vld [vmem:[%s4 + $0x88] sm:$0xff]
        %v2202 = vld [vmem:[%s4 + $0x90] sm:$0xff]
        %v2203 = vld [vmem:[%s4 + $0x98] sm:$0xff]
        %v2204 = vld [vmem:[%s4 + $0xa0] sm:$0xff]
        %v2205 = vld [vmem:[%s4 + $0xa8] sm:$0xff]
        %v2206 = vld [vmem:[%s4 + $0xb0] sm:$0xff]
        %v2207 = vld [vmem:[%s4 + $0xb8] sm:$0xff]
        %v2208 = vld [vmem:[%s4 + $0xc0] sm:$0xff]
        %v2209 = vld [vmem:[%s4 + $0xc8] sm:$0xff]
        %v2210 = vld [vmem:[%s4 + $0xd0] sm:$0xff]
        %v2211 = vld [vmem:[%s4 + $0xd8] sm:$0xff]
        %v2212 = vld [vmem:[%s4 + $0xe0] sm:$0xff]
        %v2213 = vld [vmem:[%s4 + $0xe8] sm:$0xff]
        %v2214 = vld [vmem:[%s4 + $0xf0] sm:$0xff]
        %v2215 = vld [vmem:[%s4 + $0xf8] sm:$0xff]
        %v2216 = vld [vmem:[%s4 + $0x100] sm:$0xff]
        %v2217 = vld [vmem:[%s4 + $0x108] sm:$0xff]
        %v2218 = vld [vmem:[%s4 + $0x110] sm:$0xff]
        %v2219 = vld [vmem:[%s4 + $0x118] sm:$0xff]
        %v2220 = vld [vmem:[%s4 + $0x120] sm:$0xff]
        %v2221 = vld [vmem:[%s4 + $0x128] sm:$0xff]
        %v2222 = vld [vmem:[%s4 + $0x130] sm:$0xff]
        %v2223 = vld [vmem:[%s4 + $0x138] sm:$0xff]
        %v2224 = vld [vmem:[%s4 + $0x140] sm:$0xff]
        %v2225 = vld [vmem:[%s4 + $0x148] sm:$0xff]
        %v2226 = vld [vmem:[%s4 + $0x150] sm:$0xff]
        %v2227 = vld [vmem:[%s4 + $0x158] sm:$0xff]
        %v2228 = vld [vmem:[%s4 + $0x160] sm:$0xff]
        %v2229 = vld [vmem:[%s4 + $0x168] sm:$0xff]
        %v2230 = vld [vmem:[%s4 + $0x170] sm:$0xff]
        %v2231 = vld [vmem:[%s4 + $0x178] sm:$0xff]
        %v2232 = vld [vmem:[%s4 + $0x180] sm:$0xff]
        %v2233 = vld [vmem:[%s4 + $0x188] sm:$0xff]
        %v2234 = vld [vmem:[%s4 + $0x190] sm:$0xff]
        %v2235 = vld [vmem:[%s4 + $0x198] sm:$0xff]
        %v2236 = vld [vmem:[%s4 + $0x1a0] sm:$0xff]
        %v2237 = vld [vmem:[%s4 + $0x1a8] sm:$0xff]
        %v2238 = vld [vmem:[%s4 + $0x1b0] sm:$0xff]
        %v2239 = vld [vmem:[%s4 + $0x1b8] sm:$0xff]
        %v2240 = vld [vmem:[%s4 + $0x1c0] sm:$0xff]
        %v2241 = vld [vmem:[%s4 + $0x1c8] sm:$0xff]
        %v2242 = vld [vmem:[%s4 + $0x1d0] sm:$0xff]
        %v2243 = vld [vmem:[%s4 + $0x1d8] sm:$0xff]
        %v2244 = vld [vmem:[%s4 + $0x1e0] sm:$0xff]
        %v2245 = vld [vmem:[%s4 + $0x1e8] sm:$0xff]
        %v2246 = vld [vmem:[%s4 + $0x1f0] sm:$0xff]
        %v2247 = vld [vmem:[%s4 + $0x1f8] sm:$0xff]
        %v2248 = vld [vmem:[%s4 + $0x200] sm:$0xff]
        %v2249 = vld [vmem:[%s4 + $0x208] sm:$0xff]
        %v2250 = vld [vmem:[%s4 + $0x210] sm:$0xff]
        %v2251 = vld [vmem:[%s4 + $0x218] sm:$0xff]
        %v2252 = vld [vmem:[%s4 + $0x220] sm:$0xff]
        %v2253 = vld [vmem:[%s4 + $0x228] sm:$0xff]
        %v2254 = vld [vmem:[%s4 + $0x230] sm:$0xff]
        %v2255 = vld [vmem:[%s4 + $0x238] sm:$0xff]
        %v2256 = vld [vmem:[%s4 + $0x240] sm:$0xff]
        %v2257 = vld [vmem:[%s4 + $0x248] sm:$0xff]
        %v2258 = vld [vmem:[%s4 + $0x250] sm:$0xff]
        %v2259 = vld [vmem:[%s4 + $0x258] sm:$0xff]
        %v2260 = vld [vmem:[%s4 + $0x260] sm:$0xff]
        %v2261 = vld [vmem:[%s4 + $0x268] sm:$0xff]
        %v2262 = vld [vmem:[%s4 + $0x270] sm:$0xff]
        %v2263 = vld [vmem:[%s4 + $0x278] sm:$0xff]
        %v2264 = vld [vmem:[%s4 + $0x280] sm:$0xff]
        %v2265 = vld [vmem:[%s4 + $0x288] sm:$0xff]
        %v2266 = vld [vmem:[%s4 + $0x290] sm:$0xff]
        %v2267 = vld [vmem:[%s4 + $0x298] sm:$0xff]
        %v2268 = vld [vmem:[%s4 + $0x2a0] sm:$0xff]
        %v2269 = vld [vmem:[%s4 + $0x2a8] sm:$0xff]
        %v2270 = vld [vmem:[%s4 + $0x2b0] sm:$0xff]
        %v2271 = vld [vmem:[%s4 + $0x2b8] sm:$0xff]
        %v2272 = vld [vmem:[%s4 + $0x2c0] sm:$0xff]
        %v2273 = vld [vmem:[%s4 + $0x2c8] sm:$0xff]
        %v2274 = vld [vmem:[%s4 + $0x2d0] sm:$0xff]
        %v2275 = vld [vmem:[%s4 + $0x2d8] sm:$0xff]
        %v2276 = vld [vmem:[%s4 + $0x2e0] sm:$0xff]
        %v2277 = vld [vmem:[%s4 + $0x2e8] sm:$0xff]
        %v2278 = vld [vmem:[%s4 + $0x2f0] sm:$0xff]
        %v2279 = vld [vmem:[%s4 + $0x2f8] sm:$0xff]
        %v2280 = vld [vmem:[%s4 + $0x300] sm:$0xff]
        %v2281 = vld [vmem:[%s4 + $0x308] sm:$0xff]
        %v2282 = vld [vmem:[%s4 + $0x310] sm:$0xff]
        %v2283 = vld [vmem:[%s4 + $0x318] sm:$0xff]
        %v2284 = vld [vmem:[%s4 + $0x320] sm:$0xff]
        %v2285 = vld [vmem:[%s4 + $0x328] sm:$0xff]
        %v2286 = vld [vmem:[%s4 + $0x330] sm:$0xff]
        %v2287 = vld [vmem:[%s4 + $0x338] sm:$0xff]
        %v2288 = vld [vmem:[%s4 + $0x340] sm:$0xff]
        %v2289 = vld [vmem:[%s4 + $0x348] sm:$0xff]
        %v2290 = vld [vmem:[%s4 + $0x350] sm:$0xff]
        %v2291 = vld [vmem:[%s4 + $0x358] sm:$0xff]
        %v2292 = vld [vmem:[%s4 + $0x360] sm:$0xff]
        %v2293 = vld [vmem:[%s4 + $0x368] sm:$0xff]
        %v2294 = vld [vmem:[%s4 + $0x370] sm:$0xff]
        %v2295 = vld [vmem:[%s4 + $0x378] sm:$0xff]
        %v2296 = vld [vmem:[%s4 + $0x380] sm:$0xff]
        %v2297 = vld [vmem:[%s4 + $0x388] sm:$0xff]
        %v2298 = vld [vmem:[%s4 + $0x390] sm:$0xff]
        %v2299 = vld [vmem:[%s4 + $0x398] sm:$0xff]
        %v2300 = vld [vmem:[%s4 + $0x3a0] sm:$0xff]
        %v2301 = vld [vmem:[%s4 + $0x3a8] sm:$0xff]
        %v2302 = vld [vmem:[%s4 + $0x3b0] sm:$0xff]
        %v2303 = vld [vmem:[%s4 + $0x3b8] sm:$0xff]
        %v2304 = vld [vmem:[%s4 + $0x3c0] sm:$0xff]
        %v2305 = vld [vmem:[%s4 + $0x3c8] sm:$0xff]
        %v2306 = vld [vmem:[%s4 + $0x3d0] sm:$0xff]
        %v2307 = vld [vmem:[%s4 + $0x3d8] sm:$0xff]
        %v2308 = vld [vmem:[%s4 + $0x3e0] sm:$0xff]
        %v2309 = vld [vmem:[%s4 + $0x3e8] sm:$0xff]
        %v2310 = vld [vmem:[%s4 + $0x3f0] sm:$0xff]
        %v2311 = vld [vmem:[%s4 + $0x3f8] sm:$0xff]
        %v2312 = vld [vmem:[%s4 + $0x400] sm:$0xff]
        %v2313 = vld [vmem:[%s4 + $0x408] sm:$0xff]
        %v2314 = vld [vmem:[%s4 + $0x410] sm:$0xff]
        %v2315 = vld [vmem:[%s4 + $0x418] sm:$0xff]
        %v2316 = vld [vmem:[%s4 + $0x420] sm:$0xff]
        %v2317 = vld [vmem:[%s4 + $0x428] sm:$0xff]
        %v2318 = vld [vmem:[%s4 + $0x430] sm:$0xff]
        %v2319 = vld [vmem:[%s4 + $0x438] sm:$0xff]
        %v2320 = vld [vmem:[%s4 + $0x440] sm:$0xff]
        %v2321 = vld [vmem:[%s4 + $0x448] sm:$0xff]
        %v2322 = vld [vmem:[%s4 + $0x450] sm:$0xff]
        %v2323 = vld [vmem:[%s4 + $0x458] sm:$0xff]
        %v2324 = vld [vmem:[%s4 + $0x460] sm:$0xff]
        %v2325 = vld [vmem:[%s4 + $0x468] sm:$0xff]
        %v2326 = vld [vmem:[%s4 + $0x470] sm:$0xff]
        %v2327 = vld [vmem:[%s4 + $0x478] sm:$0xff]
        %2328 = vmatprep.subr.mxu0 0.0
        %2329 = vmatpush1.msra.mxu0 %v2184
        %2330 = vmatprep.subr.mxu0 0.0
        %2331 = vmatpush1.msra.mxu0 %v2185
        %2332 = vmatprep.subr.mxu0 0.0
        %2333 = vmatpush1.msra.mxu0 %v2186
        %2334 = vmatprep.subr.mxu0 0.0
        %2335 = vmatpush1.msra.mxu0 %v2187
        %2336 = vmatprep.subr.mxu0 0.0
        %2337 = vmatpush1.msra.mxu0 %v2188
        %2338 = vmatprep.subr.mxu0 0.0
        %2339 = vmatpush1.msra.mxu0 %v2189
        %2340 = vmatprep.subr.mxu0 0.0
        %2341 = vmatpush1.msra.mxu0 %v2190
        %2342 = vmatprep.subr.mxu0 0.0
        %2343 = vmatpush1.msra.mxu0 %v2191
        %2344 = vmatprep.subr.mxu0 0.0
        %2345 = vmatpush1.msra.mxu0 %v2192
        %2346 = vmatprep.subr.mxu0 0.0
        %2347 = vmatpush1.msra.mxu0 %v2193
        %2348 = vmatprep.subr.mxu0 0.0
        %2349 = vmatpush1.msra.mxu0 %v2194
        %2350 = vmatprep.subr.mxu0 0.0
        %2351 = vmatpush1.msra.mxu0 %v2195
        %2352 = vmatprep.subr.mxu0 0.0
        %2353 = vmatpush1.msra.mxu0 %v2196
        %2354 = vmatprep.subr.mxu0 0.0
        %2355 = vmatpush1.msra.mxu0 %v2197
        %2356 = vmatprep.subr.mxu0 0.0
        %2357 = vmatpush1.msra.mxu0 %v2198
        %2358 = vmatprep.subr.mxu0 0.0
        %2359 = vmatpush1.msra.mxu0 %v2199
        %2360 = vmatprep.subr.mxu0 0.0
        %2361 = vmatpush1.msra.mxu0 %v2200
        %2362 = vmatprep.subr.mxu0 0.0
        %2363 = vmatpush1.msra.mxu0 %v2201
        %2364 = vmatprep.subr.mxu0 0.0
        %2365 = vmatpush1.msra.mxu0 %v2202
        %2366 = vmatprep.subr.mxu0 0.0
        %2367 = vmatpush1.msra.mxu0 %v2203
        %2368 = vmatprep.subr.mxu0 0.0
        %2369 = vmatpush1.msra.mxu0 %v2204
        %2370 = vmatprep.subr.mxu0 0.0
        %2371 = vmatpush1.msra.mxu0 %v2205
        %2372 = vmatprep.subr.mxu0 0.0
        %2373 = vmatpush1.msra.mxu0 %v2206
        %2374 = vmatprep.subr.mxu0 0.0
        %2375 = vmatpush1.msra.mxu0 %v2207
        %2376 = vmatprep.subr.mxu0 0.0
        %2377 = vmatpush1.msra.mxu0 %v2208
        %2378 = vmatprep.subr.mxu0 0.0
        %2379 = vmatpush1.msra.mxu0 %v2209
        %2380 = vmatprep.subr.mxu0 0.0
        %2381 = vmatpush1.msra.mxu0 %v2210
        %2382 = vmatprep.subr.mxu0 0.0
        %2383 = vmatpush1.msra.mxu0 %v2211
        %2384 = vmatprep.subr.mxu0 0.0
        %2385 = vmatpush1.msra.mxu0 %v2212
        %2386 = vmatprep.subr.mxu0 0.0
        %2387 = vmatpush1.msra.mxu0 %v2213
        %2388 = vmatprep.subr.mxu0 0.0
        %2389 = vmatpush1.msra.mxu0 %v2214
        %2390 = vmatprep.subr.mxu0 0.0
        %2391 = vmatpush1.msra.mxu0 %v2215
        %2392 = vmatprep.mubr.f32.mxu0 %v2041
        %2393 = vmatmul.mubr.f32.gmra.mrb[0].mxu0 %v2040
        %v2394 = vpop.f32.mrb[0].mxu0
        %v2395 = vadd.f32 0.0, %v2394
        %v2396 = vpop.f32.mrb[0].mxu0
        %2397 = vmatprep.mubr.f32.mxu0 %v2050
        %2398 = vmatmul.mubr.f32.gmra.mrb[0].mxu0 %v2049
        %v2399 = vpop.f32.mrb[0].mxu0
        %v2400 = vadd.f32 0.0, %v2399
        %v2401 = vpop.f32.mrb[0].mxu0
        %2402 = vmatprep.mubr.f32.mxu0 %v2059
        %2403 = vmatmul.mubr.f32.gmra.mrb[0].mxu0 %v2058
        %v2404 = vpop.f32.mrb[0].mxu0
        %v2405 = vadd.f32 0.0, %v2404
        %v2406 = vpop.f32.mrb[0].mxu0
        %2407 = vmatprep.mubr.f32.mxu0 %v2068
        %2408 = vmatmul.mubr.f32.gmra.mrb[0].mxu0 %v2067
        %v2409 = vpop.f32.mrb[0].mxu0
        %v2410 = vadd.f32 0.0, %v2409
        %v2411 = vpop.f32.mrb[0].mxu0
        %2412 = vmatprep.mubr.f32.mxu0 %v2077
        %2413 = vmatmul.mubr.f32.gmra.mrb[0].mxu0 %v2076
        %v2414 = vpop.f32.mrb[0].mxu0
        %v2415 = vadd.f32 0.0, %v2414
        %v2416 = vpop.f32.mrb[0].mxu0
        %2417 = vmatprep.mubr.f32.mxu0 %v2086
        %2418 = vmatmul.mubr.f32.gmra.mrb[0].mxu0 %v2085
        %v2419 = vpop.f32.mrb[0].mxu0
        %v2420 = vadd.f32 0.0, %v2419
        %v2421 = vpop.f32.mrb[0].mxu0
        %2422 = vmatprep.mubr.f32.mxu0 %v2095
        %2423 = vmatmul.mubr.f32.gmra.mrb[0].mxu0 %v2094
        %v2424 = vpop.f32.mrb[0].mxu0
        %v2425 = vadd.f32 0.0, %v2424
        %v2426 = vpop.f32.mrb[0].mxu0
        %2427 = vmatprep.mubr.f32.mxu0 %v2104
        %2428 = vmatmul.mubr.f32.gmra.mrb[0].mxu0 %v2103
        %v2429 = vpop.f32.mrb[0].mxu0
        %v2430 = vadd.f32 0.0, %v2429
        %v2431 = vpop.f32.mrb[0].mxu0
        %2432 = vmatprep.mubr.f32.mxu0 %v2113
        %2433 = vmatmul.mubr.f32.gmra.mrb[0].mxu0 %v2112
        %v2434 = vpop.f32.mrb[0].mxu0
        %v2435 = vadd.f32 0.0, %v2434
        %v2436 = vpop.f32.mrb[0].mxu0
        %2437 = vmatprep.mubr.f32.mxu0 %v2122
        %2438 = vmatmul.mubr.f32.gmra.mrb[0].mxu0 %v2121
        %v2439 = vpop.f32.mrb[0].mxu0
        %v2440 = vadd.f32 0.0, %v2439
        %v2441 = vpop.f32.mrb[0].mxu0
        %2442 = vmatprep.mubr.f32.mxu0 %v2131
        %2443 = vmatmul.mubr.f32.gmra.mrb[0].mxu0 %v2130
        %v2444 = vpop.f32.mrb[0].mxu0
        %v2445 = vadd.f32 0.0, %v2444
        %v2446 = vpop.f32.mrb[0].mxu0
        %2447 = vmatprep.mubr.f32.mxu0 %v2140
        %2448 = vmatmul.mubr.f32.gmra.mrb[0].mxu0 %v2139
        %v2449 = vpop.f32.mrb[0].mxu0
        %v2450 = vadd.f32 0.0, %v2449
        %v2451 = vpop.f32.mrb[0].mxu0
        %2452 = vmatprep.mubr.f32.mxu0 %v2149
        %2453 = vmatmul.mubr.f32.gmra.mrb[0].mxu0 %v2148
        %v2454 = vpop.f32.mrb[0].mxu0
        %v2455 = vadd.f32 0.0, %v2454
        %v2456 = vpop.f32.mrb[0].mxu0
        %2457 = vmatprep.mubr.f32.mxu0 %v2158
        %2458 = vmatmul.mubr.f32.gmra.mrb[0].mxu0 %v2157
        %v2459 = vpop.f32.mrb[0].mxu0
        %v2460 = vadd.f32 0.0, %v2459
        %v2461 = vpop.f32.mrb[0].mxu0
        %2462 = vmatprep.mubr.f32.mxu0 %v2167
        %2463 = vmatmul.mubr.f32.gmra.mrb[0].mxu0 %v2166
        %v2464 = vpop.f32.mrb[0].mxu0
        %v2465 = vadd.f32 0.0, %v2464
        %v2466 = vpop.f32.mrb[0].mxu0
        %2467 = vmatprep.mubr.f32.mxu0 %v2176
        %2468 = vmatmul.mubr.f32.gmra.mrb[0].mxu0 %v2175
        %v2469 = vpop.f32.mrb[0].mxu0
        %v2470 = vadd.f32 0.0, %v2469
        %v2471 = vpop.f32.mrb[0].mxu0
        %2472 = vdwg.mxu0
        %2473 = vmatprep.subr.mxu0 0.0
        %2474 = vmatpush1.msra.mxu0 %v2216
        %2475 = vmatprep.subr.mxu0 0.0
        %2476 = vmatpush1.msra.mxu0 %v2217
        %2477 = vmatprep.subr.mxu0 0.0
        %2478 = vmatpush1.msra.mxu0 %v2218
        %2479 = vmatprep.subr.mxu0 0.0
        %2480 = vmatpush1.msra.mxu0 %v2219
        %2481 = vmatprep.subr.mxu0 0.0
        %2482 = vmatpush1.msra.mxu0 %v2220
        %2483 = vmatprep.subr.mxu0 0.0
        %2484 = vmatpush1.msra.mxu0 %v2221
        %2485 = vmatprep.subr.mxu0 0.0
        %2486 = vmatpush1.msra.mxu0 %v2222
        %2487 = vmatprep.subr.mxu0 0.0
        %2488 = vmatpush1.msra.mxu0 %v2223
        %2489 = vmatprep.subr.mxu0 0.0
        %2490 = vmatpush1.msra.mxu0 %v2224
        %2491 = vmatprep.subr.mxu0 0.0
        %2492 = vmatpush1.msra.mxu0 %v2225
        %2493 = vmatprep.subr.mxu0 0.0
        %2494 = vmatpush1.msra.mxu0 %v2226
        %2495 = vmatprep.subr.mxu0 0.0
        %2496 = vmatpush1.msra.mxu0 %v2227
        %2497 = vmatprep.subr.mxu0 0.0
        %2498 = vmatpush1.msra.mxu0 %v2228
        %2499 = vmatprep.subr.mxu0 0.0
        %2500 = vmatpush1.msra.mxu0 %v2229
        %2501 = vmatprep.subr.mxu0 0.0
        %2502 = vmatpush1.msra.mxu0 %v2230
        %2503 = vmatprep.subr.mxu0 0.0
        %2504 = vmatpush1.msra.mxu0 %v2231
        %2505 = vmatprep.subr.mxu0 0.0
        %2506 = vmatpush1.msra.mxu0 %v2232
        %2507 = vmatprep.subr.mxu0 0.0
        %2508 = vmatpush1.msra.mxu0 %v2233
        %2509 = vmatprep.subr.mxu0 0.0
        %2510 = vmatpush1.msra.mxu0 %v2234
        %2511 = vmatprep.subr.mxu0 0.0
        %2512 = vmatpush1.msra.mxu0 %v2235
        %2513 = vmatprep.subr.mxu0 0.0
        %2514 = vmatpush1.msra.mxu0 %v2236
        %2515 = vmatprep.subr.mxu0 0.0
        %2516 = vmatpush1.msra.mxu0 %v2237
        %2517 = vmatprep.subr.mxu0 0.0
        %2518 = vmatpush1.msra.mxu0 %v2238
        %2519 = vmatprep.subr.mxu0 0.0
        %2520 = vmatpush1.msra.mxu0 %v2239
        %2521 = vmatprep.subr.mxu0 0.0
        %2522 = vmatpush1.msra.mxu0 %v2240
        %2523 = vmatprep.subr.mxu0 0.0
        %2524 = vmatpush1.msra.mxu0 %v2241
        %2525 = vmatprep.subr.mxu0 0.0
        %2526 = vmatpush1.msra.mxu0 %v2242
        %2527 = vmatprep.subr.mxu0 0.0
        %2528 = vmatpush1.msra.mxu0 %v2243
        %2529 = vmatprep.subr.mxu0 0.0
        %2530 = vmatpush1.msra.mxu0 %v2244
        %2531 = vmatprep.subr.mxu0 0.0
        %2532 = vmatpush1.msra.mxu0 %v2245
        %2533 = vmatprep.subr.mxu0 0.0
        %2534 = vmatpush1.msra.mxu0 %v2246
        %2535 = vmatprep.subr.mxu0 0.0
        %2536 = vmatpush1.msra.mxu0 %v2247
        %2537 = vmatprep.mubr.f32.mxu0 %v2043
        %2538 = vmatmul.mubr.f32.gmra.mrb[0].mxu0 %v2042
        %v2539 = vpop.f32.mrb[0].mxu0
        %v2540 = vadd.f32 %v2395, %v2539
        %v2541 = vpop.f32.mrb[0].mxu0
        %2542 = vmatprep.mubr.f32.mxu0 %v2052
        %2543 = vmatmul.mubr.f32.gmra.mrb[0].mxu0 %v2051
        %v2544 = vpop.f32.mrb[0].mxu0
        %v2545 = vadd.f32 %v2400, %v2544
        %v2546 = vpop.f32.mrb[0].mxu0
        %2547 = vmatprep.mubr.f32.mxu0 %v2061
        %2548 = vmatmul.mubr.f32.gmra.mrb[0].mxu0 %v2060
        %v2549 = vpop.f32.mrb[0].mxu0
        %v2550 = vadd.f32 %v2405, %v2549
        %v2551 = vpop.f32.mrb[0].mxu0
        %2552 = vmatprep.mubr.f32.mxu0 %v2070
        %2553 = vmatmul.mubr.f32.gmra.mrb[0].mxu0 %v2069
        %v2554 = vpop.f32.mrb[0].mxu0
        %v2555 = vadd.f32 %v2410, %v2554
        %v2556 = vpop.f32.mrb[0].mxu0
        %2557 = vmatprep.mubr.f32.mxu0 %v2079
        %2558 = vmatmul.mubr.f32.gmra.mrb[0].mxu0 %v2078
        %v2559 = vpop.f32.mrb[0].mxu0
        %v2560 = vadd.f32 %v2415, %v2559
        %v2561 = vpop.f32.mrb[0].mxu0
        %2562 = vmatprep.mubr.f32.mxu0 %v2088
        %2563 = vmatmul.mubr.f32.gmra.mrb[0].mxu0 %v2087
        %v2564 = vpop.f32.mrb[0].mxu0
        %v2565 = vadd.f32 %v2420, %v2564
        %v2566 = vpop.f32.mrb[0].mxu0
        %2567 = vmatprep.mubr.f32.mxu0 %v2097
        %2568 = vmatmul.mubr.f32.gmra.mrb[0].mxu0 %v2096
        %v2569 = vpop.f32.mrb[0].mxu0
        %v2570 = vadd.f32 %v2425, %v2569
        %v2571 = vpop.f32.mrb[0].mxu0
        %2572 = vmatprep.mubr.f32.mxu0 %v2106
        %2573 = vmatmul.mubr.f32.gmra.mrb[0].mxu0 %v2105
        %v2574 = vpop.f32.mrb[0].mxu0
        %v2575 = vadd.f32 %v2430, %v2574
        %v2576 = vpop.f32.mrb[0].mxu0
        %2577 = vmatprep.mubr.f32.mxu0 %v2115
        %2578 = vmatmul.mubr.f32.gmra.mrb[0].mxu0 %v2114
        %v2579 = vpop.f32.mrb[0].mxu0
        %v2580 = vadd.f32 %v2435, %v2579
        %v2581 = vpop.f32.mrb[0].mxu0
        %2582 = vmatprep.mubr.f32.mxu0 %v2124
        %2583 = vmatmul.mubr.f32.gmra.mrb[0].mxu0 %v2123
        %v2584 = vpop.f32.mrb[0].mxu0
        %v2585 = vadd.f32 %v2440, %v2584
        %v2586 = vpop.f32.mrb[0].mxu0
        %2587 = vmatprep.mubr.f32.mxu0 %v2133
        %2588 = vmatmul.mubr.f32.gmra.mrb[0].mxu0 %v2132
        %v2589 = vpop.f32.mrb[0].mxu0
        %v2590 = vadd.f32 %v2445, %v2589
        %v2591 = vpop.f32.mrb[0].mxu0
        %2592 = vmatprep.mubr.f32.mxu0 %v2142
        %2593 = vmatmul.mubr.f32.gmra.mrb[0].mxu0 %v2141
        %v2594 = vpop.f32.mrb[0].mxu0
        %v2595 = vadd.f32 %v2450, %v2594
        %v2596 = vpop.f32.mrb[0].mxu0
        %2597 = vmatprep.mubr.f32.mxu0 %v2151
        %2598 = vmatmul.mubr.f32.gmra.mrb[0].mxu0 %v2150
        %v2599 = vpop.f32.mrb[0].mxu0
        %v2600 = vadd.f32 %v2455, %v2599
        %v2601 = vpop.f32.mrb[0].mxu0
        %2602 = vmatprep.mubr.f32.mxu0 %v2160
        %2603 = vmatmul.mubr.f32.gmra.mrb[0].mxu0 %v2159
        %v2604 = vpop.f32.mrb[0].mxu0
        %v2605 = vadd.f32 %v2460, %v2604
        %v2606 = vpop.f32.mrb[0].mxu0
        %2607 = vmatprep.mubr.f32.mxu0 %v2169
        %2608 = vmatmul.mubr.f32.gmra.mrb[0].mxu0 %v2168
        %v2609 = vpop.f32.mrb[0].mxu0
        %v2610 = vadd.f32 %v2465, %v2609
        %v2611 = vpop.f32.mrb[0].mxu0
        %2612 = vmatprep.mubr.f32.mxu0 %v2178
        %2613 = vmatmul.mubr.f32.gmra.mrb[0].mxu0 %v2177
        %v2614 = vpop.f32.mrb[0].mxu0
        %v2615 = vadd.f32 %v2470, %v2614
        %v2616 = vpop.f32.mrb[0].mxu0
        %2617 = vdwg.mxu0
        %2618 = vmatprep.subr.mxu0 0.0
        %2619 = vmatpush1.msra.mxu0 %v2248
        %2620 = vmatprep.subr.mxu0 0.0
        %2621 = vmatpush1.msra.mxu0 %v2249
        %2622 = vmatprep.subr.mxu0 0.0
        %2623 = vmatpush1.msra.mxu0 %v2250
        %2624 = vmatprep.subr.mxu0 0.0
        %2625 = vmatpush1.msra.mxu0 %v2251
        %2626 = vmatprep.subr.mxu0 0.0
        %2627 = vmatpush1.msra.mxu0 %v2252
        %2628 = vmatprep.subr.mxu0 0.0
        %2629 = vmatpush1.msra.mxu0 %v2253
        %2630 = vmatprep.subr.mxu0 0.0
        %2631 = vmatpush1.msra.mxu0 %v2254
        %2632 = vmatprep.subr.mxu0 0.0
        %2633 = vmatpush1.msra.mxu0 %v2255
        %2634 = vmatprep.subr.mxu0 0.0
        %2635 = vmatpush1.msra.mxu0 %v2256
        %2636 = vmatprep.subr.mxu0 0.0
        %2637 = vmatpush1.msra.mxu0 %v2257
        %2638 = vmatprep.subr.mxu0 0.0
        %2639 = vmatpush1.msra.mxu0 %v2258
        %2640 = vmatprep.subr.mxu0 0.0
        %2641 = vmatpush1.msra.mxu0 %v2259
        %2642 = vmatprep.subr.mxu0 0.0
        %2643 = vmatpush1.msra.mxu0 %v2260
        %2644 = vmatprep.subr.mxu0 0.0
        %2645 = vmatpush1.msra.mxu0 %v2261
        %2646 = vmatprep.subr.mxu0 0.0
        %2647 = vmatpush1.msra.mxu0 %v2262
        %2648 = vmatprep.subr.mxu0 0.0
        %2649 = vmatpush1.msra.mxu0 %v2263
        %2650 = vmatprep.subr.mxu0 0.0
        %2651 = vmatpush1.msra.mxu0 %v2264
        %2652 = vmatprep.subr.mxu0 0.0
        %2653 = vmatpush1.msra.mxu0 %v2265
        %2654 = vmatprep.subr.mxu0 0.0
        %2655 = vmatpush1.msra.mxu0 %v2266
        %2656 = vmatprep.subr.mxu0 0.0
        %2657 = vmatpush1.msra.mxu0 %v2267
        %2658 = vmatprep.subr.mxu0 0.0
        %2659 = vmatpush1.msra.mxu0 %v2268
        %2660 = vmatprep.subr.mxu0 0.0
        %2661 = vmatpush1.msra.mxu0 %v2269
        %2662 = vmatprep.subr.mxu0 0.0
        %2663 = vmatpush1.msra.mxu0 %v2270
        %2664 = vmatprep.subr.mxu0 0.0
        %2665 = vmatpush1.msra.mxu0 %v2271
        %2666 = vmatprep.subr.mxu0 0.0
        %2667 = vmatpush1.msra.mxu0 %v2272
        %2668 = vmatprep.subr.mxu0 0.0
        %2669 = vmatpush1.msra.mxu0 %v2273
        %2670 = vmatprep.subr.mxu0 0.0
        %2671 = vmatpush1.msra.mxu0 %v2274
        %2672 = vmatprep.subr.mxu0 0.0
        %2673 = vmatpush1.msra.mxu0 %v2275
        %2674 = vmatprep.subr.mxu0 0.0
        %2675 = vmatpush1.msra.mxu0 %v2276
        %2676 = vmatprep.subr.mxu0 0.0
        %2677 = vmatpush1.msra.mxu0 %v2277
        %2678 = vmatprep.subr.mxu0 0.0
        %2679 = vmatpush1.msra.mxu0 %v2278
        %2680 = vmatprep.subr.mxu0 0.0
        %2681 = vmatpush1.msra.mxu0 %v2279
        %2682 = vmatprep.mubr.f32.mxu0 %v2045
        %2683 = vmatmul.mubr.f32.gmra.mrb[0].mxu0 %v2044
        %v2684 = vpop.f32.mrb[0].mxu0
        %v2685 = vadd.f32 %v2540, %v2684
        %v2686 = vpop.f32.mrb[0].mxu0
        %2687 = vmatprep.mubr.f32.mxu0 %v2054
        %2688 = vmatmul.mubr.f32.gmra.mrb[0].mxu0 %v2053
        %v2689 = vpop.f32.mrb[0].mxu0
        %v2690 = vadd.f32 %v2545, %v2689
        %v2691 = vpop.f32.mrb[0].mxu0
        %2692 = vmatprep.mubr.f32.mxu0 %v2063
        %2693 = vmatmul.mubr.f32.gmra.mrb[0].mxu0 %v2062
        %v2694 = vpop.f32.mrb[0].mxu0
        %v2695 = vadd.f32 %v2550, %v2694
        %v2696 = vpop.f32.mrb[0].mxu0
        %2697 = vmatprep.mubr.f32.mxu0 %v2072
        %2698 = vmatmul.mubr.f32.gmra.mrb[0].mxu0 %v2071
        %v2699 = vpop.f32.mrb[0].mxu0
        %v2700 = vadd.f32 %v2555, %v2699
        %v2701 = vpop.f32.mrb[0].mxu0
        %2702 = vmatprep.mubr.f32.mxu0 %v2081
        %2703 = vmatmul.mubr.f32.gmra.mrb[0].mxu0 %v2080
        %v2704 = vpop.f32.mrb[0].mxu0
        %v2705 = vadd.f32 %v2560, %v2704
        %v2706 = vpop.f32.mrb[0].mxu0
        %2707 = vmatprep.mubr.f32.mxu0 %v2090
        %2708 = vmatmul.mubr.f32.gmra.mrb[0].mxu0 %v2089
        %v2709 = vpop.f32.mrb[0].mxu0
        %v2710 = vadd.f32 %v2565, %v2709
        %v2711 = vpop.f32.mrb[0].mxu0
        %2712 = vmatprep.mubr.f32.mxu0 %v2099
        %2713 = vmatmul.mubr.f32.gmra.mrb[0].mxu0 %v2098
        %v2714 = vpop.f32.mrb[0].mxu0
        %v2715 = vadd.f32 %v2570, %v2714
        %v2716 = vpop.f32.mrb[0].mxu0
        %2717 = vmatprep.mubr.f32.mxu0 %v2108
        %2718 = vmatmul.mubr.f32.gmra.mrb[0].mxu0 %v2107
        %v2719 = vpop.f32.mrb[0].mxu0
        %v2720 = vadd.f32 %v2575, %v2719
        %v2721 = vpop.f32.mrb[0].mxu0
        %2722 = vmatprep.mubr.f32.mxu0 %v2117
        %2723 = vmatmul.mubr.f32.gmra.mrb[0].mxu0 %v2116
        %v2724 = vpop.f32.mrb[0].mxu0
        %v2725 = vadd.f32 %v2580, %v2724
        %v2726 = vpop.f32.mrb[0].mxu0
        %2727 = vmatprep.mubr.f32.mxu0 %v2126
        %2728 = vmatmul.mubr.f32.gmra.mrb[0].mxu0 %v2125
        %v2729 = vpop.f32.mrb[0].mxu0
        %v2730 = vadd.f32 %v2585, %v2729
        %v2731 = vpop.f32.mrb[0].mxu0
        %2732 = vmatprep.mubr.f32.mxu0 %v2135
        %2733 = vmatmul.mubr.f32.gmra.mrb[0].mxu0 %v2134
        %v2734 = vpop.f32.mrb[0].mxu0
        %v2735 = vadd.f32 %v2590, %v2734
        %v2736 = vpop.f32.mrb[0].mxu0
        %2737 = vmatprep.mubr.f32.mxu0 %v2144
        %2738 = vmatmul.mubr.f32.gmra.mrb[0].mxu0 %v2143
        %v2739 = vpop.f32.mrb[0].mxu0
        %v2740 = vadd.f32 %v2595, %v2739
        %v2741 = vpop.f32.mrb[0].mxu0
        %2742 = vmatprep.mubr.f32.mxu0 %v2153
        %2743 = vmatmul.mubr.f32.gmra.mrb[0].mxu0 %v2152
        %v2744 = vpop.f32.mrb[0].mxu0
        %v2745 = vadd.f32 %v2600, %v2744
        %v2746 = vpop.f32.mrb[0].mxu0
        %2747 = vmatprep.mubr.f32.mxu0 %v2162
        %2748 = vmatmul.mubr.f32.gmra.mrb[0].mxu0 %v2161
        %v2749 = vpop.f32.mrb[0].mxu0
        %v2750 = vadd.f32 %v2605, %v2749
        %v2751 = vpop.f32.mrb[0].mxu0
        %2752 = vmatprep.mubr.f32.mxu0 %v2171
        %2753 = vmatmul.mubr.f32.gmra.mrb[0].mxu0 %v2170
        %v2754 = vpop.f32.mrb[0].mxu0
        %v2755 = vadd.f32 %v2610, %v2754
        %v2756 = vpop.f32.mrb[0].mxu0
        %2757 = vmatprep.mubr.f32.mxu0 %v2180
        %2758 = vmatmul.mubr.f32.gmra.mrb[0].mxu0 %v2179
        %v2759 = vpop.f32.mrb[0].mxu0
        %v2760 = vadd.f32 %v2615, %v2759
        %v2761 = vpop.f32.mrb[0].mxu0
        %2762 = vdwg.mxu0
        %2763 = vmatprep.subr.mxu0 0.0
        %2764 = vmatpush1.msra.mxu0 %v2280
        %2765 = vmatprep.subr.mxu0 0.0
        %2766 = vmatpush1.msra.mxu0 %v2281
        %2767 = vmatprep.subr.mxu0 0.0
        %2768 = vmatpush1.msra.mxu0 %v2282
        %2769 = vmatprep.subr.mxu0 0.0
        %2770 = vmatpush1.msra.mxu0 %v2283
        %2771 = vmatprep.subr.mxu0 0.0
        %2772 = vmatpush1.msra.mxu0 %v2284
        %2773 = vmatprep.subr.mxu0 0.0
        %2774 = vmatpush1.msra.mxu0 %v2285
        %2775 = vmatprep.subr.mxu0 0.0
        %2776 = vmatpush1.msra.mxu0 %v2286
        %2777 = vmatprep.subr.mxu0 0.0
        %2778 = vmatpush1.msra.mxu0 %v2287
        %2779 = vmatprep.subr.mxu0 0.0
        %2780 = vmatpush1.msra.mxu0 %v2288
        %2781 = vmatprep.subr.mxu0 0.0
        %2782 = vmatpush1.msra.mxu0 %v2289
        %2783 = vmatprep.subr.mxu0 0.0
        %2784 = vmatpush1.msra.mxu0 %v2290
        %2785 = vmatprep.subr.mxu0 0.0
        %2786 = vmatpush1.msra.mxu0 %v2291
        %2787 = vmatprep.subr.mxu0 0.0
        %2788 = vmatpush1.msra.mxu0 %v2292
        %2789 = vmatprep.subr.mxu0 0.0
        %2790 = vmatpush1.msra.mxu0 %v2293
        %2791 = vmatprep.subr.mxu0 0.0
        %2792 = vmatpush1.msra.mxu0 %v2294
        %2793 = vmatprep.subr.mxu0 0.0
        %2794 = vmatpush1.msra.mxu0 %v2295
        %2795 = vmatprep.subr.mxu0 0.0
        %2796 = vmatpush1.msra.mxu0 %v2296
        %2797 = vmatprep.subr.mxu0 0.0
        %2798 = vmatpush1.msra.mxu0 %v2297
        %2799 = vmatprep.subr.mxu0 0.0
        %2800 = vmatpush1.msra.mxu0 %v2298
        %2801 = vmatprep.subr.mxu0 0.0
        %2802 = vmatpush1.msra.mxu0 %v2299
        %2803 = vmatprep.subr.mxu0 0.0
        %2804 = vmatpush1.msra.mxu0 %v2300
        %2805 = vmatprep.subr.mxu0 0.0
        %2806 = vmatpush1.msra.mxu0 %v2301
        %2807 = vmatprep.subr.mxu0 0.0
        %2808 = vmatpush1.msra.mxu0 %v2302
        %2809 = vmatprep.subr.mxu0 0.0
        %2810 = vmatpush1.msra.mxu0 %v2303
        %2811 = vmatprep.subr.mxu0 0.0
        %2812 = vmatpush1.msra.mxu0 %v2304
        %2813 = vmatprep.subr.mxu0 0.0
        %2814 = vmatpush1.msra.mxu0 %v2305
        %2815 = vmatprep.subr.mxu0 0.0
        %2816 = vmatpush1.msra.mxu0 %v2306
        %2817 = vmatprep.subr.mxu0 0.0
        %2818 = vmatpush1.msra.mxu0 %v2307
        %2819 = vmatprep.subr.mxu0 0.0
        %2820 = vmatpush1.msra.mxu0 %v2308
        %2821 = vmatprep.subr.mxu0 0.0
        %2822 = vmatpush1.msra.mxu0 %v2309
        %2823 = vmatprep.subr.mxu0 0.0
        %2824 = vmatpush1.msra.mxu0 %v2310
        %2825 = vmatprep.subr.mxu0 0.0
        %2826 = vmatpush1.msra.mxu0 %v2311
        %2827 = vmatprep.mubr.f32.mxu0 %v2047
        %2828 = vmatmul.mubr.f32.gmra.mrb[0].mxu0 %v2046
        %v2829 = vpop.f32.mrb[0].mxu0
        %v2830 = vadd.f32 %v2685, %v2829
        %v2831 = vpop.f32.mrb[0].mxu0
        %2832 = vmatprep.mubr.f32.mxu0 %v2056
        %2833 = vmatmul.mubr.f32.gmra.mrb[0].mxu0 %v2055
        %v2834 = vpop.f32.mrb[0].mxu0
        %v2835 = vadd.f32 %v2690, %v2834
        %v2836 = vpop.f32.mrb[0].mxu0
        %2837 = vmatprep.mubr.f32.mxu0 %v2065
        %2838 = vmatmul.mubr.f32.gmra.mrb[0].mxu0 %v2064
        %v2839 = vpop.f32.mrb[0].mxu0
        %v2840 = vadd.f32 %v2695, %v2839
        %v2841 = vpop.f32.mrb[0].mxu0
        %2842 = vmatprep.mubr.f32.mxu0 %v2074
        %2843 = vmatmul.mubr.f32.gmra.mrb[0].mxu0 %v2073
        %v2844 = vpop.f32.mrb[0].mxu0
        %v2845 = vadd.f32 %v2700, %v2844
        %v2846 = vpop.f32.mrb[0].mxu0
        %2847 = vmatprep.mubr.f32.mxu0 %v2083
        %2848 = vmatmul.mubr.f32.gmra.mrb[0].mxu0 %v2082
        %v2849 = vpop.f32.mrb[0].mxu0
        %v2850 = vadd.f32 %v2705, %v2849
        %v2851 = vpop.f32.mrb[0].mxu0
        %2852 = vmatprep.mubr.f32.mxu0 %v2092
        %2853 = vmatmul.mubr.f32.gmra.mrb[0].mxu0 %v2091
        %v2854 = vpop.f32.mrb[0].mxu0
        %v2855 = vadd.f32 %v2710, %v2854
        %v2856 = vpop.f32.mrb[0].mxu0
        %2857 = vmatprep.mubr.f32.mxu0 %v2101
        %2858 = vmatmul.mubr.f32.gmra.mrb[0].mxu0 %v2100
        %v2859 = vpop.f32.mrb[0].mxu0
        %v2860 = vadd.f32 %v2715, %v2859
        %v2861 = vpop.f32.mrb[0].mxu0
        %2862 = vmatprep.mubr.f32.mxu0 %v2110
        %2863 = vmatmul.mubr.f32.gmra.mrb[0].mxu0 %v2109
        %v2864 = vpop.f32.mrb[0].mxu0
        %v2865 = vadd.f32 %v2720, %v2864
        %v2866 = vpop.f32.mrb[0].mxu0
        %2867 = vmatprep.mubr.f32.mxu0 %v2119
        %2868 = vmatmul.mubr.f32.gmra.mrb[0].mxu0 %v2118
        %v2869 = vpop.f32.mrb[0].mxu0
        %v2870 = vadd.f32 %v2725, %v2869
        %v2871 = vpop.f32.mrb[0].mxu0
        %2872 = vmatprep.mubr.f32.mxu0 %v2128
        %2873 = vmatmul.mubr.f32.gmra.mrb[0].mxu0 %v2127
        %v2874 = vpop.f32.mrb[0].mxu0
        %v2875 = vadd.f32 %v2730, %v2874
        %v2876 = vpop.f32.mrb[0].mxu0
        %2877 = vmatprep.mubr.f32.mxu0 %v2137
        %2878 = vmatmul.mubr.f32.gmra.mrb[0].mxu0 %v2136
        %v2879 = vpop.f32.mrb[0].mxu0
        %v2880 = vadd.f32 %v2735, %v2879
        %v2881 = vpop.f32.mrb[0].mxu0
        %2882 = vmatprep.mubr.f32.mxu0 %v2146
        %2883 = vmatmul.mubr.f32.gmra.mrb[0].mxu0 %v2145
        %v2884 = vpop.f32.mrb[0].mxu0
        %v2885 = vadd.f32 %v2740, %v2884
        %v2886 = vpop.f32.mrb[0].mxu0
        %2887 = vmatprep.mubr.f32.mxu0 %v2155
        %2888 = vmatmul.mubr.f32.gmra.mrb[0].mxu0 %v2154
        %v2889 = vpop.f32.mrb[0].mxu0
        %v2890 = vadd.f32 %v2745, %v2889
        %v2891 = vpop.f32.mrb[0].mxu0
        %2892 = vmatprep.mubr.f32.mxu0 %v2164
        %2893 = vmatmul.mubr.f32.gmra.mrb[0].mxu0 %v2163
        %v2894 = vpop.f32.mrb[0].mxu0
        %v2895 = vadd.f32 %v2750, %v2894
        %v2896 = vpop.f32.mrb[0].mxu0
        %2897 = vmatprep.mubr.f32.mxu0 %v2173
        %2898 = vmatmul.mubr.f32.gmra.mrb[0].mxu0 %v2172
        %v2899 = vpop.f32.mrb[0].mxu0
        %v2900 = vadd.f32 %v2755, %v2899
        %v2901 = vpop.f32.mrb[0].mxu0
        %2902 = vmatprep.mubr.f32.mxu0 %v2182
        %2903 = vmatmul.mubr.f32.gmra.mrb[0].mxu0 %v2181
        %v2904 = vpop.f32.mrb[0].mxu0
        %v2905 = vadd.f32 %v2760, %v2904
        %v2906 = vpop.f32.mrb[0].mxu0
        %2907 = vdwg.mxu0
        %2908 = vmatprep.subr.mxu0 0.0
        %2909 = vmatpush1.msra.mxu0 %v2312
        %2910 = vmatprep.subr.mxu0 0.0
        %2911 = vmatpush1.msra.mxu0 %v2313
        %2912 = vmatprep.subr.mxu0 0.0
        %2913 = vmatpush1.msra.mxu0 %v2314
        %2914 = vmatprep.subr.mxu0 0.0
        %2915 = vmatpush1.msra.mxu0 %v2315
        %2916 = vmatprep.subr.mxu0 0.0
        %2917 = vmatpush1.msra.mxu0 %v2316
        %2918 = vmatprep.subr.mxu0 0.0
        %2919 = vmatpush1.msra.mxu0 %v2317
        %2920 = vmatprep.subr.mxu0 0.0
        %2921 = vmatpush1.msra.mxu0 %v2318
        %2922 = vmatprep.subr.mxu0 0.0
        %2923 = vmatpush1.msra.mxu0 %v2319
        %2924 = vmatprep.subr.mxu0 0.0
        %2925 = vmatpush1.msra.mxu0 %v2320
        %2926 = vmatprep.subr.mxu0 0.0
        %2927 = vmatpush1.msra.mxu0 %v2321
        %2928 = vmatprep.subr.mxu0 0.0
        %2929 = vmatpush1.msra.mxu0 %v2322
        %2930 = vmatprep.subr.mxu0 0.0
        %2931 = vmatpush1.msra.mxu0 %v2323
        %2932 = vmatprep.subr.mxu0 0.0
        %2933 = vmatpush1.msra.mxu0 %v2324
        %2934 = vmatprep.subr.mxu0 0.0
        %2935 = vmatpush1.msra.mxu0 %v2325
        %2936 = vmatprep.subr.mxu0 0.0
        %2937 = vmatpush1.msra.mxu0 %v2326
        %2938 = vmatprep.subr.mxu0 0.0
        %2939 = vmatpush1.msra.mxu0 %v2327
        %2940 = vmatprep.subr.mxu0 0.0
        %2941 = vmatpush1.msra.mxu0 0.0
        %2942 = vmatprep.subr.mxu0 0.0
        %2943 = vmatpush1.msra.mxu0 0.0
        %2944 = vmatprep.subr.mxu0 0.0
        %2945 = vmatpush1.msra.mxu0 0.0
        %2946 = vmatprep.subr.mxu0 0.0
        %2947 = vmatpush1.msra.mxu0 0.0
        %2948 = vmatprep.subr.mxu0 0.0
        %2949 = vmatpush1.msra.mxu0 0.0
        %2950 = vmatprep.subr.mxu0 0.0
        %2951 = vmatpush1.msra.mxu0 0.0
        %2952 = vmatprep.subr.mxu0 0.0
        %2953 = vmatpush1.msra.mxu0 0.0
        %2954 = vmatprep.subr.mxu0 0.0
        %2955 = vmatpush1.msra.mxu0 0.0
        %2956 = vmatprep.subr.mxu0 0.0
        %2957 = vmatpush1.msra.mxu0 0.0
        %2958 = vmatprep.subr.mxu0 0.0
        %2959 = vmatpush1.msra.mxu0 0.0
        %2960 = vmatprep.subr.mxu0 0.0
        %2961 = vmatpush1.msra.mxu0 0.0
        %2962 = vmatprep.subr.mxu0 0.0
        %2963 = vmatpush1.msra.mxu0 0.0
        %2964 = vmatprep.subr.mxu0 0.0
        %2965 = vmatpush1.msra.mxu0 0.0
        %2966 = vmatprep.subr.mxu0 0.0
        %2967 = vmatpush1.msra.mxu0 0.0
        %2968 = vmatprep.subr.mxu0 0.0
        %2969 = vmatpush1.msra.mxu0 0.0
        %2970 = vmatprep.subr.mxu0 0.0
        %2971 = vmatpush1.msra.mxu0 0.0
        %2972 = vmatprep.mubr.f32.mxu0 0.0
        %2973 = vmatmul.mubr.f32.gmra.mrb[0].mxu0 %v2048
        %v2974 = vpop.f32.mrb[0].mxu0
        %v2975 = vadd.f32 %v2830, %v2974
        %v2976 = vpop.f32.mrb[0].mxu0
        %2977 = vmatprep.mubr.f32.mxu0 0.0
        %2978 = vmatmul.mubr.f32.gmra.mrb[0].mxu0 %v2057
        %v2979 = vpop.f32.mrb[0].mxu0
        %v2980 = vadd.f32 %v2835, %v2979
        %v2981 = vpop.f32.mrb[0].mxu0
        %2982 = vmatprep.mubr.f32.mxu0 0.0
        %2983 = vmatmul.mubr.f32.gmra.mrb[0].mxu0 %v2066
        %v2984 = vpop.f32.mrb[0].mxu0
        %v2985 = vadd.f32 %v2840, %v2984
        %v2986 = vpop.f32.mrb[0].mxu0
        %2987 = vmatprep.mubr.f32.mxu0 0.0
        %2988 = vmatmul.mubr.f32.gmra.mrb[0].mxu0 %v2075
        %v2989 = vpop.f32.mrb[0].mxu0
        %v2990 = vadd.f32 %v2845, %v2989
        %v2991 = vpop.f32.mrb[0].mxu0
        %2992 = vmatprep.mubr.f32.mxu0 0.0
        %2993 = vmatmul.mubr.f32.gmra.mrb[0].mxu0 %v2084
        %v2994 = vpop.f32.mrb[0].mxu0
        %v2995 = vadd.f32 %v2850, %v2994
        %v2996 = vpop.f32.mrb[0].mxu0
        %2997 = vmatprep.mubr.f32.mxu0 0.0
        %2998 = vmatmul.mubr.f32.gmra.mrb[0].mxu0 %v2093
        %v2999 = vpop.f32.mrb[0].mxu0
        %v3000 = vadd.f32 %v2855, %v2999
        %v3001 = vpop.f32.mrb[0].mxu0
        %3002 = vmatprep.mubr.f32.mxu0 0.0
        %3003 = vmatmul.mubr.f32.gmra.mrb[0].mxu0 %v2102
        %v3004 = vpop.f32.mrb[0].mxu0
        %v3005 = vadd.f32 %v2860, %v3004
        %v3006 = vpop.f32.mrb[0].mxu0
        %3007 = vmatprep.mubr.f32.mxu0 0.0
        %3008 = vmatmul.mubr.f32.gmra.mrb[0].mxu0 %v2111
        %v3009 = vpop.f32.mrb[0].mxu0
        %v3010 = vadd.f32 %v2865, %v3009
        %v3011 = vpop.f32.mrb[0].mxu0
        %3012 = vmatprep.mubr.f32.mxu0 0.0
        %3013 = vmatmul.mubr.f32.gmra.mrb[0].mxu0 %v2120
        %v3014 = vpop.f32.mrb[0].mxu0
        %v3015 = vadd.f32 %v2870, %v3014
        %v3016 = vpop.f32.mrb[0].mxu0
        %3017 = vmatprep.mubr.f32.mxu0 0.0
        %3018 = vmatmul.mubr.f32.gmra.mrb[0].mxu0 %v2129
        %v3019 = vpop.f32.mrb[0].mxu0
        %v3020 = vadd.f32 %v2875, %v3019
        %v3021 = vpop.f32.mrb[0].mxu0
        %3022 = vmatprep.mubr.f32.mxu0 0.0
        %3023 = vmatmul.mubr.f32.gmra.mrb[0].mxu0 %v2138
        %v3024 = vpop.f32.mrb[0].mxu0
        %v3025 = vadd.f32 %v2880, %v3024
        %v3026 = vpop.f32.mrb[0].mxu0
        %3027 = vmatprep.mubr.f32.mxu0 0.0
        %3028 = vmatmul.mubr.f32.gmra.mrb[0].mxu0 %v2147
        %v3029 = vpop.f32.mrb[0].mxu0
        %v3030 = vadd.f32 %v2885, %v3029
        %v3031 = vpop.f32.mrb[0].mxu0
        %3032 = vmatprep.mubr.f32.mxu0 0.0
        %3033 = vmatmul.mubr.f32.gmra.mrb[0].mxu0 %v2156
        %v3034 = vpop.f32.mrb[0].mxu0
        %v3035 = vadd.f32 %v2890, %v3034
        %v3036 = vpop.f32.mrb[0].mxu0
        %3037 = vmatprep.mubr.f32.mxu0 0.0
        %3038 = vmatmul.mubr.f32.gmra.mrb[0].mxu0 %v2165
        %v3039 = vpop.f32.mrb[0].mxu0
        %v3040 = vadd.f32 %v2895, %v3039
        %v3041 = vpop.f32.mrb[0].mxu0
        %3042 = vmatprep.mubr.f32.mxu0 0.0
        %3043 = vmatmul.mubr.f32.gmra.mrb[0].mxu0 %v2174
        %v3044 = vpop.f32.mrb[0].mxu0
        %v3045 = vadd.f32 %v2900, %v3044
        %v3046 = vpop.f32.mrb[0].mxu0
        %3047 = vmatprep.mubr.f32.mxu0 0.0
        %3048 = vmatmul.mubr.f32.gmra.mrb[0].mxu0 %v2183
        %v3049 = vpop.f32.mrb[0].mxu0
        %v3050 = vadd.f32 %v2905, %v3049
        %v3051 = vpop.f32.mrb[0].mxu0
        %3052 = vdwg.mxu0
        %v3053 = vld [vmem:[%s5] sm:$0x1]
        %v3055 = vlaneseq
        %v3056 = vshrl.u32 %v3055, 7
        %v3057 = vsub.s32 0, %v3056
        %v3058 = vrot.slane %v3053, %v3057
        %v3060 = vmul.f32 %v2975, %v3058
        %v3061 = vmul.f32 %v2980, %v3058
        %v3062 = vmul.f32 %v2985, %v3058
        %v3063 = vmul.f32 %v2990, %v3058
        %v3064 = vmul.f32 %v2995, %v3058
        %v3065 = vmul.f32 %v3000, %v3058
        %v3066 = vmul.f32 %v3005, %v3058
        %v3067 = vmul.f32 %v3010, %v3058
        %v3068 = vmul.f32 %v3015, %v3058
        %v3069 = vmul.f32 %v3020, %v3058
        %v3070 = vmul.f32 %v3025, %v3058
        %v3071 = vmul.f32 %v3030, %v3058
        %v3072 = vmul.f32 %v3035, %v3058
        %v3073 = vmul.f32 %v3040, %v3058
        %v3074 = vmul.f32 %v3045, %v3058
        %v3075 = vmul.f32 %v3050, %v3058
        %v3076 = vld [vmem:[%s6] sm:$0x1]
        %v3078 = vlaneseq
        %v3079 = vshrl.u32 %v3078, 7
        %v3080 = vsub.s32 0, %v3079
        %v3081 = vrot.slane %v3076, %v3080
        %v3083 = vadd.f32 %v3060, %v3081
        %v3084 = vadd.f32 %v3061, %v3081
        %v3085 = vadd.f32 %v3062, %v3081
        %v3086 = vadd.f32 %v3063, %v3081
        %v3087 = vadd.f32 %v3064, %v3081
        %v3088 = vadd.f32 %v3065, %v3081
        %v3089 = vadd.f32 %v3066, %v3081
        %v3090 = vadd.f32 %v3067, %v3081
        %v3091 = vadd.f32 %v3068, %v3081
        %v3092 = vadd.f32 %v3069, %v3081
        %v3093 = vadd.f32 %v3070, %v3081
        %v3094 = vadd.f32 %v3071, %v3081
        %v3095 = vadd.f32 %v3072, %v3081
        %v3096 = vadd.f32 %v3073, %v3081
        %v3097 = vadd.f32 %v3074, %v3081
        %v3098 = vadd.f32 %v3075, %v3081
        %v3099 = vadd.f32 %v3083, %v3084
        %v3100 = vadd.f32 %v3099, %v3085
        %v3101 = vadd.f32 %v3100, %v3086
        %v3102 = vadd.f32 %v3101, %v3087
        %v3103 = vadd.f32 %v3102, %v3088
        %v3104 = vadd.f32 %v3103, %v3089
        %v3105 = vadd.f32 %v3104, %v3090
        %v3106 = vrot.slane %v3105, 4
        %v3107 = vadd.f32 %v3105, %v3106
        %v3108 = vrot.slane %v3107, 2
        %v3109 = vadd.f32 %v3107, %v3108
        %v3110 = vrot.slane %v3109, 1
        %v3111 = vadd.f32 %v3109, %v3110
        %v3112 = vadd.f32 %v3091, %v3092
        %v3113 = vadd.f32 %v3112, %v3093
        %v3114 = vadd.f32 %v3113, %v3094
        %v3115 = vadd.f32 %v3114, %v3095
        %v3116 = vadd.f32 %v3115, %v3096
        %v3117 = vadd.f32 %v3116, %v3097
        %v3118 = vadd.f32 %v3117, %v3098
        %v3119 = vrot.slane %v3118, 4
        %v3120 = vadd.f32 %v3118, %v3119
        %v3121 = vrot.slane %v3120, 2
        %v3122 = vadd.f32 %v3120, %v3121
        %v3123 = vrot.slane %v3122, 1
        %v3124 = vadd.f32 %v3122, %v3123
        %v3125 = vrcp.pop 64.0
        %v3126 = vmul.f32 %v3111, %v3125
        %v3127 = vmul.f32 %v3124, %v3125
        %v3128 = vld [vmem:[%s10] sm:$0x1]
        %v3130 = vlaneseq
        %v3131 = vshrl.u32 %v3130, 7
        %v3132 = vsub.s32 0, %v3131
        %v3133 = vrot.slane %v3128, %v3132
        %v3135 = vadd.f32 %v3133, 0.0
        %v3136 = vld [vmem:[%s7] sm:$0x1]
        %v3137 = vlaneseq
        %v3138 = vshrl.u32 %v3137, 7
        %v3139 = vsub.s32 0, %v3138
        %v3140 = vrot.slane %v3136, %v3139
        %v3141 = vmul.f32 %v3126, %v3140
        %v3142 = vmul.f32 %v3127, %v3140
        %v3145 = vrot.slane %v3142, 7
        %vm3146 = vcmask 1041409
        %v3147 = vsel %vm3146, %v3145, %v3141
        %vm3149 = vcmask 1041408
        %v3150 = vsel %vm3149, %v3147, 0.0
        %3151 = vadd.xlane.f32.xlu0 %v3150
        %v3152 = vpop.xlane.xlu0 %3151
        %v3153 = vld [vmem:[%s8] sm:$0x1]
        %v3155 = vlaneseq
        %v3156 = vshrl.u32 %v3155, 7
        %v3157 = vsub.s32 0, %v3156
        %v3158 = vrot.slane %v3153, %v3157
        %v3160 = vadd.f32 %v3152, %v3158
        %v3161 = vmax.f32 %v3160, 0.0
        %v3162 = vld [vmem:[%s9] sm:$0x1]
        %3164 = vset.pattern.permute.xlu0 0
        %3165 = vperm.xlu0 %3164, %v3161
        %v3166 = vpop.permute.xlu0 %3165
        %v3168 = vlaneseq
        %v3169 = vshrl.u32 %v3168, 7
        %v3170 = vsub.s32 0, %v3169
        %v3171 = vrot.slane %v3162, %v3170
        %v3172 = vmul.f32 %v3166, %v3171
        %v3173 = vadd.f32 %v3135, %v3172
        %v3174 = vld [vmem:[%s7 + $0x1] sm:$0x1]
        %v3175 = vlaneseq
        %v3176 = vshrl.u32 %v3175, 7
        %v3177 = vsub.s32 0, %v3176
        %v3178 = vrot.slane %v3174, %v3177
        %v3179 = vmul.f32 %v3126, %v3178
        %v3180 = vmul.f32 %v3127, %v3178
        %v3183 = vrot.slane %v3180, 7
        %v3184 = vsel %vm3146, %v3183, %v3179
        %v3186 = vsel %vm3149, %v3184, 0.0
        %3187 = vadd.xlane.f32.xlu0 %v3186
        %v3188 = vpop.xlane.xlu0 %3187
        %v3189 = vadd.f32 %v3188, %v3158
        %v3190 = vmax.f32 %v3189, 0.0
        %v3191 = vld [vmem:[%s9 + $0x1] sm:$0x1]
        %3193 = vset.pattern.permute.xlu0 1
        %3194 = vperm.xlu0 %3193, %v3190
        %v3195 = vpop.permute.xlu0 %3194
        %v3197 = vlaneseq
        %v3198 = vshrl.u32 %v3197, 7
        %v3199 = vsub.s32 0, %v3198
        %v3200 = vrot.slane %v3191, %v3199
        %v3201 = vmul.f32 %v3195, %v3200
        %v3202 = vadd.f32 %v3173, %v3201
        %v3203 = vld [vmem:[%s7 + $0x2] sm:$0x1]
        %v3204 = vlaneseq
        %v3205 = vshrl.u32 %v3204, 7
        %v3206 = vsub.s32 0, %v3205
        %v3207 = vrot.slane %v3203, %v3206
        %v3208 = vmul.f32 %v3126, %v3207
        %v3209 = vmul.f32 %v3127, %v3207
        %v3212 = vrot.slane %v3209, 7
        %v3213 = vsel %vm3146, %v3212, %v3208
        %v3215 = vsel %vm3149, %v3213, 0.0
        %3216 = vadd.xlane.f32.xlu0 %v3215
        %v3217 = vpop.xlane.xlu0 %3216
        %v3218 = vadd.f32 %v3217, %v3158
        %v3219 = vmax.f32 %v3218, 0.0
        %v3220 = vld [vmem:[%s9 + $0x2] sm:$0x1]
        %3222 = vset.pattern.permute.xlu0 2
        %3223 = vperm.xlu0 %3222, %v3219
        %v3224 = vpop.permute.xlu0 %3223
        %v3226 = vlaneseq
        %v3227 = vshrl.u32 %v3226, 7
        %v3228 = vsub.s32 0, %v3227
        %v3229 = vrot.slane %v3220, %v3228
        %v3230 = vmul.f32 %v3224, %v3229
        %v3231 = vadd.f32 %v3202, %v3230
        %v3232 = vld [vmem:[%s7 + $0x3] sm:$0x1]
        %v3233 = vlaneseq
        %v3234 = vshrl.u32 %v3233, 7
        %v3235 = vsub.s32 0, %v3234
        %v3236 = vrot.slane %v3232, %v3235
        %v3237 = vmul.f32 %v3126, %v3236
        %v3238 = vmul.f32 %v3127, %v3236
        %v3241 = vrot.slane %v3238, 7
        %v3242 = vsel %vm3146, %v3241, %v3237
        %v3244 = vsel %vm3149, %v3242, 0.0
        %3245 = vadd.xlane.f32.xlu0 %v3244
        %v3246 = vpop.xlane.xlu0 %3245
        %v3247 = vadd.f32 %v3246, %v3158
        %v3248 = vmax.f32 %v3247, 0.0
        %v3249 = vld [vmem:[%s9 + $0x3] sm:$0x1]
        %3251 = vset.pattern.permute.xlu0 3
        %3252 = vperm.xlu0 %3251, %v3248
        %v3253 = vpop.permute.xlu0 %3252
        %v3255 = vlaneseq
        %v3256 = vshrl.u32 %v3255, 7
        %v3257 = vsub.s32 0, %v3256
        %v3258 = vrot.slane %v3249, %v3257
        %v3259 = vmul.f32 %v3253, %v3258
        %v3260 = vadd.f32 %v3231, %v3259
        %v3261 = vld [vmem:[%s7 + $0x4] sm:$0x1]
        %v3262 = vlaneseq
        %v3263 = vshrl.u32 %v3262, 7
        %v3264 = vsub.s32 0, %v3263
        %v3265 = vrot.slane %v3261, %v3264
        %v3266 = vmul.f32 %v3126, %v3265
        %v3267 = vmul.f32 %v3127, %v3265
        %v3270 = vrot.slane %v3267, 7
        %v3271 = vsel %vm3146, %v3270, %v3266
        %v3273 = vsel %vm3149, %v3271, 0.0
        %3274 = vadd.xlane.f32.xlu0 %v3273
        %v3275 = vpop.xlane.xlu0 %3274
        %v3276 = vadd.f32 %v3275, %v3158
        %v3277 = vmax.f32 %v3276, 0.0
        %v3278 = vld [vmem:[%s9 + $0x4] sm:$0x1]
        %3280 = vset.pattern.permute.xlu0 4
        %3281 = vperm.xlu0 %3280, %v3277
        %v3282 = vpop.permute.xlu0 %3281
        %v3284 = vlaneseq
        %v3285 = vshrl.u32 %v3284, 7
        %v3286 = vsub.s32 0, %v3285
        %v3287 = vrot.slane %v3278, %v3286
        %v3288 = vmul.f32 %v3282, %v3287
        %v3289 = vadd.f32 %v3260, %v3288
        %v3290 = vld [vmem:[%s7 + $0x5] sm:$0x1]
        %v3291 = vlaneseq
        %v3292 = vshrl.u32 %v3291, 7
        %v3293 = vsub.s32 0, %v3292
        %v3294 = vrot.slane %v3290, %v3293
        %v3295 = vmul.f32 %v3126, %v3294
        %v3296 = vmul.f32 %v3127, %v3294
        %v3299 = vrot.slane %v3296, 7
        %v3300 = vsel %vm3146, %v3299, %v3295
        %v3302 = vsel %vm3149, %v3300, 0.0
        %3303 = vadd.xlane.f32.xlu0 %v3302
        %v3304 = vpop.xlane.xlu0 %3303
        %v3305 = vadd.f32 %v3304, %v3158
        %v3306 = vmax.f32 %v3305, 0.0
        %v3307 = vld [vmem:[%s9 + $0x5] sm:$0x1]
        %3309 = vset.pattern.permute.xlu0 5
        %3310 = vperm.xlu0 %3309, %v3306
        %v3311 = vpop.permute.xlu0 %3310
        %v3313 = vlaneseq
        %v3314 = vshrl.u32 %v3313, 7
        %v3315 = vsub.s32 0, %v3314
        %v3316 = vrot.slane %v3307, %v3315
        %v3317 = vmul.f32 %v3311, %v3316
        %v3318 = vadd.f32 %v3289, %v3317
        %v3319 = vld [vmem:[%s7 + $0x6] sm:$0x1]
        %v3320 = vlaneseq
        %v3321 = vshrl.u32 %v3320, 7
        %v3322 = vsub.s32 0, %v3321
        %v3323 = vrot.slane %v3319, %v3322
        %v3324 = vmul.f32 %v3126, %v3323
        %v3325 = vmul.f32 %v3127, %v3323
        %v3328 = vrot.slane %v3325, 7
        %v3329 = vsel %vm3146, %v3328, %v3324
        %v3331 = vsel %vm3149, %v3329, 0.0
        %3332 = vadd.xlane.f32.xlu0 %v3331
        %v3333 = vpop.xlane.xlu0 %3332
        %v3334 = vadd.f32 %v3333, %v3158
        %v3335 = vmax.f32 %v3334, 0.0
        %v3336 = vld [vmem:[%s9 + $0x6] sm:$0x1]
        %3338 = vset.pattern.permute.xlu0 6
        %3339 = vperm.xlu0 %3338, %v3335
        %v3340 = vpop.permute.xlu0 %3339
        %v3342 = vlaneseq
        %v3343 = vshrl.u32 %v3342, 7
        %v3344 = vsub.s32 0, %v3343
        %v3345 = vrot.slane %v3336, %v3344
        %v3346 = vmul.f32 %v3340, %v3345
        %v3347 = vadd.f32 %v3318, %v3346
        %v3348 = vld [vmem:[%s7 + $0x7] sm:$0x1]
        %v3349 = vlaneseq
        %v3350 = vshrl.u32 %v3349, 7
        %v3351 = vsub.s32 0, %v3350
        %v3352 = vrot.slane %v3348, %v3351
        %v3353 = vmul.f32 %v3126, %v3352
        %v3354 = vmul.f32 %v3127, %v3352
        %v3357 = vrot.slane %v3354, 7
        %v3358 = vsel %vm3146, %v3357, %v3353
        %v3360 = vsel %vm3149, %v3358, 0.0
        %3361 = vadd.xlane.f32.xlu0 %v3360
        %v3362 = vpop.xlane.xlu0 %3361
        %v3363 = vadd.f32 %v3362, %v3158
        %v3364 = vmax.f32 %v3363, 0.0
        %v3365 = vld [vmem:[%s9 + $0x7] sm:$0x1]
        %3367 = vset.pattern.permute.xlu0 7
        %3368 = vperm.xlu0 %3367, %v3364
        %v3369 = vpop.permute.xlu0 %3368
        %v3371 = vlaneseq
        %v3372 = vshrl.u32 %v3371, 7
        %v3373 = vsub.s32 0, %v3372
        %v3374 = vrot.slane %v3365, %v3373
        %v3375 = vmul.f32 %v3369, %v3374
        %v3376 = vadd.f32 %v3347, %v3375
        %v3377 = vxor.u32 %v3376, 2147483648
        %v3378 = vmul.f32 %v3377, 1.442695
        %v3379 = vpow.pop %v3378
        %v3380 = vadd.f32 %v3379, 1.0
        %v3381 = vrcp.pop %v3380
        %v3382 = vmul.f32 1.0, %v3381
        %v3385 = vunpack.c.l.s4 1966171168
        %v3386 = vunpack.c.0.s8 %v3385
        %v3387 = vlaneseq
        %v3388 = vshrl.u32 %v3387, 7
        %v3389 = vsub.s32 %v3386, %v3388
        %v3390 = vrot.slane %v3382, %v3389
        %v3391 = vcombine.high %v3390, %v3390
        %v3393 = vunpack.c.l.s4 1966171168
        %v3394 = vunpack.c.0.s8 %v3393
        %v3395 = vlaneseq
        %v3396 = vshrl.u32 %v3395, 7
        %v3397 = vsub.s32 %v3394, %v3396
        %v3398 = vrot.slane %v3390, %v3397
        %v3400 = vunpack.c.l.s4 1966171168
        %v3401 = vunpack.c.0.s8 %v3400
        %v3402 = vlaneseq
        %v3403 = vshrl.u32 %v3402, 7
        %v3404 = vsub.s32 %v3401, %v3403
        %v3405 = vrot.slane %v3391, %v3404
        %v3406 = vlaneseq
        %v3407 = vshrl.u32 %v3406, 7
        %v3408 = vsub.s32 0, %v3407
        %v3409 = vrot.slane %v3398, %v3408
        %v3410 = vlaneseq
        %v3411 = vshrl.u32 %v3410, 7
        %v3412 = vsub.s32 0, %v3411
        %v3413 = vrot.slane %v3405, %v3412
        %v3416 = vmul.f32 %v3083, %v3409
        %v3417 = vmul.f32 %v3084, %v3409
        %v3418 = vmul.f32 %v3085, %v3409
        %v3419 = vmul.f32 %v3086, %v3409
        %v3420 = vmul.f32 %v3087, %v3409
        %v3421 = vmul.f32 %v3088, %v3409
        %v3422 = vmul.f32 %v3089, %v3409
        %v3423 = vmul.f32 %v3090, %v3409
        %v3424 = vmul.f32 %v3091, %v3413
        %v3425 = vmul.f32 %v3092, %v3413
        %v3426 = vmul.f32 %v3093, %v3413
        %v3427 = vmul.f32 %v3094, %v3413
        %v3428 = vmul.f32 %v3095, %v3413
        %v3429 = vmul.f32 %v3096, %v3413
        %v3430 = vmul.f32 %v3097, %v3413
        %v3431 = vmul.f32 %v3098, %v3413
        %v3432 = vadd.f32 %v3416, %v1204
        %v3433 = vadd.f32 %v3417, %v1206
        %v3434 = vadd.f32 %v3418, %v1208
        %v3435 = vadd.f32 %v3419, %v1210
        %v3436 = vadd.f32 %v3420, %v1212
        %v3437 = vadd.f32 %v3421, %v1214
        %v3438 = vadd.f32 %v3422, %v1216
        %v3439 = vadd.f32 %v3423, %v1218
        %v3440 = vadd.f32 %v3424, %v1220
        %v3441 = vadd.f32 %v3425, %v1222
        %v3442 = vadd.f32 %v3426, %v1224
        %v3443 = vadd.f32 %v3427, %v1226
        %v3444 = vadd.f32 %v3428, %v1228
        %v3445 = vadd.f32 %v3429, %v1230
        %v3446 = vadd.f32 %v3430, %v1232
        %v3447 = vadd.f32 %v3431, %v1234
        %v3448 = vmax.f32 %v3432, 0.0
        %v3449 = vmax.f32 %v3433, 0.0
        %v3450 = vmax.f32 %v3434, 0.0
        %v3451 = vmax.f32 %v3435, 0.0
        %v3452 = vmax.f32 %v3436, 0.0
        %v3453 = vmax.f32 %v3437, 0.0
        %v3454 = vmax.f32 %v3438, 0.0
        %v3455 = vmax.f32 %v3439, 0.0
        %v3456 = vmax.f32 %v3440, 0.0
        %v3457 = vmax.f32 %v3441, 0.0
        %v3458 = vmax.f32 %v3442, 0.0
        %v3459 = vmax.f32 %v3443, 0.0
        %v3460 = vmax.f32 %v3444, 0.0
        %v3461 = vmax.f32 %v3445, 0.0
        %v3462 = vmax.f32 %v3446, 0.0
        %v3463 = vmax.f32 %v3447, 0.0
        %3464 = vst [vmem:[%s382] sm:$0xff] %v3448
        %3465 = vst [vmem:[%s382 + $0x8] sm:$0xff] %v3449
        %3466 = vst [vmem:[%s382 + $0x10] sm:$0xff] %v3450
        %3467 = vst [vmem:[%s382 + $0x18] sm:$0xff] %v3451
        %3468 = vst [vmem:[%s382 + $0x20] sm:$0xff] %v3452
        %3469 = vst [vmem:[%s382 + $0x28] sm:$0xff] %v3453
        %3470 = vst [vmem:[%s382 + $0x30] sm:$0xff] %v3454
        %3471 = vst [vmem:[%s382 + $0x38] sm:$0xff] %v3455
        %3472 = vst [vmem:[%s382 + $0x40] sm:$0xff] %v3456
        %3473 = vst [vmem:[%s382 + $0x48] sm:$0xff] %v3457
        %3474 = vst [vmem:[%s382 + $0x50] sm:$0xff] %v3458
        %3475 = vst [vmem:[%s382 + $0x58] sm:$0xff] %v3459
        %3476 = vst [vmem:[%s382 + $0x60] sm:$0xff] %v3460
        %3477 = vst [vmem:[%s382 + $0x68] sm:$0xff] %v3461
        %3478 = vst [vmem:[%s382 + $0x70] sm:$0xff] %v3462
        %3479 = vst [vmem:[%s382 + $0x78] sm:$0xff] %v3463
        %s3480 = sand.u32 %s269, 1
        %s3481 = scalar_lea.sflag [#allocation5], %s3480
        %s3482 = sand.u32 %s269, 1
        %s3483 = smul.addr %s3482, 128
        %s3484 = scalar_lea.vmem [#allocation4], %s3483
        // Predicated region
        $region65: #{tpu_custom_call.1} parent=63 // pred_check
          %p3485 = pneg %p279
        $region66: #{tpu_custom_call.1} parent=63 // pred_check_branch
          %3487 = sbr.rel (%p3485) target = $region68
        $region67: #{tpu_custom_call.1} parent=63 // pred_region
          %s3488 = smul.u32 2, %s25
          %s3490 = ssub.s32 2048, 2048
          %3491 = vsyncadd %s3481, %s3490
          %s3492 = smul.addr %s3488, 8
          %s3493 = smul.addr %s3492, 128
          %s3494 = scalar_lea.hbm %s11, %s3493
          %s3495 = sshll.u32 %s3484, 4
          %s3496 = int_to_ptr.vmem [resolvable:$true] %s3495
          %3501 = dma.vmem_to_hbm [thread:$0]  %s3496, 2048, %s3494, %s3481, 128, 128, 8
        $region68: #{tpu_custom_call.1} parent=63 // pred_fallthru
          _
      $region64: #{tpu_custom_call.1} parent=5 // pred_fallthru
        _
      %p3502 = scmp.le.s32.totalorder 2, %s20
      // Predicated region
      $region69: #{tpu_custom_call.1} parent=5 // pred_check
        %p3503 = pneg %p3502
      $region70: #{tpu_custom_call.1} parent=5 // pred_check_branch
        %3505 = sbr.rel (%p3503) target = $region72
      $region71: #{tpu_custom_call.1} parent=5 // pred_region
        %s3506 = ssub.s32 %s20, 2
        // Predicated region
        $region73: #{tpu_custom_call.1} parent=71 // pred_check
          %p3507 = pneg %p285
        $region74: #{tpu_custom_call.1} parent=71 // pred_check_branch
          %3509 = sbr.rel (%p3507) target = $region76
        $region75: #{tpu_custom_call.1} parent=71 // pred_region
          %s3510 = sand.u32 %s270, 1
          %s3511 = scalar_lea.sflag [#allocation5], %s3510
          %s3512 = sand.u32 %s270, 1
          %s3513 = smul.addr %s3512, 128
          %s3514 = scalar_lea.vmem [#allocation4], %s3513
          %3515 = dma.done %s3511, 2048
        $region76: #{tpu_custom_call.1} parent=71 // pred_fallthru
          _
      $region72: #{tpu_custom_call.1} parent=5 // pred_fallthru
        _
    $region6: #{tpu_custom_call.1} parent=1 // loop_footer
      %s24 = sadd.s32 1, %s20
    $region7: #{tpu_custom_call.1} parent=1 // loop_footer_branch
      %19 = sbr.rel target = $region3
    $region8: #{tpu_custom_call.1} parent=1 // loop_exit
      _
    %3516 = vsyncpa [#allocation5], 1
    %s3517 = scalar_lea.sflag [#allocation5], 1
    %3518 = vsyncpa %s3517, 1

</llo_original>
